<compile_context>
chip_gen: v6e
topology: v6e:2x2x1
jax: 0.10.0
libtpu: 0.0.40
codegen_flags: <defaults>
</compile_context>

<pallas_src>
import functools

import jax
import jax.numpy as jnp
from jax import lax
from jax.experimental import pallas as pl
from jax.experimental.pallas import tpu as pltpu


# ----------------------------------------------------------------------------
# VMEM budgeting (per-generation: 128 MiB on v5e/v6e, 64 MiB on v7x)
# ----------------------------------------------------------------------------
@functools.lru_cache(maxsize=None)
def _vmem_capacity_bytes():
    try:
        return int(pltpu.get_tpu_info().vmem_capacity_bytes)
    except Exception:
        return 64 * 1024 * 1024  # conservative fallback (v7x per-core VMEM)


def _matmul_vmem_limit():
    cap = _vmem_capacity_bytes()
    return int(min(100 * 1024 * 1024, max(32 * 1024 * 1024, 0.75 * cap)))


def _lstm_vmem_limit():
    cap = _vmem_capacity_bytes()
    return int(min(64 * 1024 * 1024, max(32 * 1024 * 1024, 0.5 * cap)))


# ----------------------------------------------------------------------------
# Tile pickers
# ----------------------------------------------------------------------------
def _pick_tile(n, prefs):
    for p in prefs:
        if p <= n and n % p == 0:
            return p
    return n


def _pick_batch_tiles(B):
    # Shard the recurrence over 2 batch tiles (one per v7x TensorCore) when each
    # shard keeps >= 8 f32 sublanes; neutral on single-TC v5e/v6e.
    if B % 2 == 0 and (B // 2) % 8 == 0:
        return 2
    return 1


def _pick_time_chunk(T, Bt, E, H, budget_bytes):
    """Largest divisor of T that fits the VMEM budget and keeps >= 2 chunks."""
    # Per-timestep bytes: double-buffered bf16 x in + bf16 hseq out, f32 gate
    # scratch, f32 hidden-chunk scratch, and the ephemeral f32 copy of x.
    per_t = Bt * (2 * E * 2 + 2 * H * 2 + 4 * H * 4 + H * 4 + E * 4)
    fixed = (E * 4 * H + H * 4 * H) * 2 + 4 * H * 4 + 6 * Bt * H * 4
    avail = max(budget_bytes - fixed, per_t)
    tc_max = max(1, avail // per_t)
    best = 1
    for c in range(1, T + 1):
        if T % c == 0 and c <= tc_max and (T // c >= 2 or T == 1):
            best = c
    return best


# ----------------------------------------------------------------------------
# Kernel 1: tiled  (N, K) @ (K, M) + (1, M)  bf16 inputs, f32 accumulation.
# Used for the final FC layer over the vocabulary.
# ----------------------------------------------------------------------------
def _matmul_bias_kernel(x_ref, w_ref, b_ref, o_ref):
    o_ref[...] = (jnp.dot(x_ref[...], w_ref[...],
                          preferred_element_type=jnp.float32)
                  + b_ref[...]).astype(o_ref.dtype)


def matmul_bias(x, w, b, out_dtype=jnp.float32):
    """x: (N, K), w: (K, M) bf16, b: (1, M) f32 -> (N, M) out_dtype."""
    N, K = x.shape
    M = w.shape[1]
    tr = _pick_tile(N, (1024, 512, 256, 128, 64, 32, 16, 8))  # row tile
    tc = _pick_tile(M, (1024, 512, 256, 128))                 # lane-dense cols
    grid = (N // tr, M // tc)
    cost = pl.CostEstimate(
        flops=2 * N * K * M,
        transcendentals=0,
        bytes_accessed=N * K * 2 + K * M * 2 + M * 4
        + N * M * jnp.dtype(out_dtype).itemsize)
    return pl.pallas_call(
        _matmul_bias_kernel,
        out_shape=jax.ShapeDtypeStruct((N, M), out_dtype),
        grid_spec=pltpu.PrefetchScalarGridSpec(
            num_scalar_prefetch=0,
            grid=grid,
            in_specs=[
                pl.BlockSpec((tr, K), lambda i, j: (i, 0)),   # K resident
                pl.BlockSpec((K, tc), lambda i, j: (0, j)),
                pl.BlockSpec((1, tc), lambda i, j: (0, j)),
            ],
            out_specs=pl.BlockSpec((tr, tc), lambda i, j: (i, j)),
        ),
        compiler_params=pltpu.CompilerParams(
            dimension_semantics=("parallel", "parallel"),
            vmem_limit_bytes=_matmul_vmem_limit()),
        cost_estimate=cost,
    )(x.astype(w.dtype), w, b)


# ----------------------------------------------------------------------------
# Kernel 2: one LSTM layer, fused input projection + recurrence.
# Grid = (batch tiles ["parallel"], time chunks ["arbitrary"]).
# ----------------------------------------------------------------------------
def _lstm_layer_kernel(x_ref, wih_ref, whh_ref, b_ref, h0_ref, c0_ref,
                       hseq_ref, hn_ref, cn_ref,
                       gx_scr, hbuf, *, unroll, fuse_flat):
    """x_ref:    (Tc, Bt, E) bf16  layer input chunk (time-major)
       wih_ref:  (E, 4H)     bf16  W_ih^T
       whh_ref:  (H, 4H)     bf16  W_hh^T
       b_ref:    (1, 4H)     f32   b_ih + b_hh
       h0/c0:    (Bt, H)     f32   initial state (batch tile)
       hseq_ref: (Tc, Bt, H) bf16  layer output chunk
       hn/cn:    (Bt, H)     f32   final state; also the chunk-to-chunk carry
       gx_scr:   (Tc, Bt, 4H) f32  precomputed input gates for this chunk
       hbuf:     (Tc, Bt, H)  f32  hidden chunk buffer (dense store at end)."""
    H = whh_ref.shape[0]
    G = 4 * H
    Tc, Bt, E = x_ref.shape

    @pl.when(pl.program_id(1) == 0)
    def _():
        hn_ref[...] = h0_ref[...]
        cn_ref[...] = c0_ref[...]

    # --- Fused input projection for the whole chunk (one MXU matmul) --------
    if fuse_flat:
        xblk = x_ref[...]
        if Bt % 16 != 0:
            # Collapse (Tc, Bt, E) -> (Tc*Bt, E) on an (8,128)-aligned f32
            # layout (bf16 packs 16 sublanes/vreg), then back to bf16 for MXU.
            xblk = xblk.astype(jnp.float32)
        x2d = xblk.reshape(Tc * Bt, E).astype(wih_ref.dtype)
        gx = jnp.dot(x2d, wih_ref[...],
                     preferred_element_type=jnp.float32) + b_ref[...]
        gx_scr[...] = gx.reshape(Tc, Bt, G)
    else:
        # Bt not sublane-aligned: project per timestep (still no HBM gx).
        for tt in range(Tc):
            gx_scr[tt] = jnp.dot(x_ref[tt], wih_ref[...],
                                 preferred_element_type=jnp.float32) + b_ref[...]

    # --- Serial recurrence; W_hh stationary across the loop -----------------
    whh = whh_ref[...]

    def step(t, carry):
        h, c = carry
        gates = gx_scr[t] + jnp.dot(h.astype(whh.dtype), whh,
                                    preferred_element_type=jnp.float32)
        i = jax.nn.sigmoid(gates[:, 0 * H:1 * H])
        f = jax.nn.sigmoid(gates[:, 1 * H:2 * H])
        g = jnp.tanh(gates[:, 2 * H:3 * H])
        o = jax.nn.sigmoid(gates[:, 3 * H:4 * H])
        c_new = f * c + i * g
        h_new = o * jnp.tanh(c_new)
        hbuf[t] = h_new
        return (h_new, c_new)

    h_fin, c_fin = lax.fori_loop(0, Tc, step, (hn_ref[...], cn_ref[...]),
                                 unroll=unroll)
    hn_ref[...] = h_fin
    cn_ref[...] = c_fin
    # Single dense bf16 store per chunk (no per-step masked stores).
    hseq_ref[...] = hbuf[...].astype(hseq_ref.dtype)


def lstm_layer(x, wih_t, whh_t, bias, h0, c0):
    """x: (T, B, E) bf16 -> (hseq (T,B,H) bf16, h_n (B,H) f32, c_n (B,H) f32)."""
    T, B, E = x.shape
    H = whh_t.shape[0]
    G = 4 * H
    nb = _pick_batch_tiles(B)
    Bt = B // nb
    Tc = _pick_time_chunk(T, Bt, E, H, int(0.8 * _lstm_vmem_limit()))
    unroll = Tc if Tc <= 16 else 8
    fuse_flat = (Bt % 8 == 0)

    kernel = functools.partial(_lstm_layer_kernel,
                               unroll=unroll, fuse_flat=fuse_flat)
    cost = pl.CostEstimate(
        flops=2 * T * B * E * G + 2 * T * B * H * G,
        transcendentals=5 * T * B * H,
        bytes_accessed=T * B * E * 2 + T * B * H * 2
        + (E * G + H * G) * 2 + G * 4 + 4 * B * H * 4)

    return pl.pallas_call(
        kernel,
        out_shape=(
            jax.ShapeDtypeStruct((T, B, H), jnp.bfloat16),  # hidden sequence
            jax.ShapeDtypeStruct((B, H), jnp.float32),      # h_n
            jax.ShapeDtypeStruct((B, H), jnp.float32),      # c_n
        ),
        grid_spec=pltpu.PrefetchScalarGridSpec(
            num_scalar_prefetch=0,
            grid=(nb, T // Tc),
            in_specs=[
                pl.BlockSpec((Tc, Bt, E), lambda b, t: (t, b, 0)),  # stream x
                pl.BlockSpec((E, G), lambda b, t: (0, 0)),          # pinned
                pl.BlockSpec((H, G), lambda b, t: (0, 0)),          # pinned
                pl.BlockSpec((1, G), lambda b, t: (0, 0)),          # pinned
                pl.BlockSpec((Bt, H), lambda b, t: (b, 0)),
                pl.BlockSpec((Bt, H), lambda b, t: (b, 0)),
            ],
            out_specs=(
                pl.BlockSpec((Tc, Bt, H), lambda b, t: (t, b, 0)),  # stream out
                pl.BlockSpec((Bt, H), lambda b, t: (b, 0)),         # resident
                pl.BlockSpec((Bt, H), lambda b, t: (b, 0)),         # resident
            ),
            scratch_shapes=[
                pltpu.VMEM((Tc, Bt, G), jnp.float32),   # chunk input gates
                pltpu.VMEM((Tc, Bt, H), jnp.float32),   # chunk hidden buffer
            ],
        ),
        compiler_params=pltpu.CompilerParams(
            dimension_semantics=("parallel", "arbitrary"),  # time is sequential
            vmem_limit_bytes=_lstm_vmem_limit()),
        cost_estimate=cost,
    )(x, wih_t, whh_t, bias, h0, c0)


# ----------------------------------------------------------------------------
# Model forward (== LSTMModel.forward)
# ----------------------------------------------------------------------------
def lstm_model_forward(params, x_ids, hidden=None):
    """Returns (logits (B,T,V) f32, (h_n, c_n) each (L,B,H) f32)."""
    B, T = x_ids.shape
    layers = params["lstm"]
    L = len(layers)
    H = layers[0]["whh_t"].shape[0]

    # TODO(synk): embedding gather left to XLA (index plumbing, no clean Pallas
    # equivalent without a scalar-prefetch row-gather kernel).
    x = jnp.take(params["embedding"], x_ids.T, axis=0)     # (T, B, E) bf16

    if hidden is None:
        h0 = jnp.zeros((L, B, H), jnp.float32)
        c0 = jnp.zeros((L, B, H), jnp.float32)
    else:
        h0, c0 = hidden

    h_finals, c_finals = [], []
    for l, layer in enumerate(layers):
        x, hn, cn = lstm_layer(x, layer["wih_t"], layer["whh_t"],
                               layer["bias"], h0[l], c0[l])
        h_finals.append(hn)
        c_finals.append(cn)

    # TODO(synk): (T,B,H)->(B,T,H) relayout left to XLA; folding it into the FC
    # grid needs an in-kernel sublane transpose and is a minor win vs FC traffic.
    out_bth = jnp.transpose(x, (1, 0, 2)).reshape(B * T, H)  # (B*T, H) bf16
    logits = matmul_bias(out_bth, params["fc_w_t"], params["fc_b"])
    logits = logits.reshape(B, T, -1)
    return logits, (jnp.stack(h_finals, 0), jnp.stack(c_finals, 0))


# ----------------------------------------------------------------------------
# Parameter init (same shapes/semantics as nn.Embedding / nn.LSTM / nn.Linear),
# stored pre-transposed and in bf16 for the MXU; biases kept in f32.
# ----------------------------------------------------------------------------
def init_params(key, vocab_size, embedding_dim, hidden_dim, num_layers):
    ks = jax.random.split(key, 3 + 4 * num_layers)
    bound = 1.0 / float(hidden_dim) ** 0.5
    params = {"embedding": jax.random.normal(
        ks[0], (vocab_size, embedding_dim), jnp.float32).astype(jnp.bfloat16)}

    layers = []
    idx = 1
    for l in range(num_layers):
        in_dim = embedding_dim if l == 0 else hidden_dim
        w_ih = jax.random.uniform(ks[idx], (4 * hidden_dim, in_dim),
                                  jnp.float32, -bound, bound); idx += 1
        w_hh = jax.random.uniform(ks[idx], (4 * hidden_dim, hidden_dim),
                                  jnp.float32, -bound, bound); idx += 1
        b_ih = jax.random.uniform(ks[idx], (4 * hidden_dim,),
                                  jnp.float32, -bound, bound); idx += 1
        b_hh = jax.random.uniform(ks[idx], (4 * hidden_dim,),
                                  jnp.float32, -bound, bound); idx += 1
        layers.append({
            "wih_t": jnp.transpose(w_ih).astype(jnp.bfloat16),  # (in_dim, 4H)
            "whh_t": jnp.transpose(w_hh).astype(jnp.bfloat16),  # (H, 4H)
            "bias": (b_ih + b_hh)[None, :],                     # (1, 4H) f32
        })
    params["lstm"] = layers

    fc_w = jax.random.uniform(ks[idx], (vocab_size, hidden_dim),
                              jnp.float32, -bound, bound); idx += 1
    fc_b = jax.random.uniform(ks[idx], (vocab_size,),
                              jnp.float32, -bound, bound)
    params["fc_w_t"] = jnp.transpose(fc_w).astype(jnp.bfloat16)  # (H, V)
    params["fc_b"] = fc_b[None, :]                               # (1, V) f32
    return params


# ----------------------------------------------------------------------------
# Pure-JAX reference with the same (bf16 matmul inputs / f32 accumulate) math.
# ----------------------------------------------------------------------------
def reference_forward(params, x_ids, hidden=None):
    embed = jnp.take(params["embedding"], x_ids, axis=0)     # (B, T, E) bf16
    B, T, _ = embed.shape
    H = params["lstm"][0]["whh_t"].shape[0]
    L = len(params["lstm"])
    if hidden is None:
        h0 = jnp.zeros((L, B, H), jnp.float32)
        c0 = jnp.zeros((L, B, H), jnp.float32)
    else:
        h0, c0 = hidden

    x = embed
    h_finals, c_finals = [], []
    for l, layer in enumerate(params["lstm"]):
        gx = (jnp.dot(x.reshape(B * T, -1).astype(jnp.bfloat16), layer["wih_t"],
                      preferred_element_type=jnp.float32)
              + layer["bias"]).reshape(B, T, 4 * H)
        h, c = h0[l], c0[l]
        outs = []
        for t in range(T):
            gates = gx[:, t, :] + jnp.dot(h.astype(jnp.bfloat16), layer["whh_t"],
                                          preferred_element_type=jnp.float32)
            i = jax.nn.sigmoid(gates[:, 0 * H:1 * H])
            f = jax.nn.sigmoid(gates[:, 1 * H:2 * H])
            g = jnp.tanh(gates[:, 2 * H:3 * H])
            o = jax.nn.sigmoid(gates[:, 3 * H:4 * H])
            c = f * c + i * g
            h = o * jnp.tanh(c)
            outs.append(h.astype(jnp.bfloat16))
        x = jnp.stack(outs, axis=1)                          # (B, T, H) bf16
        h_finals.append(h)
        c_finals.append(c)

    logits = (jnp.dot(x.reshape(B * T, H), params["fc_w_t"],
                      preferred_element_type=jnp.float32)
              + params["fc_b"]).reshape(B, T, -1)
    return logits, (jnp.stack(h_finals, 0), jnp.stack(c_finals, 0))


# ----------------------------------------------------------------------------
if __name__ == "__main__":
    # Small but TPU-friendly: H and 4H lane-aligned, B a sublane multiple,
    # T chunked into two grid steps to exercise the cross-chunk state carry.
    VOCAB, EMB, HID, LAYERS = 256, 128, 128, 2
    B, T = 8, 16

    key = jax.random.PRNGKey(0)
    pkey, xkey = jax.random.split(key)
    params = init_params(pkey, VOCAB, EMB, HID, LAYERS)
    x_ids = jax.random.randint(xkey, (B, T), 0, VOCAB, dtype=jnp.int32)

    fwd = jax.jit(lstm_model_forward)
    logits, (h_n, c_n) = fwd(params, x_ids)
    jax.block_until_ready((logits, h_n, c_n))

    assert logits.shape == (B, T, VOCAB)
    assert h_n.shape == (LAYERS, B, HID)
    assert c_n.shape == (LAYERS, B, HID)

    ref_logits, (ref_h, ref_c) = reference_forward(params, x_ids)
    assert jnp.allclose(logits, ref_logits, atol=2e-2, rtol=2e-2)
    assert jnp.allclose(h_n, ref_h, atol=2e-2, rtol=2e-2)
    assert jnp.allclose(c_n, ref_c, atol=2e-2, rtol=2e-2)

    print("KERNEL_OK")
</pallas_src>

<mosaic_0001>
module attributes {stable_mosaic.version = 11 : i64} {
  func.func @_lstm_layer_kernel(%arg0: i32, %arg1: i32, %arg2: memref<8x8x128xbf16, #tpu.memory_space<vmem>>, %arg3: memref<128x512xbf16, #tpu.memory_space<vmem>>, %arg4: memref<128x512xbf16, #tpu.memory_space<vmem>>, %arg5: memref<1x512xf32, #tpu.memory_space<vmem>>, %arg6: memref<8x128xf32, #tpu.memory_space<vmem>>, %arg7: memref<8x128xf32, #tpu.memory_space<vmem>>, %arg8: memref<8x8x128xbf16, #tpu.memory_space<vmem>>, %arg9: memref<8x128xf32, #tpu.memory_space<vmem>>, %arg10: memref<8x128xf32, #tpu.memory_space<vmem>>, %arg11: memref<8x8x512xf32, #tpu.memory_space<vmem>>, %arg12: memref<8x8x128xf32, #tpu.memory_space<vmem>>) attributes {dimension_semantics = [#tpu.dimension_semantics<parallel>, #tpu.dimension_semantics<arbitrary>], iteration_bounds = array<i64: 1, 2>, scalar_prefetch = 0 : i64, scratch_operands = 2 : i64, tpu.core_type = #tpu.core_type<tc>, window_params = [{transform_indices = @transform_0, window_bounds = array<i64: 8, 8, 128>}, {pipeline_mode = #tpu.pipeline_mode<synchronous>, transform_indices = @transform_1, window_bounds = array<i64: 128, 512>}, {pipeline_mode = #tpu.pipeline_mode<synchronous>, transform_indices = @transform_2, window_bounds = array<i64: 128, 512>}, {pipeline_mode = #tpu.pipeline_mode<synchronous>, transform_indices = @transform_3, window_bounds = array<i64: 1, 512>}, {transform_indices = @transform_4, window_bounds = array<i64: 8, 128>}, {transform_indices = @transform_5, window_bounds = array<i64: 8, 128>}, {transform_indices = @transform_6, window_bounds = array<i64: 8, 8, 128>}, {transform_indices = @transform_7, window_bounds = array<i64: 8, 128>}, {transform_indices = @transform_8, window_bounds = array<i64: 8, 128>}]} {
    %c0_i32 = arith.constant 0 : i32
    %0 = arith.cmpi eq, %arg1, %c0_i32 : i32
    %1 = arith.extui %0 : i1 to i32
    %c0_i32_0 = arith.constant 0 : i32
    %2 = arith.cmpi ne, %1, %c0_i32_0 : i32
    scf.if %2 {
      %c0_91 = arith.constant 0 : index
      %c0_92 = arith.constant 0 : index
      %302 = vector.load %arg6[%c0_91, %c0_92] : memref<8x128xf32, #tpu.memory_space<vmem>>, vector<8x128xf32>
      %c0_93 = arith.constant 0 : index
      %c0_94 = arith.constant 0 : index
      %303 = vector.load %arg9[%c0_93, %c0_94] : memref<8x128xf32, #tpu.memory_space<vmem>>, vector<8x128xf32>
      tpu.vector_store %arg9[%c0_93, %c0_94], %302 {strides = array<i32>} : memref<8x128xf32, #tpu.memory_space<vmem>>, vector<8x128xf32>,
      %c0_95 = arith.constant 0 : index
      %c0_96 = arith.constant 0 : index
      %304 = vector.load %arg7[%c0_95, %c0_96] : memref<8x128xf32, #tpu.memory_space<vmem>>, vector<8x128xf32>
      %c0_97 = arith.constant 0 : index
      %c0_98 = arith.constant 0 : index
      %305 = vector.load %arg10[%c0_97, %c0_98] : memref<8x128xf32, #tpu.memory_space<vmem>>, vector<8x128xf32>
      tpu.vector_store %arg10[%c0_97, %c0_98], %304 {strides = array<i32>} : memref<8x128xf32, #tpu.memory_space<vmem>>, vector<8x128xf32>,
    } else {
    }
    %c0 = arith.constant 0 : index
    %c0_1 = arith.constant 0 : index
    %c0_2 = arith.constant 0 : index
    %3 = vector.load %arg2[%c0, %c0_1, %c0_2] : memref<8x8x128xbf16, #tpu.memory_space<vmem>>, vector<8x8x128xbf16>
    %4 = arith.extf %3 : vector<8x8x128xbf16> to vector<8x8x128xf32>
    %5 = vector.shape_cast %4 : vector<8x8x128xf32> to vector<64x128xf32>
    %6 = arith.truncf %5 : vector<64x128xf32> to vector<64x128xbf16>
    %c0_3 = arith.constant 0 : index
    %c0_4 = arith.constant 0 : index
    %7 = vector.load %arg3[%c0_3, %c0_4] : memref<128x512xbf16, #tpu.memory_space<vmem>>, vector<128x512xbf16>
    %cst = arith.constant dense<0.000000e+00> : vector<64x512xf32>
    %8 = tpu.matmul %6, %7, %cst {dimension_numbers = #tpu.dot_dimension_numbers<[1], [0], [0], [1], [0, 0, 1, 1], [], []>} : vector<64x128xbf16>, vector<128x512xbf16>, vector<64x512xf32> -> vector<64x512xf32>
    %c0_5 = arith.constant 0 : index
    %c0_6 = arith.constant 0 : index
    %9 = vector.load %arg5[%c0_5, %c0_6] : memref<1x512xf32, #tpu.memory_space<vmem>>, vector<1x512xf32>
    %10 = vector.broadcast %9 : vector<1x512xf32> to vector<64x512xf32>
    %11 = arith.addf %8, %10 : vector<64x512xf32>
    %12 = vector.shape_cast %11 : vector<64x512xf32> to vector<8x8x512xf32>
    %c0_7 = arith.constant 0 : index
    %c0_8 = arith.constant 0 : index
    %c0_9 = arith.constant 0 : index
    %13 = vector.load %arg11[%c0_7, %c0_8, %c0_9] : memref<8x8x512xf32, #tpu.memory_space<vmem>>, vector<8x8x512xf32>
    tpu.vector_store %arg11[%c0_7, %c0_8, %c0_9], %12 {strides = array<i32>} : memref<8x8x512xf32, #tpu.memory_space<vmem>>, vector<8x8x512xf32>,
    %c0_10 = arith.constant 0 : index
    %c0_11 = arith.constant 0 : index
    %14 = vector.load %arg4[%c0_10, %c0_11] : memref<128x512xbf16, #tpu.memory_space<vmem>>, vector<128x512xbf16>
    %c0_12 = arith.constant 0 : index
    %c0_13 = arith.constant 0 : index
    %15 = vector.load %arg9[%c0_12, %c0_13] : memref<8x128xf32, #tpu.memory_space<vmem>>, vector<8x128xf32>
    %c0_14 = arith.constant 0 : index
    %c0_15 = arith.constant 0 : index
    %16 = vector.load %arg10[%c0_14, %c0_15] : memref<8x128xf32, #tpu.memory_space<vmem>>, vector<8x128xf32>
    %c0_i32_16 = arith.constant 0 : i32
    %17 = arith.index_cast %c0_i32_16 : i32 to index
    %c0_17 = arith.constant 0 : index
    %c0_18 = arith.constant 0 : index
    %18 = vector.load %arg11[%17, %c0_17, %c0_18] : memref<8x8x512xf32, #tpu.memory_space<vmem>>, vector<1x8x512xf32>
    %19 = vector.shape_cast %18 : vector<1x8x512xf32> to vector<8x512xf32>
    %20 = arith.truncf %15 : vector<8x128xf32> to vector<8x128xbf16>
    %cst_19 = arith.constant dense<0.000000e+00> : vector<8x512xf32>
    %21 = tpu.matmul %20, %14, %cst_19 {dimension_numbers = #tpu.dot_dimension_numbers<[1], [0], [0], [1], [0, 0, 1, 1], [], []>} : vector<8x128xbf16>, vector<128x512xbf16>, vector<8x512xf32> -> vector<8x512xf32>
    %22 = arith.addf %19, %21 : vector<8x512xf32>
    %23 = vector.extract_strided_slice %22 {offsets = [0, 0], sizes = [8, 128], strides = [1, 1]} : vector<8x512xf32> to vector<8x128xf32>
    %24 = arith.negf %23 : vector<8x128xf32>
    %25 = math.exp %24 : vector<8x128xf32>
    %cst_20 = arith.constant 1.000000e+00 : f32
    %26 = vector.broadcast %cst_20 : f32 to vector<8x128xf32>
    %27 = arith.addf %26, %25 : vector<8x128xf32>
    %28 = arith.divf %26, %27 : vector<8x128xf32>
    %29 = vector.extract_strided_slice %22 {offsets = [0, 128], sizes = [8, 128], strides = [1, 1]} : vector<8x512xf32> to vector<8x128xf32>
    %30 = arith.negf %29 : vector<8x128xf32>
    %31 = math.exp %30 : vector<8x128xf32>
    %cst_21 = arith.constant 1.000000e+00 : f32
    %32 = vector.broadcast %cst_21 : f32 to vector<8x128xf32>
    %33 = arith.addf %32, %31 : vector<8x128xf32>
    %34 = arith.divf %32, %33 : vector<8x128xf32>
    %35 = vector.extract_strided_slice %22 {offsets = [0, 256], sizes = [8, 128], strides = [1, 1]} : vector<8x512xf32> to vector<8x128xf32>
    %36 = math.tanh %35 : vector<8x128xf32>
    %37 = vector.extract_strided_slice %22 {offsets = [0, 384], sizes = [8, 128], strides = [1, 1]} : vector<8x512xf32> to vector<8x128xf32>
    %38 = arith.negf %37 : vector<8x128xf32>
    %39 = math.exp %38 : vector<8x128xf32>
    %cst_22 = arith.constant 1.000000e+00 : f32
    %40 = vector.broadcast %cst_22 : f32 to vector<8x128xf32>
    %41 = arith.addf %40, %39 : vector<8x128xf32>
    %42 = arith.divf %40, %41 : vector<8x128xf32>
    %43 = arith.mulf %34, %16 : vector<8x128xf32>
    %44 = arith.mulf %28, %36 : vector<8x128xf32>
    %45 = arith.addf %43, %44 : vector<8x128xf32>
    %46 = math.tanh %45 : vector<8x128xf32>
    %47 = arith.mulf %42, %46 : vector<8x128xf32>
    %48 = arith.index_cast %c0_i32_16 : i32 to index
    %c0_23 = arith.constant 0 : index
    %c0_24 = arith.constant 0 : index
    %49 = vector.load %arg12[%48, %c0_23, %c0_24] : memref<8x8x128xf32, #tpu.memory_space<vmem>>, vector<1x8x128xf32>
    %50 = vector.shape_cast %49 : vector<1x8x128xf32> to vector<8x128xf32>
    %51 = vector.shape_cast %47 : vector<8x128xf32> to vector<1x8x128xf32>
    tpu.vector_store %arg12[%48, %c0_23, %c0_24], %51 {strides = array<i32>} : memref<8x8x128xf32, #tpu.memory_space<vmem>>, vector<1x8x128xf32>,
    %c1_i32 = arith.constant 1 : i32
    %52 = arith.index_cast %c1_i32 : i32 to index
    %c0_25 = arith.constant 0 : index
    %c0_26 = arith.constant 0 : index
    %53 = vector.load %arg11[%52, %c0_25, %c0_26] : memref<8x8x512xf32, #tpu.memory_space<vmem>>, vector<1x8x512xf32>
    %54 = vector.shape_cast %53 : vector<1x8x512xf32> to vector<8x512xf32>
    %55 = arith.truncf %47 : vector<8x128xf32> to vector<8x128xbf16>
    %cst_27 = arith.constant dense<0.000000e+00> : vector<8x512xf32>
    %56 = tpu.matmul %55, %14, %cst_27 {dimension_numbers = #tpu.dot_dimension_numbers<[1], [0], [0], [1], [0, 0, 1, 1], [], []>} : vector<8x128xbf16>, vector<128x512xbf16>, vector<8x512xf32> -> vector<8x512xf32>
    %57 = arith.addf %54, %56 : vector<8x512xf32>
    %58 = vector.extract_strided_slice %57 {offsets = [0, 0], sizes = [8, 128], strides = [1, 1]} : vector<8x512xf32> to vector<8x128xf32>
    %59 = arith.negf %58 : vector<8x128xf32>
    %60 = math.exp %59 : vector<8x128xf32>
    %cst_28 = arith.constant 1.000000e+00 : f32
    %61 = vector.broadcast %cst_28 : f32 to vector<8x128xf32>
    %62 = arith.addf %61, %60 : vector<8x128xf32>
    %63 = arith.divf %61, %62 : vector<8x128xf32>
    %64 = vector.extract_strided_slice %57 {offsets = [0, 128], sizes = [8, 128], strides = [1, 1]} : vector<8x512xf32> to vector<8x128xf32>
    %65 = arith.negf %64 : vector<8x128xf32>
    %66 = math.exp %65 : vector<8x128xf32>
    %cst_29 = arith.constant 1.000000e+00 : f32
    %67 = vector.broadcast %cst_29 : f32 to vector<8x128xf32>
    %68 = arith.addf %67, %66 : vector<8x128xf32>
    %69 = arith.divf %67, %68 : vector<8x128xf32>
    %70 = vector.extract_strided_slice %57 {offsets = [0, 256], sizes = [8, 128], strides = [1, 1]} : vector<8x512xf32> to vector<8x128xf32>
    %71 = math.tanh %70 : vector<8x128xf32>
    %72 = vector.extract_strided_slice %57 {offsets = [0, 384], sizes = [8, 128], strides = [1, 1]} : vector<8x512xf32> to vector<8x128xf32>
    %73 = arith.negf %72 : vector<8x128xf32>
    %74 = math.exp %73 : vector<8x128xf32>
    %cst_30 = arith.constant 1.000000e+00 : f32
    %75 = vector.broadcast %cst_30 : f32 to vector<8x128xf32>
    %76 = arith.addf %75, %74 : vector<8x128xf32>
    %77 = arith.divf %75, %76 : vector<8x128xf32>
    %78 = arith.mulf %69, %45 : vector<8x128xf32>
    %79 = arith.mulf %63, %71 : vector<8x128xf32>
    %80 = arith.addf %78, %79 : vector<8x128xf32>
    %81 = math.tanh %80 : vector<8x128xf32>
    %82 = arith.mulf %77, %81 : vector<8x128xf32>
    %83 = arith.index_cast %c1_i32 : i32 to index
    %c0_31 = arith.constant 0 : index
    %c0_32 = arith.constant 0 : index
    %84 = vector.load %arg12[%83, %c0_31, %c0_32] : memref<8x8x128xf32, #tpu.memory_space<vmem>>, vector<1x8x128xf32>
    %85 = vector.shape_cast %84 : vector<1x8x128xf32> to vector<8x128xf32>
    %86 = vector.shape_cast %82 : vector<8x128xf32> to vector<1x8x128xf32>
    tpu.vector_store %arg12[%83, %c0_31, %c0_32], %86 {strides = array<i32>} : memref<8x8x128xf32, #tpu.memory_space<vmem>>, vector<1x8x128xf32>,
    %c2_i32 = arith.constant 2 : i32
    %87 = arith.index_cast %c2_i32 : i32 to index
    %c0_33 = arith.constant 0 : index
    %c0_34 = arith.constant 0 : index
    %88 = vector.load %arg11[%87, %c0_33, %c0_34] : memref<8x8x512xf32, #tpu.memory_space<vmem>>, vector<1x8x512xf32>
    %89 = vector.shape_cast %88 : vector<1x8x512xf32> to vector<8x512xf32>
    %90 = arith.truncf %82 : vector<8x128xf32> to vector<8x128xbf16>
    %cst_35 = arith.constant dense<0.000000e+00> : vector<8x512xf32>
    %91 = tpu.matmul %90, %14, %cst_35 {dimension_numbers = #tpu.dot_dimension_numbers<[1], [0], [0], [1], [0, 0, 1, 1], [], []>} : vector<8x128xbf16>, vector<128x512xbf16>, vector<8x512xf32> -> vector<8x512xf32>
    %92 = arith.addf %89, %91 : vector<8x512xf32>
    %93 = vector.extract_strided_slice %92 {offsets = [0, 0], sizes = [8, 128], strides = [1, 1]} : vector<8x512xf32> to vector<8x128xf32>
    %94 = arith.negf %93 : vector<8x128xf32>
    %95 = math.exp %94 : vector<8x128xf32>
    %cst_36 = arith.constant 1.000000e+00 : f32
    %96 = vector.broadcast %cst_36 : f32 to vector<8x128xf32>
    %97 = arith.addf %96, %95 : vector<8x128xf32>
    %98 = arith.divf %96, %97 : vector<8x128xf32>
    %99 = vector.extract_strided_slice %92 {offsets = [0, 128], sizes = [8, 128], strides = [1, 1]} : vector<8x512xf32> to vector<8x128xf32>
    %100 = arith.negf %99 : vector<8x128xf32>
    %101 = math.exp %100 : vector<8x128xf32>
    %cst_37 = arith.constant 1.000000e+00 : f32
    %102 = vector.broadcast %cst_37 : f32 to vector<8x128xf32>
    %103 = arith.addf %102, %101 : vector<8x128xf32>
    %104 = arith.divf %102, %103 : vector<8x128xf32>
    %105 = vector.extract_strided_slice %92 {offsets = [0, 256], sizes = [8, 128], strides = [1, 1]} : vector<8x512xf32> to vector<8x128xf32>
    %106 = math.tanh %105 : vector<8x128xf32>
    %107 = vector.extract_strided_slice %92 {offsets = [0, 384], sizes = [8, 128], strides = [1, 1]} : vector<8x512xf32> to vector<8x128xf32>
    %108 = arith.negf %107 : vector<8x128xf32>
    %109 = math.exp %108 : vector<8x128xf32>
    %cst_38 = arith.constant 1.000000e+00 : f32
    %110 = vector.broadcast %cst_38 : f32 to vector<8x128xf32>
    %111 = arith.addf %110, %109 : vector<8x128xf32>
    %112 = arith.divf %110, %111 : vector<8x128xf32>
    %113 = arith.mulf %104, %80 : vector<8x128xf32>
    %114 = arith.mulf %98, %106 : vector<8x128xf32>
    %115 = arith.addf %113, %114 : vector<8x128xf32>
    %116 = math.tanh %115 : vector<8x128xf32>
    %117 = arith.mulf %112, %116 : vector<8x128xf32>
    %118 = arith.index_cast %c2_i32 : i32 to index
    %c0_39 = arith.constant 0 : index
    %c0_40 = arith.constant 0 : index
    %119 = vector.load %arg12[%118, %c0_39, %c0_40] : memref<8x8x128xf32, #tpu.memory_space<vmem>>, vector<1x8x128xf32>
    %120 = vector.shape_cast %119 : vector<1x8x128xf32> to vector<8x128xf32>
    %121 = vector.shape_cast %117 : vector<8x128xf32> to vector<1x8x128xf32>
    tpu.vector_store %arg12[%118, %c0_39, %c0_40], %121 {strides = array<i32>} : memref<8x8x128xf32, #tpu.memory_space<vmem>>, vector<1x8x128xf32>,
    %c3_i32 = arith.constant 3 : i32
    %122 = arith.index_cast %c3_i32 : i32 to index
    %c0_41 = arith.constant 0 : index
    %c0_42 = arith.constant 0 : index
    %123 = vector.load %arg11[%122, %c0_41, %c0_42] : memref<8x8x512xf32, #tpu.memory_space<vmem>>, vector<1x8x512xf32>
    %124 = vector.shape_cast %123 : vector<1x8x512xf32> to vector<8x512xf32>
    %125 = arith.truncf %117 : vector<8x128xf32> to vector<8x128xbf16>
    %cst_43 = arith.constant dense<0.000000e+00> : vector<8x512xf32>
    %126 = tpu.matmul %125, %14, %cst_43 {dimension_numbers = #tpu.dot_dimension_numbers<[1], [0], [0], [1], [0, 0, 1, 1], [], []>} : vector<8x128xbf16>, vector<128x512xbf16>, vector<8x512xf32> -> vector<8x512xf32>
    %127 = arith.addf %124, %126 : vector<8x512xf32>
    %128 = vector.extract_strided_slice %127 {offsets = [0, 0], sizes = [8, 128], strides = [1, 1]} : vector<8x512xf32> to vector<8x128xf32>
    %129 = arith.negf %128 : vector<8x128xf32>
    %130 = math.exp %129 : vector<8x128xf32>
    %cst_44 = arith.constant 1.000000e+00 : f32
    %131 = vector.broadcast %cst_44 : f32 to vector<8x128xf32>
    %132 = arith.addf %131, %130 : vector<8x128xf32>
    %133 = arith.divf %131, %132 : vector<8x128xf32>
    %134 = vector.extract_strided_slice %127 {offsets = [0, 128], sizes = [8, 128], strides = [1, 1]} : vector<8x512xf32> to vector<8x128xf32>
    %135 = arith.negf %134 : vector<8x128xf32>
    %136 = math.exp %135 : vector<8x128xf32>
    %cst_45 = arith.constant 1.000000e+00 : f32
    %137 = vector.broadcast %cst_45 : f32 to vector<8x128xf32>
    %138 = arith.addf %137, %136 : vector<8x128xf32>
    %139 = arith.divf %137, %138 : vector<8x128xf32>
    %140 = vector.extract_strided_slice %127 {offsets = [0, 256], sizes = [8, 128], strides = [1, 1]} : vector<8x512xf32> to vector<8x128xf32>
    %141 = math.tanh %140 : vector<8x128xf32>
    %142 = vector.extract_strided_slice %127 {offsets = [0, 384], sizes = [8, 128], strides = [1, 1]} : vector<8x512xf32> to vector<8x128xf32>
    %143 = arith.negf %142 : vector<8x128xf32>
    %144 = math.exp %143 : vector<8x128xf32>
    %cst_46 = arith.constant 1.000000e+00 : f32
    %145 = vector.broadcast %cst_46 : f32 to vector<8x128xf32>
    %146 = arith.addf %145, %144 : vector<8x128xf32>
    %147 = arith.divf %145, %146 : vector<8x128xf32>
    %148 = arith.mulf %139, %115 : vector<8x128xf32>
    %149 = arith.mulf %133, %141 : vector<8x128xf32>
    %150 = arith.addf %148, %149 : vector<8x128xf32>
    %151 = math.tanh %150 : vector<8x128xf32>
    %152 = arith.mulf %147, %151 : vector<8x128xf32>
    %153 = arith.index_cast %c3_i32 : i32 to index
    %c0_47 = arith.constant 0 : index
    %c0_48 = arith.constant 0 : index
    %154 = vector.load %arg12[%153, %c0_47, %c0_48] : memref<8x8x128xf32, #tpu.memory_space<vmem>>, vector<1x8x128xf32>
    %155 = vector.shape_cast %154 : vector<1x8x128xf32> to vector<8x128xf32>
    %156 = vector.shape_cast %152 : vector<8x128xf32> to vector<1x8x128xf32>
    tpu.vector_store %arg12[%153, %c0_47, %c0_48], %156 {strides = array<i32>} : memref<8x8x128xf32, #tpu.memory_space<vmem>>, vector<1x8x128xf32>,
    %c4_i32 = arith.constant 4 : i32
    %157 = arith.index_cast %c4_i32 : i32 to index
    %c0_49 = arith.constant 0 : index
    %c0_50 = arith.constant 0 : index
    %158 = vector.load %arg11[%157, %c0_49, %c0_50] : memref<8x8x512xf32, #tpu.memory_space<vmem>>, vector<1x8x512xf32>
    %159 = vector.shape_cast %158 : vector<1x8x512xf32> to vector<8x512xf32>
    %160 = arith.truncf %152 : vector<8x128xf32> to vector<8x128xbf16>
    %cst_51 = arith.constant dense<0.000000e+00> : vector<8x512xf32>
    %161 = tpu.matmul %160, %14, %cst_51 {dimension_numbers = #tpu.dot_dimension_numbers<[1], [0], [0], [1], [0, 0, 1, 1], [], []>} : vector<8x128xbf16>, vector<128x512xbf16>, vector<8x512xf32> -> vector<8x512xf32>
    %162 = arith.addf %159, %161 : vector<8x512xf32>
    %163 = vector.extract_strided_slice %162 {offsets = [0, 0], sizes = [8, 128], strides = [1, 1]} : vector<8x512xf32> to vector<8x128xf32>
    %164 = arith.negf %163 : vector<8x128xf32>
    %165 = math.exp %164 : vector<8x128xf32>
    %cst_52 = arith.constant 1.000000e+00 : f32
    %166 = vector.broadcast %cst_52 : f32 to vector<8x128xf32>
    %167 = arith.addf %166, %165 : vector<8x128xf32>
    %168 = arith.divf %166, %167 : vector<8x128xf32>
    %169 = vector.extract_strided_slice %162 {offsets = [0, 128], sizes = [8, 128], strides = [1, 1]} : vector<8x512xf32> to vector<8x128xf32>
    %170 = arith.negf %169 : vector<8x128xf32>
    %171 = math.exp %170 : vector<8x128xf32>
    %cst_53 = arith.constant 1.000000e+00 : f32
    %172 = vector.broadcast %cst_53 : f32 to vector<8x128xf32>
    %173 = arith.addf %172, %171 : vector<8x128xf32>
    %174 = arith.divf %172, %173 : vector<8x128xf32>
    %175 = vector.extract_strided_slice %162 {offsets = [0, 256], sizes = [8, 128], strides = [1, 1]} : vector<8x512xf32> to vector<8x128xf32>
    %176 = math.tanh %175 : vector<8x128xf32>
    %177 = vector.extract_strided_slice %162 {offsets = [0, 384], sizes = [8, 128], strides = [1, 1]} : vector<8x512xf32> to vector<8x128xf32>
    %178 = arith.negf %177 : vector<8x128xf32>
    %179 = math.exp %178 : vector<8x128xf32>
    %cst_54 = arith.constant 1.000000e+00 : f32
    %180 = vector.broadcast %cst_54 : f32 to vector<8x128xf32>
    %181 = arith.addf %180, %179 : vector<8x128xf32>
    %182 = arith.divf %180, %181 : vector<8x128xf32>
    %183 = arith.mulf %174, %150 : vector<8x128xf32>
    %184 = arith.mulf %168, %176 : vector<8x128xf32>
    %185 = arith.addf %183, %184 : vector<8x128xf32>
    %186 = math.tanh %185 : vector<8x128xf32>
    %187 = arith.mulf %182, %186 : vector<8x128xf32>
    %188 = arith.index_cast %c4_i32 : i32 to index
    %c0_55 = arith.constant 0 : index
    %c0_56 = arith.constant 0 : index
    %189 = vector.load %arg12[%188, %c0_55, %c0_56] : memref<8x8x128xf32, #tpu.memory_space<vmem>>, vector<1x8x128xf32>
    %190 = vector.shape_cast %189 : vector<1x8x128xf32> to vector<8x128xf32>
    %191 = vector.shape_cast %187 : vector<8x128xf32> to vector<1x8x128xf32>
    tpu.vector_store %arg12[%188, %c0_55, %c0_56], %191 {strides = array<i32>} : memref<8x8x128xf32, #tpu.memory_space<vmem>>, vector<1x8x128xf32>,
    %c5_i32 = arith.constant 5 : i32
    %192 = arith.index_cast %c5_i32 : i32 to index
    %c0_57 = arith.constant 0 : index
    %c0_58 = arith.constant 0 : index
    %193 = vector.load %arg11[%192, %c0_57, %c0_58] : memref<8x8x512xf32, #tpu.memory_space<vmem>>, vector<1x8x512xf32>
    %194 = vector.shape_cast %193 : vector<1x8x512xf32> to vector<8x512xf32>
    %195 = arith.truncf %187 : vector<8x128xf32> to vector<8x128xbf16>
    %cst_59 = arith.constant dense<0.000000e+00> : vector<8x512xf32>
    %196 = tpu.matmul %195, %14, %cst_59 {dimension_numbers = #tpu.dot_dimension_numbers<[1], [0], [0], [1], [0, 0, 1, 1], [], []>} : vector<8x128xbf16>, vector<128x512xbf16>, vector<8x512xf32> -> vector<8x512xf32>
    %197 = arith.addf %194, %196 : vector<8x512xf32>
    %198 = vector.extract_strided_slice %197 {offsets = [0, 0], sizes = [8, 128], strides = [1, 1]} : vector<8x512xf32> to vector<8x128xf32>
    %199 = arith.negf %198 : vector<8x128xf32>
    %200 = math.exp %199 : vector<8x128xf32>
    %cst_60 = arith.constant 1.000000e+00 : f32
    %201 = vector.broadcast %cst_60 : f32 to vector<8x128xf32>
    %202 = arith.addf %201, %200 : vector<8x128xf32>
    %203 = arith.divf %201, %202 : vector<8x128xf32>
    %204 = vector.extract_strided_slice %197 {offsets = [0, 128], sizes = [8, 128], strides = [1, 1]} : vector<8x512xf32> to vector<8x128xf32>
    %205 = arith.negf %204 : vector<8x128xf32>
    %206 = math.exp %205 : vector<8x128xf32>
    %cst_61 = arith.constant 1.000000e+00 : f32
    %207 = vector.broadcast %cst_61 : f32 to vector<8x128xf32>
    %208 = arith.addf %207, %206 : vector<8x128xf32>
    %209 = arith.divf %207, %208 : vector<8x128xf32>
    %210 = vector.extract_strided_slice %197 {offsets = [0, 256], sizes = [8, 128], strides = [1, 1]} : vector<8x512xf32> to vector<8x128xf32>
    %211 = math.tanh %210 : vector<8x128xf32>
    %212 = vector.extract_strided_slice %197 {offsets = [0, 384], sizes = [8, 128], strides = [1, 1]} : vector<8x512xf32> to vector<8x128xf32>
    %213 = arith.negf %212 : vector<8x128xf32>
    %214 = math.exp %213 : vector<8x128xf32>
    %cst_62 = arith.constant 1.000000e+00 : f32
    %215 = vector.broadcast %cst_62 : f32 to vector<8x128xf32>
    %216 = arith.addf %215, %214 : vector<8x128xf32>
    %217 = arith.divf %215, %216 : vector<8x128xf32>
    %218 = arith.mulf %209, %185 : vector<8x128xf32>
    %219 = arith.mulf %203, %211 : vector<8x128xf32>
    %220 = arith.addf %218, %219 : vector<8x128xf32>
    %221 = math.tanh %220 : vector<8x128xf32>
    %222 = arith.mulf %217, %221 : vector<8x128xf32>
    %223 = arith.index_cast %c5_i32 : i32 to index
    %c0_63 = arith.constant 0 : index
    %c0_64 = arith.constant 0 : index
    %224 = vector.load %arg12[%223, %c0_63, %c0_64] : memref<8x8x128xf32, #tpu.memory_space<vmem>>, vector<1x8x128xf32>
    %225 = vector.shape_cast %224 : vector<1x8x128xf32> to vector<8x128xf32>
    %226 = vector.shape_cast %222 : vector<8x128xf32> to vector<1x8x128xf32>
    tpu.vector_store %arg12[%223, %c0_63, %c0_64], %226 {strides = array<i32>} : memref<8x8x128xf32, #tpu.memory_space<vmem>>, vector<1x8x128xf32>,
    %c6_i32 = arith.constant 6 : i32
    %227 = arith.index_cast %c6_i32 : i32 to index
    %c0_65 = arith.constant 0 : index
    %c0_66 = arith.constant 0 : index
    %228 = vector.load %arg11[%227, %c0_65, %c0_66] : memref<8x8x512xf32, #tpu.memory_space<vmem>>, vector<1x8x512xf32>
    %229 = vector.shape_cast %228 : vector<1x8x512xf32> to vector<8x512xf32>
    %230 = arith.truncf %222 : vector<8x128xf32> to vector<8x128xbf16>
    %cst_67 = arith.constant dense<0.000000e+00> : vector<8x512xf32>
    %231 = tpu.matmul %230, %14, %cst_67 {dimension_numbers = #tpu.dot_dimension_numbers<[1], [0], [0], [1], [0, 0, 1, 1], [], []>} : vector<8x128xbf16>, vector<128x512xbf16>, vector<8x512xf32> -> vector<8x512xf32>
    %232 = arith.addf %229, %231 : vector<8x512xf32>
    %233 = vector.extract_strided_slice %232 {offsets = [0, 0], sizes = [8, 128], strides = [1, 1]} : vector<8x512xf32> to vector<8x128xf32>
    %234 = arith.negf %233 : vector<8x128xf32>
    %235 = math.exp %234 : vector<8x128xf32>
    %cst_68 = arith.constant 1.000000e+00 : f32
    %236 = vector.broadcast %cst_68 : f32 to vector<8x128xf32>
    %237 = arith.addf %236, %235 : vector<8x128xf32>
    %238 = arith.divf %236, %237 : vector<8x128xf32>
    %239 = vector.extract_strided_slice %232 {offsets = [0, 128], sizes = [8, 128], strides = [1, 1]} : vector<8x512xf32> to vector<8x128xf32>
    %240 = arith.negf %239 : vector<8x128xf32>
    %241 = math.exp %240 : vector<8x128xf32>
    %cst_69 = arith.constant 1.000000e+00 : f32
    %242 = vector.broadcast %cst_69 : f32 to vector<8x128xf32>
    %243 = arith.addf %242, %241 : vector<8x128xf32>
    %244 = arith.divf %242, %243 : vector<8x128xf32>
    %245 = vector.extract_strided_slice %232 {offsets = [0, 256], sizes = [8, 128], strides = [1, 1]} : vector<8x512xf32> to vector<8x128xf32>
    %246 = math.tanh %245 : vector<8x128xf32>
    %247 = vector.extract_strided_slice %232 {offsets = [0, 384], sizes = [8, 128], strides = [1, 1]} : vector<8x512xf32> to vector<8x128xf32>
    %248 = arith.negf %247 : vector<8x128xf32>
    %249 = math.exp %248 : vector<8x128xf32>
    %cst_70 = arith.constant 1.000000e+00 : f32
    %250 = vector.broadcast %cst_70 : f32 to vector<8x128xf32>
    %251 = arith.addf %250, %249 : vector<8x128xf32>
    %252 = arith.divf %250, %251 : vector<8x128xf32>
    %253 = arith.mulf %244, %220 : vector<8x128xf32>
    %254 = arith.mulf %238, %246 : vector<8x128xf32>
    %255 = arith.addf %253, %254 : vector<8x128xf32>
    %256 = math.tanh %255 : vector<8x128xf32>
    %257 = arith.mulf %252, %256 : vector<8x128xf32>
    %258 = arith.index_cast %c6_i32 : i32 to index
    %c0_71 = arith.constant 0 : index
    %c0_72 = arith.constant 0 : index
    %259 = vector.load %arg12[%258, %c0_71, %c0_72] : memref<8x8x128xf32, #tpu.memory_space<vmem>>, vector<1x8x128xf32>
    %260 = vector.shape_cast %259 : vector<1x8x128xf32> to vector<8x128xf32>
    %261 = vector.shape_cast %257 : vector<8x128xf32> to vector<1x8x128xf32>
    tpu.vector_store %arg12[%258, %c0_71, %c0_72], %261 {strides = array<i32>} : memref<8x8x128xf32, #tpu.memory_space<vmem>>, vector<1x8x128xf32>,
    %c7_i32 = arith.constant 7 : i32
    %262 = arith.index_cast %c7_i32 : i32 to index
    %c0_73 = arith.constant 0 : index
    %c0_74 = arith.constant 0 : index
    %263 = vector.load %arg11[%262, %c0_73, %c0_74] : memref<8x8x512xf32, #tpu.memory_space<vmem>>, vector<1x8x512xf32>
    %264 = vector.shape_cast %263 : vector<1x8x512xf32> to vector<8x512xf32>
    %265 = arith.truncf %257 : vector<8x128xf32> to vector<8x128xbf16>
    %cst_75 = arith.constant dense<0.000000e+00> : vector<8x512xf32>
    %266 = tpu.matmul %265, %14, %cst_75 {dimension_numbers = #tpu.dot_dimension_numbers<[1], [0], [0], [1], [0, 0, 1, 1], [], []>} : vector<8x128xbf16>, vector<128x512xbf16>, vector<8x512xf32> -> vector<8x512xf32>
    %267 = arith.addf %264, %266 : vector<8x512xf32>
    %268 = vector.extract_strided_slice %267 {offsets = [0, 0], sizes = [8, 128], strides = [1, 1]} : vector<8x512xf32> to vector<8x128xf32>
    %269 = arith.negf %268 : vector<8x128xf32>
    %270 = math.exp %269 : vector<8x128xf32>
    %cst_76 = arith.constant 1.000000e+00 : f32
    %271 = vector.broadcast %cst_76 : f32 to vector<8x128xf32>
    %272 = arith.addf %271, %270 : vector<8x128xf32>
    %273 = arith.divf %271, %272 : vector<8x128xf32>
    %274 = vector.extract_strided_slice %267 {offsets = [0, 128], sizes = [8, 128], strides = [1, 1]} : vector<8x512xf32> to vector<8x128xf32>
    %275 = arith.negf %274 : vector<8x128xf32>
    %276 = math.exp %275 : vector<8x128xf32>
    %cst_77 = arith.constant 1.000000e+00 : f32
    %277 = vector.broadcast %cst_77 : f32 to vector<8x128xf32>
    %278 = arith.addf %277, %276 : vector<8x128xf32>
    %279 = arith.divf %277, %278 : vector<8x128xf32>
    %280 = vector.extract_strided_slice %267 {offsets = [0, 256], sizes = [8, 128], strides = [1, 1]} : vector<8x512xf32> to vector<8x128xf32>
    %281 = math.tanh %280 : vector<8x128xf32>
    %282 = vector.extract_strided_slice %267 {offsets = [0, 384], sizes = [8, 128], strides = [1, 1]} : vector<8x512xf32> to vector<8x128xf32>
    %283 = arith.negf %282 : vector<8x128xf32>
    %284 = math.exp %283 : vector<8x128xf32>
    %cst_78 = arith.constant 1.000000e+00 : f32
    %285 = vector.broadcast %cst_78 : f32 to vector<8x128xf32>
    %286 = arith.addf %285, %284 : vector<8x128xf32>
    %287 = arith.divf %285, %286 : vector<8x128xf32>
    %288 = arith.mulf %279, %255 : vector<8x128xf32>
    %289 = arith.mulf %273, %281 : vector<8x128xf32>
    %290 = arith.addf %288, %289 : vector<8x128xf32>
    %291 = math.tanh %290 : vector<8x128xf32>
    %292 = arith.mulf %287, %291 : vector<8x128xf32>
    %293 = arith.index_cast %c7_i32 : i32 to index
    %c0_79 = arith.constant 0 : index
    %c0_80 = arith.constant 0 : index
    %294 = vector.load %arg12[%293, %c0_79, %c0_80] : memref<8x8x128xf32, #tpu.memory_space<vmem>>, vector<1x8x128xf32>
    %295 = vector.shape_cast %294 : vector<1x8x128xf32> to vector<8x128xf32>
    %296 = vector.shape_cast %292 : vector<8x128xf32> to vector<1x8x128xf32>
    tpu.vector_store %arg12[%293, %c0_79, %c0_80], %296 {strides = array<i32>} : memref<8x8x128xf32, #tpu.memory_space<vmem>>, vector<1x8x128xf32>,
    %c8_i32 = arith.constant 8 : i32
    %c0_81 = arith.constant 0 : index
    %c0_82 = arith.constant 0 : index
    %297 = vector.load %arg9[%c0_81, %c0_82] : memref<8x128xf32, #tpu.memory_space<vmem>>, vector<8x128xf32>
    tpu.vector_store %arg9[%c0_81, %c0_82], %292 {strides = array<i32>} : memref<8x128xf32, #tpu.memory_space<vmem>>, vector<8x128xf32>,
    %c0_83 = arith.constant 0 : index
    %c0_84 = arith.constant 0 : index
    %298 = vector.load %arg10[%c0_83, %c0_84] : memref<8x128xf32, #tpu.memory_space<vmem>>, vector<8x128xf32>
    tpu.vector_store %arg10[%c0_83, %c0_84], %290 {strides = array<i32>} : memref<8x128xf32, #tpu.memory_space<vmem>>, vector<8x128xf32>,
    %c0_85 = arith.constant 0 : index
    %c0_86 = arith.constant 0 : index
    %c0_87 = arith.constant 0 : index
    %299 = vector.load %arg12[%c0_85, %c0_86, %c0_87] : memref<8x8x128xf32, #tpu.memory_space<vmem>>, vector<8x8x128xf32>
    %300 = arith.truncf %299 : vector<8x8x128xf32> to vector<8x8x128xbf16>
    %c0_88 = arith.constant 0 : index
    %c0_89 = arith.constant 0 : index
    %c0_90 = arith.constant 0 : index
    %301 = vector.load %arg8[%c0_88, %c0_89, %c0_90] : memref<8x8x128xbf16, #tpu.memory_space<vmem>>, vector<8x8x128xbf16>
    tpu.vector_store %arg8[%c0_88, %c0_89, %c0_90], %300 {strides = array<i32>} : memref<8x8x128xbf16, #tpu.memory_space<vmem>>, vector<8x8x128xbf16>,
    return
  }
  func.func @transform_0(%arg0: i32, %arg1: i32) -> (i32, i32, i32) {
    %c0_i32 = arith.constant 0 : i32
    %c0_i32_0 = arith.constant 0 : i32
    return %arg1, %arg0, %c0_i32 : i32, i32, i32
  }
  func.func @transform_1(%arg0: i32, %arg1: i32) -> (i32, i32) {
    %c0_i32 = arith.constant 0 : i32
    %c0_i32_0 = arith.constant 0 : i32
    %c0_i32_1 = arith.constant 0 : i32
    return %c0_i32, %c0_i32_0 : i32, i32
  }
  func.func @transform_2(%arg0: i32, %arg1: i32) -> (i32, i32) {
    %c0_i32 = arith.constant 0 : i32
    %c0_i32_0 = arith.constant 0 : i32
    %c0_i32_1 = arith.constant 0 : i32
    return %c0_i32, %c0_i32_0 : i32, i32
  }
  func.func @transform_3(%arg0: i32, %arg1: i32) -> (i32, i32) {
    %c0_i32 = arith.constant 0 : i32
    %c0_i32_0 = arith.constant 0 : i32
    %c0_i32_1 = arith.constant 0 : i32
    return %c0_i32, %c0_i32_0 : i32, i32
  }
  func.func @transform_4(%arg0: i32, %arg1: i32) -> (i32, i32) {
    %c0_i32 = arith.constant 0 : i32
    %c0_i32_0 = arith.constant 0 : i32
    return %arg0, %c0_i32 : i32, i32
  }
  func.func @transform_5(%arg0: i32, %arg1: i32) -> (i32, i32) {
    %c0_i32 = arith.constant 0 : i32
    %c0_i32_0 = arith.constant 0 : i32
    return %arg0, %c0_i32 : i32, i32
  }
  func.func @transform_6(%arg0: i32, %arg1: i32) -> (i32, i32, i32) {
    %c0_i32 = arith.constant 0 : i32
    %c0_i32_0 = arith.constant 0 : i32
    return %arg1, %arg0, %c0_i32 : i32, i32, i32
  }
  func.func @transform_7(%arg0: i32, %arg1: i32) -> (i32, i32) {
    %c0_i32 = arith.constant 0 : i32
    %c0_i32_0 = arith.constant 0 : i32
    return %arg0, %c0_i32 : i32, i32
  }
  func.func @transform_8(%arg0: i32, %arg1: i32) -> (i32, i32) {
    %c0_i32 = arith.constant 0 : i32
    %c0_i32_0 = arith.constant 0 : i32
    return %arg0, %c0_i32 : i32, i32
  }
}

module attributes {stable_mosaic.version = 11 : i64} {
  func.func @_matmul_bias_kernel(%arg0: i32, %arg1: i32, %arg2: memref<128x128xbf16, #tpu.memory_space<vmem>>, %arg3: memref<128x256xbf16, #tpu.memory_space<vmem>>, %arg4: memref<1x256xf32, #tpu.memory_space<vmem>>, %arg5: memref<128x256xf32, #tpu.memory_space<vmem>>) attributes {dimension_semantics = [#tpu.dimension_semantics<parallel>, #tpu.dimension_semantics<parallel>], iteration_bounds = array<i64: 1, 1>, scalar_prefetch = 0 : i64, scratch_operands = 0 : i64, tpu.core_type = #tpu.core_type<tc>, window_params = [{transform_indices = @transform_0, window_bounds = array<i64: 128, 128>}, {transform_indices = @transform_1, window_bounds = array<i64: 128, 256>}, {transform_indices = @transform_2, window_bounds = array<i64: 1, 256>}, {transform_indices = @transform_3, window_bounds = array<i64: 128, 256>}]} {
    %c0 = arith.constant 0 : index
    %c0_0 = arith.constant 0 : index
    %0 = vector.load %arg2[%c0, %c0_0] : memref<128x128xbf16, #tpu.memory_space<vmem>>, vector<128x128xbf16>
    %c0_1 = arith.constant 0 : index
    %c0_2 = arith.constant 0 : index
    %1 = vector.load %arg3[%c0_1, %c0_2] : memref<128x256xbf16, #tpu.memory_space<vmem>>, vector<128x256xbf16>
    %cst = arith.constant dense<0.000000e+00> : vector<128x256xf32>
    %2 = tpu.matmul %0, %1, %cst {dimension_numbers = #tpu.dot_dimension_numbers<[1], [0], [0], [1], [0, 0, 1, 1], [], []>} : vector<128x128xbf16>, vector<128x256xbf16>, vector<128x256xf32> -> vector<128x256xf32>
    %c0_3 = arith.constant 0 : index
    %c0_4 = arith.constant 0 : index
    %3 = vector.load %arg4[%c0_3, %c0_4] : memref<1x256xf32, #tpu.memory_space<vmem>>, vector<1x256xf32>
    %4 = vector.broadcast %3 : vector<1x256xf32> to vector<128x256xf32>
    %5 = arith.addf %2, %4 : vector<128x256xf32>
    %c0_5 = arith.constant 0 : index
    %c0_6 = arith.constant 0 : index
    %6 = vector.load %arg5[%c0_5, %c0_6] : memref<128x256xf32, #tpu.memory_space<vmem>>, vector<128x256xf32>
    tpu.vector_store %arg5[%c0_5, %c0_6], %5 {strides = array<i32>} : memref<128x256xf32, #tpu.memory_space<vmem>>, vector<128x256xf32>,
    return
  }
  func.func @transform_0(%arg0: i32, %arg1: i32) -> (i32, i32) {
    %c0_i32 = arith.constant 0 : i32
    %c0_i32_0 = arith.constant 0 : i32
    return %arg0, %c0_i32 : i32, i32
  }
  func.func @transform_1(%arg0: i32, %arg1: i32) -> (i32, i32) {
    %c0_i32 = arith.constant 0 : i32
    %c0_i32_0 = arith.constant 0 : i32
    return %c0_i32, %arg1 : i32, i32
  }
  func.func @transform_2(%arg0: i32, %arg1: i32) -> (i32, i32) {
    %c0_i32 = arith.constant 0 : i32
    %c0_i32_0 = arith.constant 0 : i32
    return %c0_i32, %arg1 : i32, i32
  }
  func.func @transform_3(%arg0: i32, %arg1: i32) -> (i32, i32) {
    %c0_i32 = arith.constant 0 : i32
    return %arg0, %arg1 : i32, i32
  }
}

</mosaic_0001>

<llo_original>
// kernel: lstm_model_forward.5
$region0: #{lstm_model_forward.5}
  #allocation0 [shape = 'u32[]', space=smem, size = 0x4, offset = 0x4, fixed_abs, tag = 'smem constant byte address 0x4 - core index']
  #allocation1 [shape = 'u32[144,128]{1,0:T(1,128)}', space=vmem, size = 0x12000, scoped, tag = 'internal scratch']
  %s0 = inlined_call_operand.vmem [shape: bf16[128,128], index: 0, kind: input, shape index: {}]
  %s1 = inlined_call_operand.vmem [shape: bf16[128,256], index: 1, kind: input, shape index: {}]
  %s2 = inlined_call_operand.vmem [shape: f32[1,256], index: 2, kind: input, shape index: {}]
  %s3 = inlined_call_operand.hbm [shape: f32[128,256], index: 3, kind: output, shape index: {}]
  %s4 = sld [smem:[#allocation0]]
  $region22: #{lstm_model_forward.5} parent=0
    _
  %s6 = ssub.s32 1, %s4
  %s7 = scalar_select 0, %s6, %s4
  $region1: #{lstm_model_forward.5} parent=0
    #allocation2 [shape = 'u8[131072]{0}', space=vmem, size = 0x20000, scoped, tag = 'output window, operand 0, single buffered']
    #allocation3 [shape = 's32[1]{0}', space=sflag, size = 0x4, scoped, tag = 'scoped memory for lstm_model_forward.5']
    %8 = vsyncpa [#allocation3], 0
    // Predicated region
    $region2: #{lstm_model_forward.5} parent=1 // pred_check
      _
    $region3: #{lstm_model_forward.5} parent=1 // pred_check_branch
      %10 = sbr.rel (0) target = $region5
    $region4: #{lstm_model_forward.5} parent=1 // pred_region
      _
    $region5: #{lstm_model_forward.5} parent=1 // pred_fallthru
      _
    // Predicated region
    $region6: #{lstm_model_forward.5} parent=1 // pred_check
      _
    $region7: #{lstm_model_forward.5} parent=1 // pred_check_branch
      %12 = sbr.rel (0) target = $region9
    $region8: #{lstm_model_forward.5} parent=1 // pred_region
      _
    $region9: #{lstm_model_forward.5} parent=1 // pred_fallthru
      _
    // Predicated region
    $region10: #{lstm_model_forward.5} parent=1 // pred_check
      _
    $region11: #{lstm_model_forward.5} parent=1 // pred_check_branch
      %14 = sbr.rel (0) target = $region13
    $region12: #{lstm_model_forward.5} parent=1 // pred_region
      _
    $region13: #{lstm_model_forward.5} parent=1 // pred_fallthru
      _
    %v16 = vld [vmem:[%s0] sm:$0xf]
    %v17 = vld [vmem:[%s0 + $0x4] sm:$0xf]
    %v18 = vld [vmem:[%s0 + $0x8] sm:$0xf]
    %v19 = vld [vmem:[%s0 + $0xc] sm:$0xf]
    %v20 = vld [vmem:[%s0 + $0x10] sm:$0xf]
    %v21 = vld [vmem:[%s0 + $0x14] sm:$0xf]
    %v22 = vld [vmem:[%s0 + $0x18] sm:$0xf]
    %v23 = vld [vmem:[%s0 + $0x1c] sm:$0xf]
    %v24 = vld [vmem:[%s0 + $0x20] sm:$0xf]
    %v25 = vld [vmem:[%s0 + $0x24] sm:$0xf]
    %v26 = vld [vmem:[%s0 + $0x28] sm:$0xf]
    %v27 = vld [vmem:[%s0 + $0x2c] sm:$0xf]
    %v28 = vld [vmem:[%s0 + $0x30] sm:$0xf]
    %v29 = vld [vmem:[%s0 + $0x34] sm:$0xf]
    %v30 = vld [vmem:[%s0 + $0x38] sm:$0xf]
    %v31 = vld [vmem:[%s0 + $0x3c] sm:$0xf]
    %v32 = vld [vmem:[%s1] sm:$0xff]
    %v33 = vld [vmem:[%s1 + $0x8] sm:$0xff]
    %v34 = vld [vmem:[%s1 + $0x10] sm:$0xff]
    %v35 = vld [vmem:[%s1 + $0x18] sm:$0xff]
    %v36 = vld [vmem:[%s1 + $0x20] sm:$0xff]
    %v37 = vld [vmem:[%s1 + $0x28] sm:$0xff]
    %v38 = vld [vmem:[%s1 + $0x30] sm:$0xff]
    %v39 = vld [vmem:[%s1 + $0x38] sm:$0xff]
    %v40 = vld [vmem:[%s1 + $0x40] sm:$0xff]
    %v41 = vld [vmem:[%s1 + $0x48] sm:$0xff]
    %v42 = vld [vmem:[%s1 + $0x50] sm:$0xff]
    %v43 = vld [vmem:[%s1 + $0x58] sm:$0xff]
    %v44 = vld [vmem:[%s1 + $0x60] sm:$0xff]
    %v45 = vld [vmem:[%s1 + $0x68] sm:$0xff]
    %v46 = vld [vmem:[%s1 + $0x70] sm:$0xff]
    %v47 = vld [vmem:[%s1 + $0x78] sm:$0xff]
    %v48 = vld [vmem:[%s2] sm:$0x3]
    %v50 = vlaneseq
    %v51 = vshrl.u32 %v50, 7
    %v52 = vsub.s32 0, %v51
    %v53 = vrot.slane %v48, %v52
    %v54 = vlaneseq
    %v55 = vshrl.u32 %v54, 7
    %v56 = vsub.s32 1, %v55
    %v57 = vrot.slane %v48, %v56
    %v76 = vunpack.c.l.b16 %v16
    %v77 = vunpack.c.l.b16 %v17
    %v78 = vunpack.c.l.b16 %v18
    %v79 = vunpack.c.l.b16 %v19
    %v80 = vunpack.c.l.b16 %v20
    %v81 = vunpack.c.l.b16 %v21
    %v82 = vunpack.c.l.b16 %v22
    %v83 = vunpack.c.l.b16 %v23
    %v84 = vunpack.c.l.b16 %v24
    %v85 = vunpack.c.l.b16 %v25
    %v86 = vunpack.c.l.b16 %v26
    %v87 = vunpack.c.l.b16 %v27
    %v88 = vunpack.c.l.b16 %v28
    %v89 = vunpack.c.l.b16 %v29
    %v90 = vunpack.c.l.b16 %v30
    %v91 = vunpack.c.l.b16 %v31
    %v92 = vpack.c.b16 %v77, %v76
    %v93 = vpack.c.b16 %v79, %v78
    %v94 = vpack.c.b16 %v81, %v80
    %v95 = vpack.c.b16 %v83, %v82
    %v96 = vpack.c.b16 %v85, %v84
    %v97 = vpack.c.b16 %v87, %v86
    %v98 = vpack.c.b16 %v89, %v88
    %v99 = vpack.c.b16 %v91, %v90
    %v124 = vunpack.c.l.b16 %v32
    %v125 = vunpack.c.h.b16 %v32
    %v126 = vunpack.c.l.b16 %v33
    %v127 = vunpack.c.h.b16 %v33
    %v128 = vunpack.c.l.b16 %v34
    %v129 = vunpack.c.h.b16 %v34
    %v130 = vunpack.c.l.b16 %v35
    %v131 = vunpack.c.h.b16 %v35
    %v132 = vunpack.c.l.b16 %v36
    %v133 = vunpack.c.h.b16 %v36
    %v134 = vunpack.c.l.b16 %v37
    %v135 = vunpack.c.h.b16 %v37
    %v136 = vunpack.c.l.b16 %v38
    %v137 = vunpack.c.h.b16 %v38
    %v138 = vunpack.c.l.b16 %v39
    %v139 = vunpack.c.h.b16 %v39
    %v140 = vunpack.c.l.b16 %v40
    %v141 = vunpack.c.h.b16 %v40
    %v142 = vunpack.c.l.b16 %v41
    %v143 = vunpack.c.h.b16 %v41
    %v144 = vunpack.c.l.b16 %v42
    %v145 = vunpack.c.h.b16 %v42
    %v146 = vunpack.c.l.b16 %v43
    %v147 = vunpack.c.h.b16 %v43
    %v148 = vunpack.c.l.b16 %v44
    %v149 = vunpack.c.h.b16 %v44
    %v150 = vunpack.c.l.b16 %v45
    %v151 = vunpack.c.h.b16 %v45
    %v152 = vunpack.c.l.b16 %v46
    %v153 = vunpack.c.h.b16 %v46
    %v154 = vunpack.c.l.b16 %v47
    %v155 = vunpack.c.h.b16 %v47
    %v156 = vpack.c.b16 %v126, %v124
    %v157 = vpack.c.b16 %v127, %v125
    %v158 = vpack.c.b16 %v130, %v128
    %v159 = vpack.c.b16 %v131, %v129
    %v160 = vpack.c.b16 %v134, %v132
    %v161 = vpack.c.b16 %v135, %v133
    %v162 = vpack.c.b16 %v138, %v136
    %v163 = vpack.c.b16 %v139, %v137
    %v164 = vpack.c.b16 %v142, %v140
    %v165 = vpack.c.b16 %v143, %v141
    %v166 = vpack.c.b16 %v146, %v144
    %v167 = vpack.c.b16 %v147, %v145
    %v168 = vpack.c.b16 %v150, %v148
    %v169 = vpack.c.b16 %v151, %v149
    %v170 = vpack.c.b16 %v154, %v152
    %v171 = vpack.c.b16 %v155, %v153
    %188 = vmatprep.subr.bf16.mxu0 %v171
    %189 = vmatpush1.bf16.msra.mxu0 %v170
    %190 = vmatprep.subr.bf16.mxu0 %v169
    %191 = vmatpush1.bf16.msra.mxu0 %v168
    %192 = vmatprep.subr.bf16.mxu0 %v167
    %193 = vmatpush1.bf16.msra.mxu0 %v166
    %194 = vmatprep.subr.bf16.mxu0 %v165
    %195 = vmatpush1.bf16.msra.mxu0 %v164
    %196 = vmatprep.subr.bf16.mxu0 %v163
    %197 = vmatpush1.bf16.msra.mxu0 %v162
    %198 = vmatprep.subr.bf16.mxu0 %v161
    %199 = vmatpush1.bf16.msra.mxu0 %v160
    %200 = vmatprep.subr.bf16.mxu0 %v159
    %201 = vmatpush1.bf16.msra.mxu0 %v158
    %202 = vmatprep.subr.bf16.mxu0 %v157
    %203 = vmatpush1.bf16.msra.mxu0 %v156
    %204 = vmatprep.subr.bf16.mxu0 0
    %205 = vmatpush2.bf16.msra.mxu0 0
    %206 = vmatprep.subr.bf16.mxu0 0
    %207 = vmatpush2.bf16.msra.mxu0 0
    %208 = vmatprep.subr.bf16.mxu0 0
    %209 = vmatpush2.bf16.msra.mxu0 0
    %210 = vmatprep.subr.bf16.mxu0 0
    %211 = vmatpush2.bf16.msra.mxu0 0
    %212 = vmatprep.subr.bf16.mxu0 0
    %213 = vmatpush2.bf16.msra.mxu0 0
    %214 = vmatprep.subr.bf16.mxu0 0
    %215 = vmatpush2.bf16.msra.mxu0 0
    %216 = vmatprep.subr.bf16.mxu0 0
    %217 = vmatpush2.bf16.msra.mxu0 0
    %218 = vmatprep.subr.bf16.mxu0 0
    %219 = vmatpush2.bf16.msra.mxu0 0
    %220 = vmatprep.mubr.bf16.mxu0 0
    %221 = vmatmul.mubr.bf16.gmra.mxu0 %v92
    %v222 = vpop.f32.mrf.mxu0
    %v223 = vadd.f32 %v53, %v222
    %v224 = vpop.f32.mrf.mxu0
    %v225 = vadd.f32 %v57, %v224
    %v226 = vpop.f32.mrf.mxu0
    %v227 = vadd.f32 %v53, %v226
    %v228 = vpop.f32.mrf.mxu0
    %v229 = vadd.f32 %v57, %v228
    %230 = vmatprep.mubr.bf16.mxu0 0
    %231 = vmatmul.mubr.bf16.gmra.mxu0 %v93
    %v232 = vpop.f32.mrf.mxu0
    %v233 = vadd.f32 %v53, %v232
    %v234 = vpop.f32.mrf.mxu0
    %v235 = vadd.f32 %v57, %v234
    %v236 = vpop.f32.mrf.mxu0
    %v237 = vadd.f32 %v53, %v236
    %v238 = vpop.f32.mrf.mxu0
    %v239 = vadd.f32 %v57, %v238
    %240 = vmatprep.mubr.bf16.mxu0 0
    %241 = vmatmul.mubr.bf16.gmra.mxu0 %v94
    %v242 = vpop.f32.mrf.mxu0
    %v243 = vadd.f32 %v53, %v242
    %v244 = vpop.f32.mrf.mxu0
    %v245 = vadd.f32 %v57, %v244
    %v246 = vpop.f32.mrf.mxu0
    %v247 = vadd.f32 %v53, %v246
    %v248 = vpop.f32.mrf.mxu0
    %v249 = vadd.f32 %v57, %v248
    %250 = vmatprep.mubr.bf16.mxu0 0
    %251 = vmatmul.mubr.bf16.gmra.mxu0 %v95
    %v252 = vpop.f32.mrf.mxu0
    %v253 = vadd.f32 %v53, %v252
    %v254 = vpop.f32.mrf.mxu0
    %v255 = vadd.f32 %v57, %v254
    %v256 = vpop.f32.mrf.mxu0
    %v257 = vadd.f32 %v53, %v256
    %v258 = vpop.f32.mrf.mxu0
    %v259 = vadd.f32 %v57, %v258
    %260 = vmatprep.mubr.bf16.mxu0 0
    %261 = vmatmul.mubr.bf16.gmra.mxu0 %v96
    %v262 = vpop.f32.mrf.mxu0
    %v263 = vadd.f32 %v53, %v262
    %v264 = vpop.f32.mrf.mxu0
    %v265 = vadd.f32 %v57, %v264
    %v266 = vpop.f32.mrf.mxu0
    %v267 = vadd.f32 %v53, %v266
    %v268 = vpop.f32.mrf.mxu0
    %v269 = vadd.f32 %v57, %v268
    %270 = vmatprep.mubr.bf16.mxu0 0
    %271 = vmatmul.mubr.bf16.gmra.mxu0 %v97
    %v272 = vpop.f32.mrf.mxu0
    %v273 = vadd.f32 %v53, %v272
    %v274 = vpop.f32.mrf.mxu0
    %v275 = vadd.f32 %v57, %v274
    %v276 = vpop.f32.mrf.mxu0
    %v277 = vadd.f32 %v53, %v276
    %v278 = vpop.f32.mrf.mxu0
    %v279 = vadd.f32 %v57, %v278
    %280 = vmatprep.mubr.bf16.mxu0 0
    %281 = vmatmul.mubr.bf16.gmra.mxu0 %v98
    %v282 = vpop.f32.mrf.mxu0
    %v283 = vadd.f32 %v53, %v282
    %v284 = vpop.f32.mrf.mxu0
    %v285 = vadd.f32 %v57, %v284
    %v286 = vpop.f32.mrf.mxu0
    %v287 = vadd.f32 %v53, %v286
    %v288 = vpop.f32.mrf.mxu0
    %v289 = vadd.f32 %v57, %v288
    %290 = vmatprep.mubr.bf16.mxu0 0
    %291 = vmatmul.mubr.bf16.gmra.mxu0 %v99
    %v292 = vpop.f32.mrf.mxu0
    %v293 = vadd.f32 %v53, %v292
    %v294 = vpop.f32.mrf.mxu0
    %v295 = vadd.f32 %v57, %v294
    %v296 = vpop.f32.mrf.mxu0
    %v297 = vadd.f32 %v53, %v296
    %v298 = vpop.f32.mrf.mxu0
    %v299 = vadd.f32 %v57, %v298
    %300 = vdwg.mxu0
    %301 = vst [vmem:[#allocation2] sm:$0xff] %v223
    %302 = vst [vmem:[#allocation2 + $0x8] sm:$0xff] %v225
    %303 = vst [vmem:[#allocation2 + $0x10] sm:$0xff] %v227
    %304 = vst [vmem:[#allocation2 + $0x18] sm:$0xff] %v229
    %305 = vst [vmem:[#allocation2 + $0x20] sm:$0xff] %v233
    %306 = vst [vmem:[#allocation2 + $0x28] sm:$0xff] %v235
    %307 = vst [vmem:[#allocation2 + $0x30] sm:$0xff] %v237
    %308 = vst [vmem:[#allocation2 + $0x38] sm:$0xff] %v239
    %309 = vst [vmem:[#allocation2 + $0x40] sm:$0xff] %v243
    %310 = vst [vmem:[#allocation2 + $0x48] sm:$0xff] %v245
    %311 = vst [vmem:[#allocation2 + $0x50] sm:$0xff] %v247
    %312 = vst [vmem:[#allocation2 + $0x58] sm:$0xff] %v249
    %313 = vst [vmem:[#allocation2 + $0x60] sm:$0xff] %v253
    %314 = vst [vmem:[#allocation2 + $0x68] sm:$0xff] %v255
    %315 = vst [vmem:[#allocation2 + $0x70] sm:$0xff] %v257
    %316 = vst [vmem:[#allocation2 + $0x78] sm:$0xff] %v259
    %317 = vst [vmem:[#allocation2 + $0x80] sm:$0xff] %v263
    %318 = vst [vmem:[#allocation2 + $0x88] sm:$0xff] %v265
    %319 = vst [vmem:[#allocation2 + $0x90] sm:$0xff] %v267
    %320 = vst [vmem:[#allocation2 + $0x98] sm:$0xff] %v269
    %321 = vst [vmem:[#allocation2 + $0xa0] sm:$0xff] %v273
    %322 = vst [vmem:[#allocation2 + $0xa8] sm:$0xff] %v275
    %323 = vst [vmem:[#allocation2 + $0xb0] sm:$0xff] %v277
    %324 = vst [vmem:[#allocation2 + $0xb8] sm:$0xff] %v279
    %325 = vst [vmem:[#allocation2 + $0xc0] sm:$0xff] %v283
    %326 = vst [vmem:[#allocation2 + $0xc8] sm:$0xff] %v285
    %327 = vst [vmem:[#allocation2 + $0xd0] sm:$0xff] %v287
    %328 = vst [vmem:[#allocation2 + $0xd8] sm:$0xff] %v289
    %329 = vst [vmem:[#allocation2 + $0xe0] sm:$0xff] %v293
    %330 = vst [vmem:[#allocation2 + $0xe8] sm:$0xff] %v295
    %331 = vst [vmem:[#allocation2 + $0xf0] sm:$0xff] %v297
    %332 = vst [vmem:[#allocation2 + $0xf8] sm:$0xff] %v299
    // Predicated region
    $region14: #{lstm_model_forward.5} parent=1 // pred_check
      _
    $region15: #{lstm_model_forward.5} parent=1 // pred_check_branch
      %334 = sbr.rel (0) target = $region17
    $region16: #{lstm_model_forward.5} parent=1 // pred_region
      %s336 = ssub.s32 4096, 4096
      %337 = vsyncadd [#allocation3], %s336
      %s338 = sshll.u32 [#allocation2], 4
      %s339 = int_to_ptr.vmem [resolvable:$true] %s338
      %344 = dma.vmem_to_hbm [thread:$0]  %s339, 4096, %s3, [#allocation3], 256, 256, 16
    $region17: #{lstm_model_forward.5} parent=1 // pred_fallthru
      _
    // Predicated region
    $region18: #{lstm_model_forward.5} parent=1 // pred_check
      _
    $region19: #{lstm_model_forward.5} parent=1 // pred_check_branch
      %346 = sbr.rel (0) target = $region21
    $region20: #{lstm_model_forward.5} parent=1 // pred_region
      %347 = dma.done [#allocation3], 4096
    $region21: #{lstm_model_forward.5} parent=1 // pred_fallthru
      _
    %348 = vsyncpa [#allocation3], 1

// kernel: lstm_model_forward.3
$region0: #{lstm_model_forward.3}
  #allocation0 [shape = 'u32[]', space=smem, size = 0x4, offset = 0x4, fixed_abs, tag = 'smem constant byte address 0x4 - core index']
  #allocation1 [shape = 'u32[144,128]{1,0:T(1,128)}', space=vmem, size = 0x12000, scoped, tag = 'internal scratch']
  #allocation2 [shape = 'f32[8,8,512]{2,1,0:T(8,128)}', space=vmem, size = 0x20000, scoped, tag = 'scratch operand']
  #allocation3 [shape = 'f32[8,8,128]{2,1,0:T(8,128)}', space=vmem, size = 0x8000, scoped, tag = 'scratch operand']
  %s0 = inlined_call_operand.vmem [shape: bf16[16,8,128], index: 0, kind: input, shape index: {}]
  %s1 = inlined_call_operand.vmem [shape: bf16[128,512], index: 1, kind: input, shape index: {}]
  %s2 = inlined_call_operand.vmem [shape: bf16[128,512], index: 2, kind: input, shape index: {}]
  %s3 = inlined_call_operand.vmem [shape: f32[1,512], index: 3, kind: input, shape index: {}]
  %s4 = inlined_call_operand.vmem [shape: f32[8,128], index: 4, kind: input, shape index: {}, may-alias: {4,5}]
  %s5 = inlined_call_operand.vmem [shape: f32[8,128], index: 5, kind: input, shape index: {}, may-alias: {4,5}]
  %s6 = inlined_call_operand.vmem [shape: bf16[16,8,128], index: 6, kind: output, shape index: {0}]
  %s7 = inlined_call_operand.vmem [shape: f32[8,128], index: 7, kind: output, shape index: {1}]
  %s8 = inlined_call_operand.vmem [shape: f32[8,128], index: 8, kind: output, shape index: {2}]
  %9 = xla_tuple %s6, %s7, %s8
  %s10 = sld [smem:[#allocation0]]
  $region77: #{lstm_model_forward.3} parent=0
    _
  %s12 = ssub.s32 1, %s10
  %s13 = scalar_select 0, %s12, %s10
  loop: start=0, step=1, limit=4
  $region2: #{lstm_model_forward.3} parent=0 // loop_pre_header
    _
  $region3: #{lstm_model_forward.3} parent=0 // loop_header
    %s15 = sphi 0, %s19
    %p16 = scmp.ge.s32.totalorder %s15, 4
    %s22 = sphi 0, %s34
    %s23 = sphi 0, %s30
    %s24 = sphi 0, %s22
    %s25 = sphi 0, %s23
    %s26 = sphi 0, %s24
    %s27 = sphi 0, %s25
    %s39 = sphi 0, %s41
    %s42 = sphi 0, %s39
    %s43 = sphi 0, %s42
    %s59 = sphi 0, %s43
    %s63 = sphi 0, %s63
    %s65 = sphi 0, %s63
    %s66 = sphi 0, %s65
    %s80 = sphi 0, %s66
    %s84 = sphi 0, %s84
    %s86 = sphi 0, %s84
    %s87 = sphi 0, %s86
    %s101 = sphi 0, %s87
    %s105 = sphi 0, %s105
    %s107 = sphi 0, %s105
    %s108 = sphi 0, %s107
    %s122 = sphi 0, %s108
    %s128 = sphi 0, %s130
    %s131 = sphi 0, %s128
    %s132 = sphi 0, %s131
    %s148 = sphi 0, %s132
    %s154 = sphi 0, %s156
    %s157 = sphi 0, %s154
    %s158 = sphi 0, %s157
    %s174 = sphi 0, %s158
    %s182 = sphi 0, %s184
    %s185 = sphi 0, %s182
    %s186 = sphi 0, %s185
    %s202 = sphi 0, %s186
    %s208 = sphi 0, %s210
    %s211 = sphi 0, %s208
    %s212 = sphi 0, %s211
    %s228 = sphi 0, %s212
    %s234 = sphi 0, %s236
    %s237 = sphi 0, %s234
    %s238 = sphi 0, %s237
    %s254 = sphi 0, %s238
  $region4: #{lstm_model_forward.3} parent=0 // loop_header_branch
    %18 = sbr.rel (%p16) target = $region8
  $region5: #{lstm_model_forward.3} parent=0 // loop_body
    %s20 = ssub.s32 %s15, 1
    %s21 = ssub.s32 %s15, 2
    %s28 = sadd.s32 1, %s23
    %p29 = scmp.ge.s32.totalorder %s28, 2
    %s30 = scalar_select %p29, 0, %s28
    %s31 = sadd.s32 1, %s22
    %s32 = scalar_select %p29, %s31, %s22
    %p33 = scmp.ge.s32.totalorder %s32, 1
    %s34 = scalar_select %p33, 0, %s32
    %s35 = ssub.s32 %s23, %s30
    %s36 = ssub.s32 %s22, %s34
    %s37 = sor.u32 %s35, %s36
    %p38 = scmp.eq.s32.totalorder %s37, 0
    %s40 = sadd.s32 %s39, 1
    %s41 = scalar_select %p38, %s39, %s40
    %p44 = pneg %p38
    %p45 = scmp.eq.s32.totalorder %s15, 1
    %p46 = por %p44, %p45
    %p47 = scmp.ne.s32.totalorder %s39, %s42
    %p48 = scmp.eq.s32.totalorder %s15, 0
    %p49 = por %p47, %p48
    %p50 = scmp.ne.s32.totalorder %s39, %s42
    %p51 = scmp.eq.s32.totalorder %s20, 1
    %p52 = por %p50, %p51
    %p53 = scmp.ne.s32.totalorder %s42, %s43
    %p54 = scmp.eq.s32.totalorder %s20, 0
    %p55 = por %p53, %p54
    %p56 = scmp.ne.s32.totalorder %s42, %s43
    %p57 = scmp.eq.s32.totalorder %s21, 1
    %p58 = por %p56, %p57
    %p60 = scmp.ne.s32.totalorder %s43, %s59
    %p61 = scmp.eq.s32.totalorder %s21, 0
    %p62 = por %p60, %p61
    %s64 = sadd.s32 %s63, 1
    %p67 = scmp.eq.s32.totalorder %s15, 1
    %p68 = scmp.ne.s32.totalorder %s63, %s65
    %p69 = scmp.eq.s32.totalorder %s15, 0
    %p70 = por %p68, %p69
    %p71 = scmp.ne.s32.totalorder %s63, %s65
    %p72 = scmp.eq.s32.totalorder %s20, 1
    %p73 = por %p71, %p72
    %p74 = scmp.ne.s32.totalorder %s65, %s66
    %p75 = scmp.eq.s32.totalorder %s20, 0
    %p76 = por %p74, %p75
    %p77 = scmp.ne.s32.totalorder %s65, %s66
    %p78 = scmp.eq.s32.totalorder %s21, 1
    %p79 = por %p77, %p78
    %p81 = scmp.ne.s32.totalorder %s66, %s80
    %p82 = scmp.eq.s32.totalorder %s21, 0
    %p83 = por %p81, %p82
    %s85 = sadd.s32 %s84, 1
    %p88 = scmp.eq.s32.totalorder %s15, 1
    %p89 = scmp.ne.s32.totalorder %s84, %s86
    %p90 = scmp.eq.s32.totalorder %s15, 0
    %p91 = por %p89, %p90
    %p92 = scmp.ne.s32.totalorder %s84, %s86
    %p93 = scmp.eq.s32.totalorder %s20, 1
    %p94 = por %p92, %p93
    %p95 = scmp.ne.s32.totalorder %s86, %s87
    %p96 = scmp.eq.s32.totalorder %s20, 0
    %p97 = por %p95, %p96
    %p98 = scmp.ne.s32.totalorder %s86, %s87
    %p99 = scmp.eq.s32.totalorder %s21, 1
    %p100 = por %p98, %p99
    %p102 = scmp.ne.s32.totalorder %s87, %s101
    %p103 = scmp.eq.s32.totalorder %s21, 0
    %p104 = por %p102, %p103
    %s106 = sadd.s32 %s105, 1
    %p109 = scmp.eq.s32.totalorder %s15, 1
    %p110 = scmp.ne.s32.totalorder %s105, %s107
    %p111 = scmp.eq.s32.totalorder %s15, 0
    %p112 = por %p110, %p111
    %p113 = scmp.ne.s32.totalorder %s105, %s107
    %p114 = scmp.eq.s32.totalorder %s20, 1
    %p115 = por %p113, %p114
    %p116 = scmp.ne.s32.totalorder %s107, %s108
    %p117 = scmp.eq.s32.totalorder %s20, 0
    %p118 = por %p116, %p117
    %p119 = scmp.ne.s32.totalorder %s107, %s108
    %p120 = scmp.eq.s32.totalorder %s21, 1
    %p121 = por %p119, %p120
    %p123 = scmp.ne.s32.totalorder %s108, %s122
    %p124 = scmp.eq.s32.totalorder %s21, 0
    %p125 = por %p123, %p124
    %s126 = ssub.s32 %s22, %s34
    %p127 = scmp.eq.s32.totalorder %s126, 0
    %s129 = sadd.s32 %s128, 1
    %s130 = scalar_select %p127, %s128, %s129
    %p133 = pneg %p127
    %p134 = scmp.eq.s32.totalorder %s15, 1
    %p135 = por %p133, %p134
    %p136 = scmp.ne.s32.totalorder %s128, %s131
    %p137 = scmp.eq.s32.totalorder %s15, 0
    %p138 = por %p136, %p137
    %p139 = scmp.ne.s32.totalorder %s128, %s131
    %p140 = scmp.eq.s32.totalorder %s20, 1
    %p141 = por %p139, %p140
    %p142 = scmp.ne.s32.totalorder %s131, %s132
    %p143 = scmp.eq.s32.totalorder %s20, 0
    %p144 = por %p142, %p143
    %p145 = scmp.ne.s32.totalorder %s131, %s132
    %p146 = scmp.eq.s32.totalorder %s21, 1
    %p147 = por %p145, %p146
    %p149 = scmp.ne.s32.totalorder %s132, %s148
    %p150 = scmp.eq.s32.totalorder %s21, 0
    %p151 = por %p149, %p150
    %s152 = ssub.s32 %s22, %s34
    %p153 = scmp.eq.s32.totalorder %s152, 0
    %s155 = sadd.s32 %s154, 1
    %s156 = scalar_select %p153, %s154, %s155
    %p159 = pneg %p153
    %p160 = scmp.eq.s32.totalorder %s15, 1
    %p161 = por %p159, %p160
    %p162 = scmp.ne.s32.totalorder %s154, %s157
    %p163 = scmp.eq.s32.totalorder %s15, 0
    %p164 = por %p162, %p163
    %p165 = scmp.ne.s32.totalorder %s154, %s157
    %p166 = scmp.eq.s32.totalorder %s20, 1
    %p167 = por %p165, %p166
    %p168 = scmp.ne.s32.totalorder %s157, %s158
    %p169 = scmp.eq.s32.totalorder %s20, 0
    %p170 = por %p168, %p169
    %p171 = scmp.ne.s32.totalorder %s157, %s158
    %p172 = scmp.eq.s32.totalorder %s21, 1
    %p173 = por %p171, %p172
    %p175 = scmp.ne.s32.totalorder %s158, %s174
    %p176 = scmp.eq.s32.totalorder %s21, 0
    %p177 = por %p175, %p176
    %s178 = ssub.s32 %s23, %s30
    %s179 = ssub.s32 %s22, %s34
    %s180 = sor.u32 %s178, %s179
    %p181 = scmp.eq.s32.totalorder %s180, 0
    %s183 = sadd.s32 %s182, 1
    %s184 = scalar_select %p181, %s182, %s183
    %p187 = pneg %p181
    %p188 = scmp.eq.s32.totalorder %s15, 1
    %p189 = por %p187, %p188
    %p190 = scmp.ne.s32.totalorder %s182, %s185
    %p191 = scmp.eq.s32.totalorder %s15, 0
    %p192 = por %p190, %p191
    %p193 = scmp.ne.s32.totalorder %s182, %s185
    %p194 = scmp.eq.s32.totalorder %s20, 1
    %p195 = por %p193, %p194
    %p196 = scmp.ne.s32.totalorder %s185, %s186
    %p197 = scmp.eq.s32.totalorder %s20, 0
    %p198 = por %p196, %p197
    %p199 = scmp.ne.s32.totalorder %s185, %s186
    %p200 = scmp.eq.s32.totalorder %s21, 1
    %p201 = por %p199, %p200
    %p203 = scmp.ne.s32.totalorder %s186, %s202
    %p204 = scmp.eq.s32.totalorder %s21, 0
    %p205 = por %p203, %p204
    %s206 = ssub.s32 %s22, %s34
    %p207 = scmp.eq.s32.totalorder %s206, 0
    %s209 = sadd.s32 %s208, 1
    %s210 = scalar_select %p207, %s208, %s209
    %p213 = pneg %p207
    %p214 = scmp.eq.s32.totalorder %s15, 1
    %p215 = por %p213, %p214
    %p216 = scmp.ne.s32.totalorder %s208, %s211
    %p217 = scmp.eq.s32.totalorder %s15, 0
    %p218 = por %p216, %p217
    %p219 = scmp.ne.s32.totalorder %s208, %s211
    %p220 = scmp.eq.s32.totalorder %s20, 1
    %p221 = por %p219, %p220
    %p222 = scmp.ne.s32.totalorder %s211, %s212
    %p223 = scmp.eq.s32.totalorder %s20, 0
    %p224 = por %p222, %p223
    %p225 = scmp.ne.s32.totalorder %s211, %s212
    %p226 = scmp.eq.s32.totalorder %s21, 1
    %p227 = por %p225, %p226
    %p229 = scmp.ne.s32.totalorder %s212, %s228
    %p230 = scmp.eq.s32.totalorder %s21, 0
    %p231 = por %p229, %p230
    %s232 = ssub.s32 %s22, %s34
    %p233 = scmp.eq.s32.totalorder %s232, 0
    %s235 = sadd.s32 %s234, 1
    %s236 = scalar_select %p233, %s234, %s235
    %p239 = pneg %p233
    %p240 = scmp.eq.s32.totalorder %s15, 1
    %p241 = por %p239, %p240
    %p242 = scmp.ne.s32.totalorder %s234, %s237
    %p243 = scmp.eq.s32.totalorder %s15, 0
    %p244 = por %p242, %p243
    %p245 = scmp.ne.s32.totalorder %s234, %s237
    %p246 = scmp.eq.s32.totalorder %s20, 1
    %p247 = por %p245, %p246
    %p248 = scmp.ne.s32.totalorder %s237, %s238
    %p249 = scmp.eq.s32.totalorder %s20, 0
    %p250 = por %p248, %p249
    %p251 = scmp.ne.s32.totalorder %s237, %s238
    %p252 = scmp.eq.s32.totalorder %s21, 1
    %p253 = por %p251, %p252
    %p255 = scmp.ne.s32.totalorder %s238, %s254
    %p256 = scmp.eq.s32.totalorder %s21, 0
    %p257 = por %p255, %p256
    %p258 = scmp.le.s32.totalorder 1, %s15
    %p259 = scmp.lt.s32.totalorder %s15, 3
    %p260 = pnand %p258, %p259
    %p261 = pneg %p260
    // Predicated region
    $region9: #{lstm_model_forward.3} parent=5 // pred_check
      _
    $region10: #{lstm_model_forward.3} parent=5 // pred_check_branch
      %263 = sbr.rel (%p260) target = $region12
    $region11: #{lstm_model_forward.3} parent=5 // pred_region
      %s264 = ssub.s32 %s15, 1
      // Predicated region
      $region13: #{lstm_model_forward.3} parent=11 // pred_check
        %p265 = pneg %p76
      $region14: #{lstm_model_forward.3} parent=11 // pred_check_branch
        %267 = sbr.rel (%p265) target = $region16
      $region15: #{lstm_model_forward.3} parent=11 // pred_region
        _
      $region16: #{lstm_model_forward.3} parent=11 // pred_fallthru
        _
      // Predicated region
      $region17: #{lstm_model_forward.3} parent=11 // pred_check
        %p268 = pneg %p97
      $region18: #{lstm_model_forward.3} parent=11 // pred_check_branch
        %270 = sbr.rel (%p268) target = $region20
      $region19: #{lstm_model_forward.3} parent=11 // pred_region
        _
      $region20: #{lstm_model_forward.3} parent=11 // pred_fallthru
        _
      // Predicated region
      $region21: #{lstm_model_forward.3} parent=11 // pred_check
        %p271 = pneg %p118
      $region22: #{lstm_model_forward.3} parent=11 // pred_check_branch
        %273 = sbr.rel (%p271) target = $region24
      $region23: #{lstm_model_forward.3} parent=11 // pred_region
        _
      $region24: #{lstm_model_forward.3} parent=11 // pred_fallthru
        _
      // Predicated region
      $region25: #{lstm_model_forward.3} parent=11 // pred_check
        %p274 = pneg %p144
      $region26: #{lstm_model_forward.3} parent=11 // pred_check_branch
        %276 = sbr.rel (%p274) target = $region28
      $region27: #{lstm_model_forward.3} parent=11 // pred_region
        %p277 = scmp.lt.s32.totalorder %s24, 0
        %s278 = scalar_select %p277, %s24, 0
        %s279 = smul.addr %s278, 8
        %s280 = scalar_lea.vmem %s4, %s279
      $region28: #{lstm_model_forward.3} parent=11 // pred_fallthru
        _
      // Predicated region
      $region29: #{lstm_model_forward.3} parent=11 // pred_check
        %p281 = pneg %p170
      $region30: #{lstm_model_forward.3} parent=11 // pred_check_branch
        %283 = sbr.rel (%p281) target = $region32
      $region31: #{lstm_model_forward.3} parent=11 // pred_region
        %p284 = scmp.lt.s32.totalorder %s24, 0
        %s285 = scalar_select %p284, %s24, 0
        %s286 = smul.addr %s285, 8
        %s287 = scalar_lea.vmem %s5, %s286
      $region32: #{lstm_model_forward.3} parent=11 // pred_fallthru
        _
    $region12: #{lstm_model_forward.3} parent=5 // pred_fallthru
      _
    %p288 = scmp.lt.s32.totalorder %s15, 2
    // Predicated region
    $region33: #{lstm_model_forward.3} parent=5 // pred_check
      %p289 = pneg %p288
    $region34: #{lstm_model_forward.3} parent=5 // pred_check_branch
      %291 = sbr.rel (%p289) target = $region36
    $region35: #{lstm_model_forward.3} parent=5 // pred_region
      // Predicated region
      $region37: #{lstm_model_forward.3} parent=35 // pred_check
        %p292 = pneg %p49
      $region38: #{lstm_model_forward.3} parent=35 // pred_check_branch
        %294 = sbr.rel (%p292) target = $region40
      $region39: #{lstm_model_forward.3} parent=35 // pred_region
        %s295 = smul.u32 8, %s23
        %p296 = scmp.lt.s32.totalorder %s295, 15
        %s297 = scalar_select %p296, %s295, 15
        %p298 = scmp.lt.s32.totalorder %s22, 0
        %s299 = scalar_select %p298, %s22, 0
        %s300 = sadd.s32 %s299, %s297
        %s301 = smul.addr %s300, 4
        %s302 = scalar_lea.vmem %s0, %s301
        %s303 = smul.u32 8, %s23
      $region40: #{lstm_model_forward.3} parent=35 // pred_fallthru
        _
    $region36: #{lstm_model_forward.3} parent=5 // pred_fallthru
      _
    %p304 = scmp.le.s32.totalorder 1, %s15
    %p305 = scmp.lt.s32.totalorder %s15, 3
    %p306 = pnand %p304, %p305
    %p307 = pneg %p306
    // Predicated region
    $region41: #{lstm_model_forward.3} parent=5 // pred_check
      _
    $region42: #{lstm_model_forward.3} parent=5 // pred_check_branch
      %309 = sbr.rel (%p306) target = $region44
    $region43: #{lstm_model_forward.3} parent=5 // pred_region
      %s310 = ssub.s32 %s15, 1
      %s311 = smul.u32 8, %s25
      %p312 = scmp.lt.s32.totalorder %s311, 15
      %s313 = scalar_select %p312, %s311, 15
      %p314 = scmp.lt.s32.totalorder %s24, 0
      %s315 = scalar_select %p314, %s24, 0
      %s316 = sadd.s32 %s315, %s313
      %s317 = smul.addr %s316, 4
      %s318 = scalar_lea.vmem %s0, %s317
      %p319 = pneg %p55
      %p320 = pneg %p52
      %p321 = pneg %p76
      %p322 = pneg %p73
      %p323 = pneg %p97
      %p324 = pneg %p94
      %p325 = pneg %p118
      %p326 = pneg %p115
      %p327 = scmp.lt.s32.totalorder %s24, 0
      %s328 = scalar_select %p327, %s24, 0
      %s329 = smul.addr %s328, 8
      %s330 = scalar_lea.vmem %s4, %s329
      %p331 = pneg %p144
      %p332 = pneg %p141
      %p333 = scmp.lt.s32.totalorder %s24, 0
      %s334 = scalar_select %p333, %s24, 0
      %s335 = smul.addr %s334, 8
      %s336 = scalar_lea.vmem %s5, %s335
      %p337 = pneg %p170
      %p338 = pneg %p167
      %p339 = pneg %p198
      %p340 = pneg %p195
      %s341 = smul.u32 8, %s25
      %p342 = scmp.lt.s32.totalorder %s341, 15
      %s343 = scalar_select %p342, %s341, 15
      %p344 = scmp.lt.s32.totalorder %s24, 0
      %s345 = scalar_select %p344, %s24, 0
      %s346 = sadd.s32 %s345, %s343
      %s347 = smul.addr %s346, 4
      %s348 = scalar_lea.vmem %s6, %s347
      %p349 = pneg %p224
      %p350 = pneg %p221
      %p351 = scmp.lt.s32.totalorder %s24, 0
      %s352 = scalar_select %p351, %s24, 0
      %s353 = smul.addr %s352, 8
      %s354 = scalar_lea.vmem %s7, %s353
      %p355 = pneg %p250
      %p356 = pneg %p247
      %p357 = scmp.lt.s32.totalorder %s24, 0
      %s358 = scalar_select %p357, %s24, 0
      %s359 = smul.addr %s358, 8
      %s360 = scalar_lea.vmem %s8, %s359
      %s361 = smul.u32 8, %s25
      %p362 = scmp.lt.s32.totalorder %s361, 15
      %s363 = scalar_select %p362, %s361, 15
      %p364 = scmp.lt.s32.totalorder %s24, 0
      %s365 = scalar_select %p364, %s24, 0
      %s366 = sadd.s32 %s365, %s363
      %s367 = smul.addr %s366, 4
      %s368 = scalar_lea.vmem %s0, %s367
      %s369 = smul.u32 8, %s25
      %p370 = scmp.lt.s32.totalorder %s24, 0
      %s371 = scalar_select %p370, %s24, 0
      %s372 = smul.addr %s371, 8
      %s373 = scalar_lea.vmem %s4, %s372
      %p374 = scmp.lt.s32.totalorder %s24, 0
      %s375 = scalar_select %p374, %s24, 0
      %s376 = smul.addr %s375, 8
      %s377 = scalar_lea.vmem %s5, %s376
      %s378 = smul.u32 8, %s25
      %p379 = scmp.lt.s32.totalorder %s378, 15
      %s380 = scalar_select %p379, %s378, 15
      %p381 = scmp.lt.s32.totalorder %s24, 0
      %s382 = scalar_select %p381, %s24, 0
      %s383 = sadd.s32 %s382, %s380
      %s384 = smul.addr %s383, 4
      %s385 = scalar_lea.vmem %s6, %s384
      %s386 = smul.u32 8, %s25
      %p387 = scmp.lt.s32.totalorder %s24, 0
      %s388 = scalar_select %p387, %s24, 0
      %s389 = smul.addr %s388, 8
      %s390 = scalar_lea.vmem %s7, %s389
      %p391 = scmp.lt.s32.totalorder %s24, 0
      %s392 = scalar_select %p391, %s24, 0
      %s393 = smul.addr %s392, 8
      %s394 = scalar_lea.vmem %s8, %s393
      %p396 = scmp.eq.s32.totalorder %s25, 0
      // Predicated region
      $region45: #{lstm_model_forward.3} parent=43 // pred_check
        %p397 = pneg %p396
      $region46: #{lstm_model_forward.3} parent=43 // pred_check_branch
        %399 = sbr.rel (%p397) target = $region48
      $region47: #{lstm_model_forward.3} parent=43 // pred_region
        %v400 = vld [vmem:[%s373] sm:$0xff]
        %401 = vst [vmem:[%s390] sm:$0xff] %v400
        %v402 = vld [vmem:[%s377] sm:$0xff]
        %403 = vst [vmem:[%s394] sm:$0xff] %v402
      $region48: #{lstm_model_forward.3} parent=43 // pred_fallthru
        _
      %v404 = vld [vmem:[%s368] sm:$0xf]
      %v405 = vld [vmem:[%s368 + $0x4] sm:$0xf]
      %v406 = vld [vmem:[%s368 + $0x8] sm:$0xf]
      %v407 = vld [vmem:[%s368 + $0xc] sm:$0xf]
      %v408 = vld [vmem:[%s368 + $0x10] sm:$0xf]
      %v409 = vld [vmem:[%s368 + $0x14] sm:$0xf]
      %v410 = vld [vmem:[%s368 + $0x18] sm:$0xf]
      %v411 = vld [vmem:[%s368 + $0x1c] sm:$0xf]
      %v412 = vunpack.c.l.bf16 %v404
      %v413 = vunpack.c.l.bf16 %v405
      %v414 = vunpack.c.l.bf16 %v406
      %v415 = vunpack.c.l.bf16 %v407
      %v416 = vunpack.c.l.bf16 %v408
      %v417 = vunpack.c.l.bf16 %v409
      %v418 = vunpack.c.l.bf16 %v410
      %v419 = vunpack.c.l.bf16 %v411
      %v420 = vpack.c.bf16 %v413, %v412
      %v421 = vpack.c.bf16 %v415, %v414
      %v422 = vpack.c.bf16 %v417, %v416
      %v423 = vpack.c.bf16 %v419, %v418
      %v424 = vld [vmem:[%s1] sm:$0xff]
      %v425 = vld [vmem:[%s1 + $0x8] sm:$0xff]
      %v426 = vld [vmem:[%s1 + $0x10] sm:$0xff]
      %v427 = vld [vmem:[%s1 + $0x18] sm:$0xff]
      %v428 = vld [vmem:[%s1 + $0x20] sm:$0xff]
      %v429 = vld [vmem:[%s1 + $0x28] sm:$0xff]
      %v430 = vld [vmem:[%s1 + $0x30] sm:$0xff]
      %v431 = vld [vmem:[%s1 + $0x38] sm:$0xff]
      %v432 = vld [vmem:[%s1 + $0x40] sm:$0xff]
      %v433 = vld [vmem:[%s1 + $0x48] sm:$0xff]
      %v434 = vld [vmem:[%s1 + $0x50] sm:$0xff]
      %v435 = vld [vmem:[%s1 + $0x58] sm:$0xff]
      %v436 = vld [vmem:[%s1 + $0x60] sm:$0xff]
      %v437 = vld [vmem:[%s1 + $0x68] sm:$0xff]
      %v438 = vld [vmem:[%s1 + $0x70] sm:$0xff]
      %v439 = vld [vmem:[%s1 + $0x78] sm:$0xff]
      %v440 = vld [vmem:[%s1 + $0x80] sm:$0xff]
      %v441 = vld [vmem:[%s1 + $0x88] sm:$0xff]
      %v442 = vld [vmem:[%s1 + $0x90] sm:$0xff]
      %v443 = vld [vmem:[%s1 + $0x98] sm:$0xff]
      %v444 = vld [vmem:[%s1 + $0xa0] sm:$0xff]
      %v445 = vld [vmem:[%s1 + $0xa8] sm:$0xff]
      %v446 = vld [vmem:[%s1 + $0xb0] sm:$0xff]
      %v447 = vld [vmem:[%s1 + $0xb8] sm:$0xff]
      %v448 = vld [vmem:[%s1 + $0xc0] sm:$0xff]
      %v449 = vld [vmem:[%s1 + $0xc8] sm:$0xff]
      %v450 = vld [vmem:[%s1 + $0xd0] sm:$0xff]
      %v451 = vld [vmem:[%s1 + $0xd8] sm:$0xff]
      %v452 = vld [vmem:[%s1 + $0xe0] sm:$0xff]
      %v453 = vld [vmem:[%s1 + $0xe8] sm:$0xff]
      %v454 = vld [vmem:[%s1 + $0xf0] sm:$0xff]
      %v455 = vld [vmem:[%s1 + $0xf8] sm:$0xff]
      %v456 = vld [vmem:[%s3] sm:$0xf]
      %v458 = vlaneseq
      %v459 = vshrl.u32 %v458, 7
      %v460 = vsub.s32 0, %v459
      %v461 = vrot.slane %v456, %v460
      %v462 = vlaneseq
      %v463 = vshrl.u32 %v462, 7
      %v464 = vsub.s32 1, %v463
      %v465 = vrot.slane %v456, %v464
      %v466 = vlaneseq
      %v467 = vshrl.u32 %v466, 7
      %v468 = vsub.s32 2, %v467
      %v469 = vrot.slane %v456, %v468
      %v470 = vlaneseq
      %v471 = vshrl.u32 %v470, 7
      %v472 = vsub.s32 3, %v471
      %v473 = vrot.slane %v456, %v472
      %v510 = vunpack.c.l.b16 %v424
      %v511 = vunpack.c.h.b16 %v424
      %v512 = vunpack.c.l.b16 %v425
      %v513 = vunpack.c.h.b16 %v425
      %v514 = vunpack.c.l.b16 %v426
      %v515 = vunpack.c.h.b16 %v426
      %v516 = vunpack.c.l.b16 %v427
      %v517 = vunpack.c.h.b16 %v427
      %v518 = vunpack.c.l.b16 %v428
      %v519 = vunpack.c.h.b16 %v428
      %v520 = vunpack.c.l.b16 %v429
      %v521 = vunpack.c.h.b16 %v429
      %v522 = vunpack.c.l.b16 %v430
      %v523 = vunpack.c.h.b16 %v430
      %v524 = vunpack.c.l.b16 %v431
      %v525 = vunpack.c.h.b16 %v431
      %v526 = vunpack.c.l.b16 %v432
      %v527 = vunpack.c.h.b16 %v432
      %v528 = vunpack.c.l.b16 %v433
      %v529 = vunpack.c.h.b16 %v433
      %v530 = vunpack.c.l.b16 %v434
      %v531 = vunpack.c.h.b16 %v434
      %v532 = vunpack.c.l.b16 %v435
      %v533 = vunpack.c.h.b16 %v435
      %v534 = vunpack.c.l.b16 %v436
      %v535 = vunpack.c.h.b16 %v436
      %v536 = vunpack.c.l.b16 %v437
      %v537 = vunpack.c.h.b16 %v437
      %v538 = vunpack.c.l.b16 %v438
      %v539 = vunpack.c.h.b16 %v438
      %v540 = vunpack.c.l.b16 %v439
      %v541 = vunpack.c.h.b16 %v439
      %v542 = vunpack.c.l.b16 %v440
      %v543 = vunpack.c.h.b16 %v440
      %v544 = vunpack.c.l.b16 %v441
      %v545 = vunpack.c.h.b16 %v441
      %v546 = vunpack.c.l.b16 %v442
      %v547 = vunpack.c.h.b16 %v442
      %v548 = vunpack.c.l.b16 %v443
      %v549 = vunpack.c.h.b16 %v443
      %v550 = vunpack.c.l.b16 %v444
      %v551 = vunpack.c.h.b16 %v444
      %v552 = vunpack.c.l.b16 %v445
      %v553 = vunpack.c.h.b16 %v445
      %v554 = vunpack.c.l.b16 %v446
      %v555 = vunpack.c.h.b16 %v446
      %v556 = vunpack.c.l.b16 %v447
      %v557 = vunpack.c.h.b16 %v447
      %v558 = vunpack.c.l.b16 %v448
      %v559 = vunpack.c.h.b16 %v448
      %v560 = vunpack.c.l.b16 %v449
      %v561 = vunpack.c.h.b16 %v449
      %v562 = vunpack.c.l.b16 %v450
      %v563 = vunpack.c.h.b16 %v450
      %v564 = vunpack.c.l.b16 %v451
      %v565 = vunpack.c.h.b16 %v451
      %v566 = vunpack.c.l.b16 %v452
      %v567 = vunpack.c.h.b16 %v452
      %v568 = vunpack.c.l.b16 %v453
      %v569 = vunpack.c.h.b16 %v453
      %v570 = vunpack.c.l.b16 %v454
      %v571 = vunpack.c.h.b16 %v454
      %v572 = vunpack.c.l.b16 %v455
      %v573 = vunpack.c.h.b16 %v455
      %v574 = vpack.c.b16 %v514, %v510
      %v575 = vpack.c.b16 %v515, %v511
      %v576 = vpack.c.b16 %v516, %v512
      %v577 = vpack.c.b16 %v517, %v513
      %v578 = vpack.c.b16 %v522, %v518
      %v579 = vpack.c.b16 %v523, %v519
      %v580 = vpack.c.b16 %v524, %v520
      %v581 = vpack.c.b16 %v525, %v521
      %v582 = vpack.c.b16 %v530, %v526
      %v583 = vpack.c.b16 %v531, %v527
      %v584 = vpack.c.b16 %v532, %v528
      %v585 = vpack.c.b16 %v533, %v529
      %v586 = vpack.c.b16 %v538, %v534
      %v587 = vpack.c.b16 %v539, %v535
      %v588 = vpack.c.b16 %v540, %v536
      %v589 = vpack.c.b16 %v541, %v537
      %v590 = vpack.c.b16 %v546, %v542
      %v591 = vpack.c.b16 %v547, %v543
      %v592 = vpack.c.b16 %v548, %v544
      %v593 = vpack.c.b16 %v549, %v545
      %v594 = vpack.c.b16 %v554, %v550
      %v595 = vpack.c.b16 %v555, %v551
      %v596 = vpack.c.b16 %v556, %v552
      %v597 = vpack.c.b16 %v557, %v553
      %v598 = vpack.c.b16 %v562, %v558
      %v599 = vpack.c.b16 %v563, %v559
      %v600 = vpack.c.b16 %v564, %v560
      %v601 = vpack.c.b16 %v565, %v561
      %v602 = vpack.c.b16 %v570, %v566
      %v603 = vpack.c.b16 %v571, %v567
      %v604 = vpack.c.b16 %v572, %v568
      %v605 = vpack.c.b16 %v573, %v569
      %638 = vmatprep.subr.bf16.mxu0 %v603
      %639 = vmatpush1.bf16.msra.mxu0 %v602
      %640 = vmatprep.subr.bf16.mxu0 %v599
      %641 = vmatpush1.bf16.msra.mxu0 %v598
      %642 = vmatprep.subr.bf16.mxu0 %v595
      %643 = vmatpush1.bf16.msra.mxu0 %v594
      %644 = vmatprep.subr.bf16.mxu0 %v591
      %645 = vmatpush1.bf16.msra.mxu0 %v590
      %646 = vmatprep.subr.bf16.mxu0 %v587
      %647 = vmatpush1.bf16.msra.mxu0 %v586
      %648 = vmatprep.subr.bf16.mxu0 %v583
      %649 = vmatpush1.bf16.msra.mxu0 %v582
      %650 = vmatprep.subr.bf16.mxu0 %v579
      %651 = vmatpush1.bf16.msra.mxu0 %v578
      %652 = vmatprep.subr.bf16.mxu0 %v575
      %653 = vmatpush1.bf16.msra.mxu0 %v574
      %654 = vmatprep.subr.bf16.mxu0 0
      %655 = vmatpush2.bf16.msra.mxu0 0
      %656 = vmatprep.subr.bf16.mxu0 0
      %657 = vmatpush2.bf16.msra.mxu0 0
      %658 = vmatprep.subr.bf16.mxu0 0
      %659 = vmatpush2.bf16.msra.mxu0 0
      %660 = vmatprep.subr.bf16.mxu0 0
      %661 = vmatpush2.bf16.msra.mxu0 0
      %662 = vmatprep.subr.bf16.mxu0 0
      %663 = vmatpush2.bf16.msra.mxu0 0
      %664 = vmatprep.subr.bf16.mxu0 0
      %665 = vmatpush2.bf16.msra.mxu0 0
      %666 = vmatprep.subr.bf16.mxu0 0
      %667 = vmatpush2.bf16.msra.mxu0 0
      %668 = vmatprep.subr.bf16.mxu0 0
      %669 = vmatpush2.bf16.msra.mxu0 0
      %670 = vmatprep.mubr.bf16.mxu0 0
      %671 = vmatmul.mubr.bf16.gmra.mxu0 %v420
      %v672 = vpop.f32.mrf.mxu0
      %v673 = vadd.f32 %v461, %v672
      %v674 = vpop.f32.mrf.mxu0
      %v675 = vadd.f32 %v465, %v674
      %v676 = vpop.f32.mrf.mxu0
      %v677 = vadd.f32 %v461, %v676
      %v678 = vpop.f32.mrf.mxu0
      %v679 = vadd.f32 %v465, %v678
      %680 = vmatprep.mubr.bf16.mxu0 0
      %681 = vmatmul.mubr.bf16.gmra.mxu0 %v421
      %v682 = vpop.f32.mrf.mxu0
      %v683 = vadd.f32 %v461, %v682
      %v684 = vpop.f32.mrf.mxu0
      %v685 = vadd.f32 %v465, %v684
      %v686 = vpop.f32.mrf.mxu0
      %v687 = vadd.f32 %v461, %v686
      %v688 = vpop.f32.mrf.mxu0
      %v689 = vadd.f32 %v465, %v688
      %690 = vmatprep.mubr.bf16.mxu0 0
      %691 = vmatmul.mubr.bf16.gmra.mxu0 %v422
      %v692 = vpop.f32.mrf.mxu0
      %v693 = vadd.f32 %v461, %v692
      %v694 = vpop.f32.mrf.mxu0
      %v695 = vadd.f32 %v465, %v694
      %v696 = vpop.f32.mrf.mxu0
      %v697 = vadd.f32 %v461, %v696
      %v698 = vpop.f32.mrf.mxu0
      %v699 = vadd.f32 %v465, %v698
      %700 = vmatprep.mubr.bf16.mxu0 0
      %701 = vmatmul.mubr.bf16.gmra.mxu0 %v423
      %v702 = vpop.f32.mrf.mxu0
      %v703 = vadd.f32 %v461, %v702
      %v704 = vpop.f32.mrf.mxu0
      %v705 = vadd.f32 %v465, %v704
      %v706 = vpop.f32.mrf.mxu0
      %v707 = vadd.f32 %v461, %v706
      %v708 = vpop.f32.mrf.mxu0
      %v709 = vadd.f32 %v465, %v708
      %710 = vdwg.mxu0
      %711 = vmatprep.subr.bf16.mxu0 %v605
      %712 = vmatpush1.bf16.msra.mxu0 %v604
      %713 = vmatprep.subr.bf16.mxu0 %v601
      %714 = vmatpush1.bf16.msra.mxu0 %v600
      %715 = vmatprep.subr.bf16.mxu0 %v597
      %716 = vmatpush1.bf16.msra.mxu0 %v596
      %717 = vmatprep.subr.bf16.mxu0 %v593
      %718 = vmatpush1.bf16.msra.mxu0 %v592
      %719 = vmatprep.subr.bf16.mxu0 %v589
      %720 = vmatpush1.bf16.msra.mxu0 %v588
      %721 = vmatprep.subr.bf16.mxu0 %v585
      %722 = vmatpush1.bf16.msra.mxu0 %v584
      %723 = vmatprep.subr.bf16.mxu0 %v581
      %724 = vmatpush1.bf16.msra.mxu0 %v580
      %725 = vmatprep.subr.bf16.mxu0 %v577
      %726 = vmatpush1.bf16.msra.mxu0 %v576
      %727 = vmatprep.subr.bf16.mxu0 0
      %728 = vmatpush2.bf16.msra.mxu0 0
      %729 = vmatprep.subr.bf16.mxu0 0
      %730 = vmatpush2.bf16.msra.mxu0 0
      %731 = vmatprep.subr.bf16.mxu0 0
      %732 = vmatpush2.bf16.msra.mxu0 0
      %733 = vmatprep.subr.bf16.mxu0 0
      %734 = vmatpush2.bf16.msra.mxu0 0
      %735 = vmatprep.subr.bf16.mxu0 0
      %736 = vmatpush2.bf16.msra.mxu0 0
      %737 = vmatprep.subr.bf16.mxu0 0
      %738 = vmatpush2.bf16.msra.mxu0 0
      %739 = vmatprep.subr.bf16.mxu0 0
      %740 = vmatpush2.bf16.msra.mxu0 0
      %741 = vmatprep.subr.bf16.mxu0 0
      %742 = vmatpush2.bf16.msra.mxu0 0
      %743 = vmatprep.mubr.bf16.mxu0 0
      %744 = vmatmul.mubr.bf16.gmra.mxu0 %v420
      %v745 = vpop.f32.mrf.mxu0
      %v746 = vadd.f32 %v469, %v745
      %v747 = vpop.f32.mrf.mxu0
      %v748 = vadd.f32 %v473, %v747
      %v749 = vpop.f32.mrf.mxu0
      %v750 = vadd.f32 %v469, %v749
      %v751 = vpop.f32.mrf.mxu0
      %v752 = vadd.f32 %v473, %v751
      %753 = vmatprep.mubr.bf16.mxu0 0
      %754 = vmatmul.mubr.bf16.gmra.mxu0 %v421
      %v755 = vpop.f32.mrf.mxu0
      %v756 = vadd.f32 %v469, %v755
      %v757 = vpop.f32.mrf.mxu0
      %v758 = vadd.f32 %v473, %v757
      %v759 = vpop.f32.mrf.mxu0
      %v760 = vadd.f32 %v469, %v759
      %v761 = vpop.f32.mrf.mxu0
      %v762 = vadd.f32 %v473, %v761
      %763 = vmatprep.mubr.bf16.mxu0 0
      %764 = vmatmul.mubr.bf16.gmra.mxu0 %v422
      %v765 = vpop.f32.mrf.mxu0
      %v766 = vadd.f32 %v469, %v765
      %v767 = vpop.f32.mrf.mxu0
      %v768 = vadd.f32 %v473, %v767
      %v769 = vpop.f32.mrf.mxu0
      %v770 = vadd.f32 %v469, %v769
      %v771 = vpop.f32.mrf.mxu0
      %v772 = vadd.f32 %v473, %v771
      %773 = vmatprep.mubr.bf16.mxu0 0
      %774 = vmatmul.mubr.bf16.gmra.mxu0 %v423
      %v775 = vpop.f32.mrf.mxu0
      %v776 = vadd.f32 %v469, %v775
      %v777 = vpop.f32.mrf.mxu0
      %v778 = vadd.f32 %v473, %v777
      %v779 = vpop.f32.mrf.mxu0
      %v780 = vadd.f32 %v469, %v779
      %v781 = vpop.f32.mrf.mxu0
      %v782 = vadd.f32 %v473, %v781
      %783 = vdwg.mxu0
      %784 = vst [vmem:[#allocation2] sm:$0xff] %v673
      %785 = vst [vmem:[#allocation2 + $0x8] sm:$0xff] %v675
      %786 = vst [vmem:[#allocation2 + $0x10] sm:$0xff] %v746
      %787 = vst [vmem:[#allocation2 + $0x18] sm:$0xff] %v748
      %788 = vst [vmem:[#allocation2 + $0x20] sm:$0xff] %v677
      %789 = vst [vmem:[#allocation2 + $0x28] sm:$0xff] %v679
      %790 = vst [vmem:[#allocation2 + $0x30] sm:$0xff] %v750
      %791 = vst [vmem:[#allocation2 + $0x38] sm:$0xff] %v752
      %792 = vst [vmem:[#allocation2 + $0x40] sm:$0xff] %v683
      %793 = vst [vmem:[#allocation2 + $0x48] sm:$0xff] %v685
      %794 = vst [vmem:[#allocation2 + $0x50] sm:$0xff] %v756
      %795 = vst [vmem:[#allocation2 + $0x58] sm:$0xff] %v758
      %796 = vst [vmem:[#allocation2 + $0x60] sm:$0xff] %v687
      %797 = vst [vmem:[#allocation2 + $0x68] sm:$0xff] %v689
      %798 = vst [vmem:[#allocation2 + $0x70] sm:$0xff] %v760
      %799 = vst [vmem:[#allocation2 + $0x78] sm:$0xff] %v762
      %800 = vst [vmem:[#allocation2 + $0x80] sm:$0xff] %v693
      %801 = vst [vmem:[#allocation2 + $0x88] sm:$0xff] %v695
      %802 = vst [vmem:[#allocation2 + $0x90] sm:$0xff] %v766
      %803 = vst [vmem:[#allocation2 + $0x98] sm:$0xff] %v768
      %804 = vst [vmem:[#allocation2 + $0xa0] sm:$0xff] %v697
      %805 = vst [vmem:[#allocation2 + $0xa8] sm:$0xff] %v699
      %806 = vst [vmem:[#allocation2 + $0xb0] sm:$0xff] %v770
      %807 = vst [vmem:[#allocation2 + $0xb8] sm:$0xff] %v772
      %808 = vst [vmem:[#allocation2 + $0xc0] sm:$0xff] %v703
      %809 = vst [vmem:[#allocation2 + $0xc8] sm:$0xff] %v705
      %810 = vst [vmem:[#allocation2 + $0xd0] sm:$0xff] %v776
      %811 = vst [vmem:[#allocation2 + $0xd8] sm:$0xff] %v778
      %812 = vst [vmem:[#allocation2 + $0xe0] sm:$0xff] %v707
      %813 = vst [vmem:[#allocation2 + $0xe8] sm:$0xff] %v709
      %814 = vst [vmem:[#allocation2 + $0xf0] sm:$0xff] %v780
      %815 = vst [vmem:[#allocation2 + $0xf8] sm:$0xff] %v782
      %v816 = vld [vmem:[%s2] sm:$0xff]
      %v817 = vld [vmem:[%s2 + $0x8] sm:$0xff]
      %v818 = vld [vmem:[%s2 + $0x10] sm:$0xff]
      %v819 = vld [vmem:[%s2 + $0x18] sm:$0xff]
      %v820 = vld [vmem:[%s2 + $0x20] sm:$0xff]
      %v821 = vld [vmem:[%s2 + $0x28] sm:$0xff]
      %v822 = vld [vmem:[%s2 + $0x30] sm:$0xff]
      %v823 = vld [vmem:[%s2 + $0x38] sm:$0xff]
      %v824 = vld [vmem:[%s2 + $0x40] sm:$0xff]
      %v825 = vld [vmem:[%s2 + $0x48] sm:$0xff]
      %v826 = vld [vmem:[%s2 + $0x50] sm:$0xff]
      %v827 = vld [vmem:[%s2 + $0x58] sm:$0xff]
      %v828 = vld [vmem:[%s2 + $0x60] sm:$0xff]
      %v829 = vld [vmem:[%s2 + $0x68] sm:$0xff]
      %v830 = vld [vmem:[%s2 + $0x70] sm:$0xff]
      %v831 = vld [vmem:[%s2 + $0x78] sm:$0xff]
      %v832 = vld [vmem:[%s2 + $0x80] sm:$0xff]
      %v833 = vld [vmem:[%s2 + $0x88] sm:$0xff]
      %v834 = vld [vmem:[%s2 + $0x90] sm:$0xff]
      %v835 = vld [vmem:[%s2 + $0x98] sm:$0xff]
      %v836 = vld [vmem:[%s2 + $0xa0] sm:$0xff]
      %v837 = vld [vmem:[%s2 + $0xa8] sm:$0xff]
      %v838 = vld [vmem:[%s2 + $0xb0] sm:$0xff]
      %v839 = vld [vmem:[%s2 + $0xb8] sm:$0xff]
      %v840 = vld [vmem:[%s2 + $0xc0] sm:$0xff]
      %v841 = vld [vmem:[%s2 + $0xc8] sm:$0xff]
      %v842 = vld [vmem:[%s2 + $0xd0] sm:$0xff]
      %v843 = vld [vmem:[%s2 + $0xd8] sm:$0xff]
      %v844 = vld [vmem:[%s2 + $0xe0] sm:$0xff]
      %v845 = vld [vmem:[%s2 + $0xe8] sm:$0xff]
      %v846 = vld [vmem:[%s2 + $0xf0] sm:$0xff]
      %v847 = vld [vmem:[%s2 + $0xf8] sm:$0xff]
      %v848 = vld [vmem:[%s390] sm:$0xff]
      %v849 = vld [vmem:[%s394] sm:$0xff]
      %v850 = vld [vmem:[#allocation2] sm:$0xff]
      %v851 = vld [vmem:[#allocation2 + $0x8] sm:$0xff]
      %v852 = vld [vmem:[#allocation2 + $0x10] sm:$0xff]
      %v853 = vld [vmem:[#allocation2 + $0x18] sm:$0xff]
      %v854 = vpack.c.bf16 %v848, %v848
      %v887 = vunpack.c.l.b16 %v816
      %v888 = vunpack.c.h.b16 %v816
      %v889 = vunpack.c.l.b16 %v817
      %v890 = vunpack.c.h.b16 %v817
      %v891 = vunpack.c.l.b16 %v818
      %v892 = vunpack.c.h.b16 %v818
      %v893 = vunpack.c.l.b16 %v819
      %v894 = vunpack.c.h.b16 %v819
      %v895 = vunpack.c.l.b16 %v820
      %v896 = vunpack.c.h.b16 %v820
      %v897 = vunpack.c.l.b16 %v821
      %v898 = vunpack.c.h.b16 %v821
      %v899 = vunpack.c.l.b16 %v822
      %v900 = vunpack.c.h.b16 %v822
      %v901 = vunpack.c.l.b16 %v823
      %v902 = vunpack.c.h.b16 %v823
      %v903 = vunpack.c.l.b16 %v824
      %v904 = vunpack.c.h.b16 %v824
      %v905 = vunpack.c.l.b16 %v825
      %v906 = vunpack.c.h.b16 %v825
      %v907 = vunpack.c.l.b16 %v826
      %v908 = vunpack.c.h.b16 %v826
      %v909 = vunpack.c.l.b16 %v827
      %v910 = vunpack.c.h.b16 %v827
      %v911 = vunpack.c.l.b16 %v828
      %v912 = vunpack.c.h.b16 %v828
      %v913 = vunpack.c.l.b16 %v829
      %v914 = vunpack.c.h.b16 %v829
      %v915 = vunpack.c.l.b16 %v830
      %v916 = vunpack.c.h.b16 %v830
      %v917 = vunpack.c.l.b16 %v831
      %v918 = vunpack.c.h.b16 %v831
      %v919 = vunpack.c.l.b16 %v832
      %v920 = vunpack.c.h.b16 %v832
      %v921 = vunpack.c.l.b16 %v833
      %v922 = vunpack.c.h.b16 %v833
      %v923 = vunpack.c.l.b16 %v834
      %v924 = vunpack.c.h.b16 %v834
      %v925 = vunpack.c.l.b16 %v835
      %v926 = vunpack.c.h.b16 %v835
      %v927 = vunpack.c.l.b16 %v836
      %v928 = vunpack.c.h.b16 %v836
      %v929 = vunpack.c.l.b16 %v837
      %v930 = vunpack.c.h.b16 %v837
      %v931 = vunpack.c.l.b16 %v838
      %v932 = vunpack.c.h.b16 %v838
      %v933 = vunpack.c.l.b16 %v839
      %v934 = vunpack.c.h.b16 %v839
      %v935 = vunpack.c.l.b16 %v840
      %v936 = vunpack.c.h.b16 %v840
      %v937 = vunpack.c.l.b16 %v841
      %v938 = vunpack.c.h.b16 %v841
      %v939 = vunpack.c.l.b16 %v842
      %v940 = vunpack.c.h.b16 %v842
      %v941 = vunpack.c.l.b16 %v843
      %v942 = vunpack.c.h.b16 %v843
      %v943 = vunpack.c.l.b16 %v844
      %v944 = vunpack.c.h.b16 %v844
      %v945 = vunpack.c.l.b16 %v845
      %v946 = vunpack.c.h.b16 %v845
      %v947 = vunpack.c.l.b16 %v846
      %v948 = vunpack.c.h.b16 %v846
      %v949 = vunpack.c.l.b16 %v847
      %v950 = vunpack.c.h.b16 %v847
      %v951 = vpack.c.b16 %v891, %v887
      %v952 = vpack.c.b16 %v892, %v888
      %v953 = vpack.c.b16 %v893, %v889
      %v954 = vpack.c.b16 %v894, %v890
      %v955 = vpack.c.b16 %v899, %v895
      %v956 = vpack.c.b16 %v900, %v896
      %v957 = vpack.c.b16 %v901, %v897
      %v958 = vpack.c.b16 %v902, %v898
      %v959 = vpack.c.b16 %v907, %v903
      %v960 = vpack.c.b16 %v908, %v904
      %v961 = vpack.c.b16 %v909, %v905
      %v962 = vpack.c.b16 %v910, %v906
      %v963 = vpack.c.b16 %v915, %v911
      %v964 = vpack.c.b16 %v916, %v912
      %v965 = vpack.c.b16 %v917, %v913
      %v966 = vpack.c.b16 %v918, %v914
      %v967 = vpack.c.b16 %v923, %v919
      %v968 = vpack.c.b16 %v924, %v920
      %v969 = vpack.c.b16 %v925, %v921
      %v970 = vpack.c.b16 %v926, %v922
      %v971 = vpack.c.b16 %v931, %v927
      %v972 = vpack.c.b16 %v932, %v928
      %v973 = vpack.c.b16 %v933, %v929
      %v974 = vpack.c.b16 %v934, %v930
      %v975 = vpack.c.b16 %v939, %v935
      %v976 = vpack.c.b16 %v940, %v936
      %v977 = vpack.c.b16 %v941, %v937
      %v978 = vpack.c.b16 %v942, %v938
      %v979 = vpack.c.b16 %v947, %v943
      %v980 = vpack.c.b16 %v948, %v944
      %v981 = vpack.c.b16 %v949, %v945
      %v982 = vpack.c.b16 %v950, %v946
      %1015 = vmatprep.subr.bf16.mxu0 %v980
      %1016 = vmatpush1.bf16.msra.mxu0 %v979
      %1017 = vmatprep.subr.bf16.mxu0 %v976
      %1018 = vmatpush1.bf16.msra.mxu0 %v975
      %1019 = vmatprep.subr.bf16.mxu0 %v972
      %1020 = vmatpush1.bf16.msra.mxu0 %v971
      %1021 = vmatprep.subr.bf16.mxu0 %v968
      %1022 = vmatpush1.bf16.msra.mxu0 %v967
      %1023 = vmatprep.subr.bf16.mxu0 %v964
      %1024 = vmatpush1.bf16.msra.mxu0 %v963
      %1025 = vmatprep.subr.bf16.mxu0 %v960
      %1026 = vmatpush1.bf16.msra.mxu0 %v959
      %1027 = vmatprep.subr.bf16.mxu0 %v956
      %1028 = vmatpush1.bf16.msra.mxu0 %v955
      %1029 = vmatprep.subr.bf16.mxu0 %v952
      %1030 = vmatpush1.bf16.msra.mxu0 %v951
      %1031 = vmatprep.subr.bf16.mxu0 0
      %1032 = vmatpush2.bf16.msra.mxu0 0
      %1033 = vmatprep.subr.bf16.mxu0 0
      %1034 = vmatpush2.bf16.msra.mxu0 0
      %1035 = vmatprep.subr.bf16.mxu0 0
      %1036 = vmatpush2.bf16.msra.mxu0 0
      %1037 = vmatprep.subr.bf16.mxu0 0
      %1038 = vmatpush2.bf16.msra.mxu0 0
      %1039 = vmatprep.subr.bf16.mxu0 0
      %1040 = vmatpush2.bf16.msra.mxu0 0
      %1041 = vmatprep.subr.bf16.mxu0 0
      %1042 = vmatpush2.bf16.msra.mxu0 0
      %1043 = vmatprep.subr.bf16.mxu0 0
      %1044 = vmatpush2.bf16.msra.mxu0 0
      %1045 = vmatprep.subr.bf16.mxu0 0
      %1046 = vmatpush2.bf16.msra.mxu0 0
      %1047 = vmatprep.mubr.bf16.mxu0 0
      %1048 = vmatmul.mubr.bf16.gmra.mxu0 %v854
      %v1049 = vpop.f32.mrf.mxu0
      %v1050 = vadd.f32 0.0, %v1049
      %v1051 = vpop.f32.mrf.mxu0
      %v1052 = vadd.f32 0.0, %v1051
      %v1053 = vpop.f32.mrf.mxu0
      %v1054 = vpop.f32.mrf.mxu0
      %1055 = vdwg.mxu0
      %1056 = vmatprep.subr.bf16.mxu0 %v982
      %1057 = vmatpush1.bf16.msra.mxu0 %v981
      %1058 = vmatprep.subr.bf16.mxu0 %v978
      %1059 = vmatpush1.bf16.msra.mxu0 %v977
      %1060 = vmatprep.subr.bf16.mxu0 %v974
      %1061 = vmatpush1.bf16.msra.mxu0 %v973
      %1062 = vmatprep.subr.bf16.mxu0 %v970
      %1063 = vmatpush1.bf16.msra.mxu0 %v969
      %1064 = vmatprep.subr.bf16.mxu0 %v966
      %1065 = vmatpush1.bf16.msra.mxu0 %v965
      %1066 = vmatprep.subr.bf16.mxu0 %v962
      %1067 = vmatpush1.bf16.msra.mxu0 %v961
      %1068 = vmatprep.subr.bf16.mxu0 %v958
      %1069 = vmatpush1.bf16.msra.mxu0 %v957
      %1070 = vmatprep.subr.bf16.mxu0 %v954
      %1071 = vmatpush1.bf16.msra.mxu0 %v953
      %1072 = vmatprep.subr.bf16.mxu0 0
      %1073 = vmatpush2.bf16.msra.mxu0 0
      %1074 = vmatprep.subr.bf16.mxu0 0
      %1075 = vmatpush2.bf16.msra.mxu0 0
      %1076 = vmatprep.subr.bf16.mxu0 0
      %1077 = vmatpush2.bf16.msra.mxu0 0
      %1078 = vmatprep.subr.bf16.mxu0 0
      %1079 = vmatpush2.bf16.msra.mxu0 0
      %1080 = vmatprep.subr.bf16.mxu0 0
      %1081 = vmatpush2.bf16.msra.mxu0 0
      %1082 = vmatprep.subr.bf16.mxu0 0
      %1083 = vmatpush2.bf16.msra.mxu0 0
      %1084 = vmatprep.subr.bf16.mxu0 0
      %1085 = vmatpush2.bf16.msra.mxu0 0
      %1086 = vmatprep.subr.bf16.mxu0 0
      %1087 = vmatpush2.bf16.msra.mxu0 0
      %1088 = vmatprep.mubr.bf16.mxu0 0
      %1089 = vmatmul.mubr.bf16.gmra.mxu0 %v854
      %v1090 = vpop.f32.mrf.mxu0
      %v1091 = vadd.f32 0.0, %v1090
      %v1092 = vpop.f32.mrf.mxu0
      %v1093 = vadd.f32 0.0, %v1092
      %v1094 = vpop.f32.mrf.mxu0
      %v1095 = vpop.f32.mrf.mxu0
      %1096 = vdwg.mxu0
      %v1097 = vadd.f32 %v850, %v1050
      %v1098 = vadd.f32 %v851, %v1052
      %v1099 = vadd.f32 %v852, %v1091
      %v1100 = vadd.f32 %v853, %v1093
      %v1101 = vxor.u32 %v1097, 2147483648
      %v1102 = vmul.f32 %v1101, 1.442695
      %v1103 = vpow.pop %v1102
      %v1104 = vadd.f32 %v1103, 1.0
      %v1105 = vrcp.pop %v1104
      %v1106 = vmul.f32 1.0, %v1105
      %v1107 = vxor.u32 %v1098, 2147483648
      %v1108 = vmul.f32 %v1107, 1.442695
      %v1109 = vpow.pop %v1108
      %v1110 = vadd.f32 %v1109, 1.0
      %v1111 = vrcp.pop %v1110
      %v1112 = vmul.f32 1.0, %v1111
      %v1113 = vtanh.pop %v1099
      %v1114 = vxor.u32 %v1100, 2147483648
      %v1115 = vmul.f32 %v1114, 1.442695
      %v1116 = vpow.pop %v1115
      %v1117 = vadd.f32 %v1116, 1.0
      %v1118 = vrcp.pop %v1117
      %v1119 = vmul.f32 1.0, %v1118
      %v1120 = vmul.f32 %v1112, %v849
      %v1121 = vmul.f32 %v1106, %v1113
      %v1122 = vadd.f32 %v1120, %v1121
      %v1123 = vtanh.pop %v1122
      %v1124 = vmul.f32 %v1119, %v1123
      %1125 = vst [vmem:[#allocation3] sm:$0xff] %v1124
      %s1126 = scalar_lea.vmem [#allocation2], 32
      %v1127 = vld [vmem:[%s1126] sm:$0xff]
      %v1128 = vld [vmem:[%s1126 + $0x8] sm:$0xff]
      %v1129 = vld [vmem:[%s1126 + $0x10] sm:$0xff]
      %v1130 = vld [vmem:[%s1126 + $0x18] sm:$0xff]
      %v1131 = vpack.c.bf16 %v1124, %v1124
      %1132 = vmatprep.subr.bf16.mxu0 %v980
      %1133 = vmatpush1.bf16.msra.mxu0 %v979
      %1134 = vmatprep.subr.bf16.mxu0 %v976
      %1135 = vmatpush1.bf16.msra.mxu0 %v975
      %1136 = vmatprep.subr.bf16.mxu0 %v972
      %1137 = vmatpush1.bf16.msra.mxu0 %v971
      %1138 = vmatprep.subr.bf16.mxu0 %v968
      %1139 = vmatpush1.bf16.msra.mxu0 %v967
      %1140 = vmatprep.subr.bf16.mxu0 %v964
      %1141 = vmatpush1.bf16.msra.mxu0 %v963
      %1142 = vmatprep.subr.bf16.mxu0 %v960
      %1143 = vmatpush1.bf16.msra.mxu0 %v959
      %1144 = vmatprep.subr.bf16.mxu0 %v956
      %1145 = vmatpush1.bf16.msra.mxu0 %v955
      %1146 = vmatprep.subr.bf16.mxu0 %v952
      %1147 = vmatpush1.bf16.msra.mxu0 %v951
      %1148 = vmatprep.subr.bf16.mxu0 0
      %1149 = vmatpush2.bf16.msra.mxu0 0
      %1150 = vmatprep.subr.bf16.mxu0 0
      %1151 = vmatpush2.bf16.msra.mxu0 0
      %1152 = vmatprep.subr.bf16.mxu0 0
      %1153 = vmatpush2.bf16.msra.mxu0 0
      %1154 = vmatprep.subr.bf16.mxu0 0
      %1155 = vmatpush2.bf16.msra.mxu0 0
      %1156 = vmatprep.subr.bf16.mxu0 0
      %1157 = vmatpush2.bf16.msra.mxu0 0
      %1158 = vmatprep.subr.bf16.mxu0 0
      %1159 = vmatpush2.bf16.msra.mxu0 0
      %1160 = vmatprep.subr.bf16.mxu0 0
      %1161 = vmatpush2.bf16.msra.mxu0 0
      %1162 = vmatprep.subr.bf16.mxu0 0
      %1163 = vmatpush2.bf16.msra.mxu0 0
      %1164 = vmatprep.mubr.bf16.mxu0 0
      %1165 = vmatmul.mubr.bf16.gmra.mxu0 %v1131
      %v1166 = vpop.f32.mrf.mxu0
      %v1167 = vadd.f32 0.0, %v1166
      %v1168 = vpop.f32.mrf.mxu0
      %v1169 = vadd.f32 0.0, %v1168
      %v1170 = vpop.f32.mrf.mxu0
      %v1171 = vpop.f32.mrf.mxu0
      %1172 = vdwg.mxu0
      %1173 = vmatprep.subr.bf16.mxu0 %v982
      %1174 = vmatpush1.bf16.msra.mxu0 %v981
      %1175 = vmatprep.subr.bf16.mxu0 %v978
      %1176 = vmatpush1.bf16.msra.mxu0 %v977
      %1177 = vmatprep.subr.bf16.mxu0 %v974
      %1178 = vmatpush1.bf16.msra.mxu0 %v973
      %1179 = vmatprep.subr.bf16.mxu0 %v970
      %1180 = vmatpush1.bf16.msra.mxu0 %v969
      %1181 = vmatprep.subr.bf16.mxu0 %v966
      %1182 = vmatpush1.bf16.msra.mxu0 %v965
      %1183 = vmatprep.subr.bf16.mxu0 %v962
      %1184 = vmatpush1.bf16.msra.mxu0 %v961
      %1185 = vmatprep.subr.bf16.mxu0 %v958
      %1186 = vmatpush1.bf16.msra.mxu0 %v957
      %1187 = vmatprep.subr.bf16.mxu0 %v954
      %1188 = vmatpush1.bf16.msra.mxu0 %v953
      %1189 = vmatprep.subr.bf16.mxu0 0
      %1190 = vmatpush2.bf16.msra.mxu0 0
      %1191 = vmatprep.subr.bf16.mxu0 0
      %1192 = vmatpush2.bf16.msra.mxu0 0
      %1193 = vmatprep.subr.bf16.mxu0 0
      %1194 = vmatpush2.bf16.msra.mxu0 0
      %1195 = vmatprep.subr.bf16.mxu0 0
      %1196 = vmatpush2.bf16.msra.mxu0 0
      %1197 = vmatprep.subr.bf16.mxu0 0
      %1198 = vmatpush2.bf16.msra.mxu0 0
      %1199 = vmatprep.subr.bf16.mxu0 0
      %1200 = vmatpush2.bf16.msra.mxu0 0
      %1201 = vmatprep.subr.bf16.mxu0 0
      %1202 = vmatpush2.bf16.msra.mxu0 0
      %1203 = vmatprep.subr.bf16.mxu0 0
      %1204 = vmatpush2.bf16.msra.mxu0 0
      %1205 = vmatprep.mubr.bf16.mxu0 0
      %1206 = vmatmul.mubr.bf16.gmra.mxu0 %v1131
      %v1207 = vpop.f32.mrf.mxu0
      %v1208 = vadd.f32 0.0, %v1207
      %v1209 = vpop.f32.mrf.mxu0
      %v1210 = vadd.f32 0.0, %v1209
      %v1211 = vpop.f32.mrf.mxu0
      %v1212 = vpop.f32.mrf.mxu0
      %1213 = vdwg.mxu0
      %v1214 = vadd.f32 %v1127, %v1167
      %v1215 = vadd.f32 %v1128, %v1169
      %v1216 = vadd.f32 %v1129, %v1208
      %v1217 = vadd.f32 %v1130, %v1210
      %v1218 = vxor.u32 %v1214, 2147483648
      %v1219 = vmul.f32 %v1218, 1.442695
      %v1220 = vpow.pop %v1219
      %v1221 = vadd.f32 %v1220, 1.0
      %v1222 = vrcp.pop %v1221
      %v1223 = vmul.f32 1.0, %v1222
      %v1224 = vxor.u32 %v1215, 2147483648
      %v1225 = vmul.f32 %v1224, 1.442695
      %v1226 = vpow.pop %v1225
      %v1227 = vadd.f32 %v1226, 1.0
      %v1228 = vrcp.pop %v1227
      %v1229 = vmul.f32 1.0, %v1228
      %v1230 = vtanh.pop %v1216
      %v1231 = vxor.u32 %v1217, 2147483648
      %v1232 = vmul.f32 %v1231, 1.442695
      %v1233 = vpow.pop %v1232
      %v1234 = vadd.f32 %v1233, 1.0
      %v1235 = vrcp.pop %v1234
      %v1236 = vmul.f32 1.0, %v1235
      %v1237 = vmul.f32 %v1229, %v1122
      %v1238 = vmul.f32 %v1223, %v1230
      %v1239 = vadd.f32 %v1237, %v1238
      %v1240 = vtanh.pop %v1239
      %v1241 = vmul.f32 %v1236, %v1240
      %s1242 = scalar_lea.vmem [#allocation3], 8
      %1243 = vst [vmem:[%s1242] sm:$0xff] %v1241
      %s1244 = scalar_lea.vmem [#allocation2], 64
      %v1245 = vld [vmem:[%s1244] sm:$0xff]
      %v1246 = vld [vmem:[%s1244 + $0x8] sm:$0xff]
      %v1247 = vld [vmem:[%s1244 + $0x10] sm:$0xff]
      %v1248 = vld [vmem:[%s1244 + $0x18] sm:$0xff]
      %v1249 = vpack.c.bf16 %v1241, %v1241
      %1250 = vmatprep.subr.bf16.mxu0 %v980
      %1251 = vmatpush1.bf16.msra.mxu0 %v979
      %1252 = vmatprep.subr.bf16.mxu0 %v976
      %1253 = vmatpush1.bf16.msra.mxu0 %v975
      %1254 = vmatprep.subr.bf16.mxu0 %v972
      %1255 = vmatpush1.bf16.msra.mxu0 %v971
      %1256 = vmatprep.subr.bf16.mxu0 %v968
      %1257 = vmatpush1.bf16.msra.mxu0 %v967
      %1258 = vmatprep.subr.bf16.mxu0 %v964
      %1259 = vmatpush1.bf16.msra.mxu0 %v963
      %1260 = vmatprep.subr.bf16.mxu0 %v960
      %1261 = vmatpush1.bf16.msra.mxu0 %v959
      %1262 = vmatprep.subr.bf16.mxu0 %v956
      %1263 = vmatpush1.bf16.msra.mxu0 %v955
      %1264 = vmatprep.subr.bf16.mxu0 %v952
      %1265 = vmatpush1.bf16.msra.mxu0 %v951
      %1266 = vmatprep.subr.bf16.mxu0 0
      %1267 = vmatpush2.bf16.msra.mxu0 0
      %1268 = vmatprep.subr.bf16.mxu0 0
      %1269 = vmatpush2.bf16.msra.mxu0 0
      %1270 = vmatprep.subr.bf16.mxu0 0
      %1271 = vmatpush2.bf16.msra.mxu0 0
      %1272 = vmatprep.subr.bf16.mxu0 0
      %1273 = vmatpush2.bf16.msra.mxu0 0
      %1274 = vmatprep.subr.bf16.mxu0 0
      %1275 = vmatpush2.bf16.msra.mxu0 0
      %1276 = vmatprep.subr.bf16.mxu0 0
      %1277 = vmatpush2.bf16.msra.mxu0 0
      %1278 = vmatprep.subr.bf16.mxu0 0
      %1279 = vmatpush2.bf16.msra.mxu0 0
      %1280 = vmatprep.subr.bf16.mxu0 0
      %1281 = vmatpush2.bf16.msra.mxu0 0
      %1282 = vmatprep.mubr.bf16.mxu0 0
      %1283 = vmatmul.mubr.bf16.gmra.mxu0 %v1249
      %v1284 = vpop.f32.mrf.mxu0
      %v1285 = vadd.f32 0.0, %v1284
      %v1286 = vpop.f32.mrf.mxu0
      %v1287 = vadd.f32 0.0, %v1286
      %v1288 = vpop.f32.mrf.mxu0
      %v1289 = vpop.f32.mrf.mxu0
      %1290 = vdwg.mxu0
      %1291 = vmatprep.subr.bf16.mxu0 %v982
      %1292 = vmatpush1.bf16.msra.mxu0 %v981
      %1293 = vmatprep.subr.bf16.mxu0 %v978
      %1294 = vmatpush1.bf16.msra.mxu0 %v977
      %1295 = vmatprep.subr.bf16.mxu0 %v974
      %1296 = vmatpush1.bf16.msra.mxu0 %v973
      %1297 = vmatprep.subr.bf16.mxu0 %v970
      %1298 = vmatpush1.bf16.msra.mxu0 %v969
      %1299 = vmatprep.subr.bf16.mxu0 %v966
      %1300 = vmatpush1.bf16.msra.mxu0 %v965
      %1301 = vmatprep.subr.bf16.mxu0 %v962
      %1302 = vmatpush1.bf16.msra.mxu0 %v961
      %1303 = vmatprep.subr.bf16.mxu0 %v958
      %1304 = vmatpush1.bf16.msra.mxu0 %v957
      %1305 = vmatprep.subr.bf16.mxu0 %v954
      %1306 = vmatpush1.bf16.msra.mxu0 %v953
      %1307 = vmatprep.subr.bf16.mxu0 0
      %1308 = vmatpush2.bf16.msra.mxu0 0
      %1309 = vmatprep.subr.bf16.mxu0 0
      %1310 = vmatpush2.bf16.msra.mxu0 0
      %1311 = vmatprep.subr.bf16.mxu0 0
      %1312 = vmatpush2.bf16.msra.mxu0 0
      %1313 = vmatprep.subr.bf16.mxu0 0
      %1314 = vmatpush2.bf16.msra.mxu0 0
      %1315 = vmatprep.subr.bf16.mxu0 0
      %1316 = vmatpush2.bf16.msra.mxu0 0
      %1317 = vmatprep.subr.bf16.mxu0 0
      %1318 = vmatpush2.bf16.msra.mxu0 0
      %1319 = vmatprep.subr.bf16.mxu0 0
      %1320 = vmatpush2.bf16.msra.mxu0 0
      %1321 = vmatprep.subr.bf16.mxu0 0
      %1322 = vmatpush2.bf16.msra.mxu0 0
      %1323 = vmatprep.mubr.bf16.mxu0 0
      %1324 = vmatmul.mubr.bf16.gmra.mxu0 %v1249
      %v1325 = vpop.f32.mrf.mxu0
      %v1326 = vadd.f32 0.0, %v1325
      %v1327 = vpop.f32.mrf.mxu0
      %v1328 = vadd.f32 0.0, %v1327
      %v1329 = vpop.f32.mrf.mxu0
      %v1330 = vpop.f32.mrf.mxu0
      %1331 = vdwg.mxu0
      %v1332 = vadd.f32 %v1245, %v1285
      %v1333 = vadd.f32 %v1246, %v1287
      %v1334 = vadd.f32 %v1247, %v1326
      %v1335 = vadd.f32 %v1248, %v1328
      %v1336 = vxor.u32 %v1332, 2147483648
      %v1337 = vmul.f32 %v1336, 1.442695
      %v1338 = vpow.pop %v1337
      %v1339 = vadd.f32 %v1338, 1.0
      %v1340 = vrcp.pop %v1339
      %v1341 = vmul.f32 1.0, %v1340
      %v1342 = vxor.u32 %v1333, 2147483648
      %v1343 = vmul.f32 %v1342, 1.442695
      %v1344 = vpow.pop %v1343
      %v1345 = vadd.f32 %v1344, 1.0
      %v1346 = vrcp.pop %v1345
      %v1347 = vmul.f32 1.0, %v1346
      %v1348 = vtanh.pop %v1334
      %v1349 = vxor.u32 %v1335, 2147483648
      %v1350 = vmul.f32 %v1349, 1.442695
      %v1351 = vpow.pop %v1350
      %v1352 = vadd.f32 %v1351, 1.0
      %v1353 = vrcp.pop %v1352
      %v1354 = vmul.f32 1.0, %v1353
      %v1355 = vmul.f32 %v1347, %v1239
      %v1356 = vmul.f32 %v1341, %v1348
      %v1357 = vadd.f32 %v1355, %v1356
      %v1358 = vtanh.pop %v1357
      %v1359 = vmul.f32 %v1354, %v1358
      %s1360 = scalar_lea.vmem [#allocation3], 16
      %1361 = vst [vmem:[%s1360] sm:$0xff] %v1359
      %s1362 = scalar_lea.vmem [#allocation2], 96
      %v1363 = vld [vmem:[%s1362] sm:$0xff]
      %v1364 = vld [vmem:[%s1362 + $0x8] sm:$0xff]
      %v1365 = vld [vmem:[%s1362 + $0x10] sm:$0xff]
      %v1366 = vld [vmem:[%s1362 + $0x18] sm:$0xff]
      %v1367 = vpack.c.bf16 %v1359, %v1359
      %1368 = vmatprep.subr.bf16.mxu0 %v980
      %1369 = vmatpush1.bf16.msra.mxu0 %v979
      %1370 = vmatprep.subr.bf16.mxu0 %v976
      %1371 = vmatpush1.bf16.msra.mxu0 %v975
      %1372 = vmatprep.subr.bf16.mxu0 %v972
      %1373 = vmatpush1.bf16.msra.mxu0 %v971
      %1374 = vmatprep.subr.bf16.mxu0 %v968
      %1375 = vmatpush1.bf16.msra.mxu0 %v967
      %1376 = vmatprep.subr.bf16.mxu0 %v964
      %1377 = vmatpush1.bf16.msra.mxu0 %v963
      %1378 = vmatprep.subr.bf16.mxu0 %v960
      %1379 = vmatpush1.bf16.msra.mxu0 %v959
      %1380 = vmatprep.subr.bf16.mxu0 %v956
      %1381 = vmatpush1.bf16.msra.mxu0 %v955
      %1382 = vmatprep.subr.bf16.mxu0 %v952
      %1383 = vmatpush1.bf16.msra.mxu0 %v951
      %1384 = vmatprep.subr.bf16.mxu0 0
      %1385 = vmatpush2.bf16.msra.mxu0 0
      %1386 = vmatprep.subr.bf16.mxu0 0
      %1387 = vmatpush2.bf16.msra.mxu0 0
      %1388 = vmatprep.subr.bf16.mxu0 0
      %1389 = vmatpush2.bf16.msra.mxu0 0
      %1390 = vmatprep.subr.bf16.mxu0 0
      %1391 = vmatpush2.bf16.msra.mxu0 0
      %1392 = vmatprep.subr.bf16.mxu0 0
      %1393 = vmatpush2.bf16.msra.mxu0 0
      %1394 = vmatprep.subr.bf16.mxu0 0
      %1395 = vmatpush2.bf16.msra.mxu0 0
      %1396 = vmatprep.subr.bf16.mxu0 0
      %1397 = vmatpush2.bf16.msra.mxu0 0
      %1398 = vmatprep.subr.bf16.mxu0 0
      %1399 = vmatpush2.bf16.msra.mxu0 0
      %1400 = vmatprep.mubr.bf16.mxu0 0
      %1401 = vmatmul.mubr.bf16.gmra.mxu0 %v1367
      %v1402 = vpop.f32.mrf.mxu0
      %v1403 = vadd.f32 0.0, %v1402
      %v1404 = vpop.f32.mrf.mxu0
      %v1405 = vadd.f32 0.0, %v1404
      %v1406 = vpop.f32.mrf.mxu0
      %v1407 = vpop.f32.mrf.mxu0
      %1408 = vdwg.mxu0
      %1409 = vmatprep.subr.bf16.mxu0 %v982
      %1410 = vmatpush1.bf16.msra.mxu0 %v981
      %1411 = vmatprep.subr.bf16.mxu0 %v978
      %1412 = vmatpush1.bf16.msra.mxu0 %v977
      %1413 = vmatprep.subr.bf16.mxu0 %v974
      %1414 = vmatpush1.bf16.msra.mxu0 %v973
      %1415 = vmatprep.subr.bf16.mxu0 %v970
      %1416 = vmatpush1.bf16.msra.mxu0 %v969
      %1417 = vmatprep.subr.bf16.mxu0 %v966
      %1418 = vmatpush1.bf16.msra.mxu0 %v965
      %1419 = vmatprep.subr.bf16.mxu0 %v962
      %1420 = vmatpush1.bf16.msra.mxu0 %v961
      %1421 = vmatprep.subr.bf16.mxu0 %v958
      %1422 = vmatpush1.bf16.msra.mxu0 %v957
      %1423 = vmatprep.subr.bf16.mxu0 %v954
      %1424 = vmatpush1.bf16.msra.mxu0 %v953
      %1425 = vmatprep.subr.bf16.mxu0 0
      %1426 = vmatpush2.bf16.msra.mxu0 0
      %1427 = vmatprep.subr.bf16.mxu0 0
      %1428 = vmatpush2.bf16.msra.mxu0 0
      %1429 = vmatprep.subr.bf16.mxu0 0
      %1430 = vmatpush2.bf16.msra.mxu0 0
      %1431 = vmatprep.subr.bf16.mxu0 0
      %1432 = vmatpush2.bf16.msra.mxu0 0
      %1433 = vmatprep.subr.bf16.mxu0 0
      %1434 = vmatpush2.bf16.msra.mxu0 0
      %1435 = vmatprep.subr.bf16.mxu0 0
      %1436 = vmatpush2.bf16.msra.mxu0 0
      %1437 = vmatprep.subr.bf16.mxu0 0
      %1438 = vmatpush2.bf16.msra.mxu0 0
      %1439 = vmatprep.subr.bf16.mxu0 0
      %1440 = vmatpush2.bf16.msra.mxu0 0
      %1441 = vmatprep.mubr.bf16.mxu0 0
      %1442 = vmatmul.mubr.bf16.gmra.mxu0 %v1367
      %v1443 = vpop.f32.mrf.mxu0
      %v1444 = vadd.f32 0.0, %v1443
      %v1445 = vpop.f32.mrf.mxu0
      %v1446 = vadd.f32 0.0, %v1445
      %v1447 = vpop.f32.mrf.mxu0
      %v1448 = vpop.f32.mrf.mxu0
      %1449 = vdwg.mxu0
      %v1450 = vadd.f32 %v1363, %v1403
      %v1451 = vadd.f32 %v1364, %v1405
      %v1452 = vadd.f32 %v1365, %v1444
      %v1453 = vadd.f32 %v1366, %v1446
      %v1454 = vxor.u32 %v1450, 2147483648
      %v1455 = vmul.f32 %v1454, 1.442695
      %v1456 = vpow.pop %v1455
      %v1457 = vadd.f32 %v1456, 1.0
      %v1458 = vrcp.pop %v1457
      %v1459 = vmul.f32 1.0, %v1458
      %v1460 = vxor.u32 %v1451, 2147483648
      %v1461 = vmul.f32 %v1460, 1.442695
      %v1462 = vpow.pop %v1461
      %v1463 = vadd.f32 %v1462, 1.0
      %v1464 = vrcp.pop %v1463
      %v1465 = vmul.f32 1.0, %v1464
      %v1466 = vtanh.pop %v1452
      %v1467 = vxor.u32 %v1453, 2147483648
      %v1468 = vmul.f32 %v1467, 1.442695
      %v1469 = vpow.pop %v1468
      %v1470 = vadd.f32 %v1469, 1.0
      %v1471 = vrcp.pop %v1470
      %v1472 = vmul.f32 1.0, %v1471
      %v1473 = vmul.f32 %v1465, %v1357
      %v1474 = vmul.f32 %v1459, %v1466
      %v1475 = vadd.f32 %v1473, %v1474
      %v1476 = vtanh.pop %v1475
      %v1477 = vmul.f32 %v1472, %v1476
      %s1478 = scalar_lea.vmem [#allocation3], 24
      %1479 = vst [vmem:[%s1478] sm:$0xff] %v1477
      %s1480 = scalar_lea.vmem [#allocation2], 128
      %v1481 = vld [vmem:[%s1480] sm:$0xff]
      %v1482 = vld [vmem:[%s1480 + $0x8] sm:$0xff]
      %v1483 = vld [vmem:[%s1480 + $0x10] sm:$0xff]
      %v1484 = vld [vmem:[%s1480 + $0x18] sm:$0xff]
      %v1485 = vpack.c.bf16 %v1477, %v1477
      %1486 = vmatprep.subr.bf16.mxu0 %v980
      %1487 = vmatpush1.bf16.msra.mxu0 %v979
      %1488 = vmatprep.subr.bf16.mxu0 %v976
      %1489 = vmatpush1.bf16.msra.mxu0 %v975
      %1490 = vmatprep.subr.bf16.mxu0 %v972
      %1491 = vmatpush1.bf16.msra.mxu0 %v971
      %1492 = vmatprep.subr.bf16.mxu0 %v968
      %1493 = vmatpush1.bf16.msra.mxu0 %v967
      %1494 = vmatprep.subr.bf16.mxu0 %v964
      %1495 = vmatpush1.bf16.msra.mxu0 %v963
      %1496 = vmatprep.subr.bf16.mxu0 %v960
      %1497 = vmatpush1.bf16.msra.mxu0 %v959
      %1498 = vmatprep.subr.bf16.mxu0 %v956
      %1499 = vmatpush1.bf16.msra.mxu0 %v955
      %1500 = vmatprep.subr.bf16.mxu0 %v952
      %1501 = vmatpush1.bf16.msra.mxu0 %v951
      %1502 = vmatprep.subr.bf16.mxu0 0
      %1503 = vmatpush2.bf16.msra.mxu0 0
      %1504 = vmatprep.subr.bf16.mxu0 0
      %1505 = vmatpush2.bf16.msra.mxu0 0
      %1506 = vmatprep.subr.bf16.mxu0 0
      %1507 = vmatpush2.bf16.msra.mxu0 0
      %1508 = vmatprep.subr.bf16.mxu0 0
      %1509 = vmatpush2.bf16.msra.mxu0 0
      %1510 = vmatprep.subr.bf16.mxu0 0
      %1511 = vmatpush2.bf16.msra.mxu0 0
      %1512 = vmatprep.subr.bf16.mxu0 0
      %1513 = vmatpush2.bf16.msra.mxu0 0
      %1514 = vmatprep.subr.bf16.mxu0 0
      %1515 = vmatpush2.bf16.msra.mxu0 0
      %1516 = vmatprep.subr.bf16.mxu0 0
      %1517 = vmatpush2.bf16.msra.mxu0 0
      %1518 = vmatprep.mubr.bf16.mxu0 0
      %1519 = vmatmul.mubr.bf16.gmra.mxu0 %v1485
      %v1520 = vpop.f32.mrf.mxu0
      %v1521 = vadd.f32 0.0, %v1520
      %v1522 = vpop.f32.mrf.mxu0
      %v1523 = vadd.f32 0.0, %v1522
      %v1524 = vpop.f32.mrf.mxu0
      %v1525 = vpop.f32.mrf.mxu0
      %1526 = vdwg.mxu0
      %1527 = vmatprep.subr.bf16.mxu0 %v982
      %1528 = vmatpush1.bf16.msra.mxu0 %v981
      %1529 = vmatprep.subr.bf16.mxu0 %v978
      %1530 = vmatpush1.bf16.msra.mxu0 %v977
      %1531 = vmatprep.subr.bf16.mxu0 %v974
      %1532 = vmatpush1.bf16.msra.mxu0 %v973
      %1533 = vmatprep.subr.bf16.mxu0 %v970
      %1534 = vmatpush1.bf16.msra.mxu0 %v969
      %1535 = vmatprep.subr.bf16.mxu0 %v966
      %1536 = vmatpush1.bf16.msra.mxu0 %v965
      %1537 = vmatprep.subr.bf16.mxu0 %v962
      %1538 = vmatpush1.bf16.msra.mxu0 %v961
      %1539 = vmatprep.subr.bf16.mxu0 %v958
      %1540 = vmatpush1.bf16.msra.mxu0 %v957
      %1541 = vmatprep.subr.bf16.mxu0 %v954
      %1542 = vmatpush1.bf16.msra.mxu0 %v953
      %1543 = vmatprep.subr.bf16.mxu0 0
      %1544 = vmatpush2.bf16.msra.mxu0 0
      %1545 = vmatprep.subr.bf16.mxu0 0
      %1546 = vmatpush2.bf16.msra.mxu0 0
      %1547 = vmatprep.subr.bf16.mxu0 0
      %1548 = vmatpush2.bf16.msra.mxu0 0
      %1549 = vmatprep.subr.bf16.mxu0 0
      %1550 = vmatpush2.bf16.msra.mxu0 0
      %1551 = vmatprep.subr.bf16.mxu0 0
      %1552 = vmatpush2.bf16.msra.mxu0 0
      %1553 = vmatprep.subr.bf16.mxu0 0
      %1554 = vmatpush2.bf16.msra.mxu0 0
      %1555 = vmatprep.subr.bf16.mxu0 0
      %1556 = vmatpush2.bf16.msra.mxu0 0
      %1557 = vmatprep.subr.bf16.mxu0 0
      %1558 = vmatpush2.bf16.msra.mxu0 0
      %1559 = vmatprep.mubr.bf16.mxu0 0
      %1560 = vmatmul.mubr.bf16.gmra.mxu0 %v1485
      %v1561 = vpop.f32.mrf.mxu0
      %v1562 = vadd.f32 0.0, %v1561
      %v1563 = vpop.f32.mrf.mxu0
      %v1564 = vadd.f32 0.0, %v1563
      %v1565 = vpop.f32.mrf.mxu0
      %v1566 = vpop.f32.mrf.mxu0
      %1567 = vdwg.mxu0
      %v1568 = vadd.f32 %v1481, %v1521
      %v1569 = vadd.f32 %v1482, %v1523
      %v1570 = vadd.f32 %v1483, %v1562
      %v1571 = vadd.f32 %v1484, %v1564
      %v1572 = vxor.u32 %v1568, 2147483648
      %v1573 = vmul.f32 %v1572, 1.442695
      %v1574 = vpow.pop %v1573
      %v1575 = vadd.f32 %v1574, 1.0
      %v1576 = vrcp.pop %v1575
      %v1577 = vmul.f32 1.0, %v1576
      %v1578 = vxor.u32 %v1569, 2147483648
      %v1579 = vmul.f32 %v1578, 1.442695
      %v1580 = vpow.pop %v1579
      %v1581 = vadd.f32 %v1580, 1.0
      %v1582 = vrcp.pop %v1581
      %v1583 = vmul.f32 1.0, %v1582
      %v1584 = vtanh.pop %v1570
      %v1585 = vxor.u32 %v1571, 2147483648
      %v1586 = vmul.f32 %v1585, 1.442695
      %v1587 = vpow.pop %v1586
      %v1588 = vadd.f32 %v1587, 1.0
      %v1589 = vrcp.pop %v1588
      %v1590 = vmul.f32 1.0, %v1589
      %v1591 = vmul.f32 %v1583, %v1475
      %v1592 = vmul.f32 %v1577, %v1584
      %v1593 = vadd.f32 %v1591, %v1592
      %v1594 = vtanh.pop %v1593
      %v1595 = vmul.f32 %v1590, %v1594
      %s1596 = scalar_lea.vmem [#allocation3], 32
      %1597 = vst [vmem:[%s1596] sm:$0xff] %v1595
      %s1598 = scalar_lea.vmem [#allocation2], 160
      %v1599 = vld [vmem:[%s1598] sm:$0xff]
      %v1600 = vld [vmem:[%s1598 + $0x8] sm:$0xff]
      %v1601 = vld [vmem:[%s1598 + $0x10] sm:$0xff]
      %v1602 = vld [vmem:[%s1598 + $0x18] sm:$0xff]
      %v1603 = vpack.c.bf16 %v1595, %v1595
      %1604 = vmatprep.subr.bf16.mxu0 %v980
      %1605 = vmatpush1.bf16.msra.mxu0 %v979
      %1606 = vmatprep.subr.bf16.mxu0 %v976
      %1607 = vmatpush1.bf16.msra.mxu0 %v975
      %1608 = vmatprep.subr.bf16.mxu0 %v972
      %1609 = vmatpush1.bf16.msra.mxu0 %v971
      %1610 = vmatprep.subr.bf16.mxu0 %v968
      %1611 = vmatpush1.bf16.msra.mxu0 %v967
      %1612 = vmatprep.subr.bf16.mxu0 %v964
      %1613 = vmatpush1.bf16.msra.mxu0 %v963
      %1614 = vmatprep.subr.bf16.mxu0 %v960
      %1615 = vmatpush1.bf16.msra.mxu0 %v959
      %1616 = vmatprep.subr.bf16.mxu0 %v956
      %1617 = vmatpush1.bf16.msra.mxu0 %v955
      %1618 = vmatprep.subr.bf16.mxu0 %v952
      %1619 = vmatpush1.bf16.msra.mxu0 %v951
      %1620 = vmatprep.subr.bf16.mxu0 0
      %1621 = vmatpush2.bf16.msra.mxu0 0
      %1622 = vmatprep.subr.bf16.mxu0 0
      %1623 = vmatpush2.bf16.msra.mxu0 0
      %1624 = vmatprep.subr.bf16.mxu0 0
      %1625 = vmatpush2.bf16.msra.mxu0 0
      %1626 = vmatprep.subr.bf16.mxu0 0
      %1627 = vmatpush2.bf16.msra.mxu0 0
      %1628 = vmatprep.subr.bf16.mxu0 0
      %1629 = vmatpush2.bf16.msra.mxu0 0
      %1630 = vmatprep.subr.bf16.mxu0 0
      %1631 = vmatpush2.bf16.msra.mxu0 0
      %1632 = vmatprep.subr.bf16.mxu0 0
      %1633 = vmatpush2.bf16.msra.mxu0 0
      %1634 = vmatprep.subr.bf16.mxu0 0
      %1635 = vmatpush2.bf16.msra.mxu0 0
      %1636 = vmatprep.mubr.bf16.mxu0 0
      %1637 = vmatmul.mubr.bf16.gmra.mxu0 %v1603
      %v1638 = vpop.f32.mrf.mxu0
      %v1639 = vadd.f32 0.0, %v1638
      %v1640 = vpop.f32.mrf.mxu0
      %v1641 = vadd.f32 0.0, %v1640
      %v1642 = vpop.f32.mrf.mxu0
      %v1643 = vpop.f32.mrf.mxu0
      %1644 = vdwg.mxu0
      %1645 = vmatprep.subr.bf16.mxu0 %v982
      %1646 = vmatpush1.bf16.msra.mxu0 %v981
      %1647 = vmatprep.subr.bf16.mxu0 %v978
      %1648 = vmatpush1.bf16.msra.mxu0 %v977
      %1649 = vmatprep.subr.bf16.mxu0 %v974
      %1650 = vmatpush1.bf16.msra.mxu0 %v973
      %1651 = vmatprep.subr.bf16.mxu0 %v970
      %1652 = vmatpush1.bf16.msra.mxu0 %v969
      %1653 = vmatprep.subr.bf16.mxu0 %v966
      %1654 = vmatpush1.bf16.msra.mxu0 %v965
      %1655 = vmatprep.subr.bf16.mxu0 %v962
      %1656 = vmatpush1.bf16.msra.mxu0 %v961
      %1657 = vmatprep.subr.bf16.mxu0 %v958
      %1658 = vmatpush1.bf16.msra.mxu0 %v957
      %1659 = vmatprep.subr.bf16.mxu0 %v954
      %1660 = vmatpush1.bf16.msra.mxu0 %v953
      %1661 = vmatprep.subr.bf16.mxu0 0
      %1662 = vmatpush2.bf16.msra.mxu0 0
      %1663 = vmatprep.subr.bf16.mxu0 0
      %1664 = vmatpush2.bf16.msra.mxu0 0
      %1665 = vmatprep.subr.bf16.mxu0 0
      %1666 = vmatpush2.bf16.msra.mxu0 0
      %1667 = vmatprep.subr.bf16.mxu0 0
      %1668 = vmatpush2.bf16.msra.mxu0 0
      %1669 = vmatprep.subr.bf16.mxu0 0
      %1670 = vmatpush2.bf16.msra.mxu0 0
      %1671 = vmatprep.subr.bf16.mxu0 0
      %1672 = vmatpush2.bf16.msra.mxu0 0
      %1673 = vmatprep.subr.bf16.mxu0 0
      %1674 = vmatpush2.bf16.msra.mxu0 0
      %1675 = vmatprep.subr.bf16.mxu0 0
      %1676 = vmatpush2.bf16.msra.mxu0 0
      %1677 = vmatprep.mubr.bf16.mxu0 0
      %1678 = vmatmul.mubr.bf16.gmra.mxu0 %v1603
      %v1679 = vpop.f32.mrf.mxu0
      %v1680 = vadd.f32 0.0, %v1679
      %v1681 = vpop.f32.mrf.mxu0
      %v1682 = vadd.f32 0.0, %v1681
      %v1683 = vpop.f32.mrf.mxu0
      %v1684 = vpop.f32.mrf.mxu0
      %1685 = vdwg.mxu0
      %v1686 = vadd.f32 %v1599, %v1639
      %v1687 = vadd.f32 %v1600, %v1641
      %v1688 = vadd.f32 %v1601, %v1680
      %v1689 = vadd.f32 %v1602, %v1682
      %v1690 = vxor.u32 %v1686, 2147483648
      %v1691 = vmul.f32 %v1690, 1.442695
      %v1692 = vpow.pop %v1691
      %v1693 = vadd.f32 %v1692, 1.0
      %v1694 = vrcp.pop %v1693
      %v1695 = vmul.f32 1.0, %v1694
      %v1696 = vxor.u32 %v1687, 2147483648
      %v1697 = vmul.f32 %v1696, 1.442695
      %v1698 = vpow.pop %v1697
      %v1699 = vadd.f32 %v1698, 1.0
      %v1700 = vrcp.pop %v1699
      %v1701 = vmul.f32 1.0, %v1700
      %v1702 = vtanh.pop %v1688
      %v1703 = vxor.u32 %v1689, 2147483648
      %v1704 = vmul.f32 %v1703, 1.442695
      %v1705 = vpow.pop %v1704
      %v1706 = vadd.f32 %v1705, 1.0
      %v1707 = vrcp.pop %v1706
      %v1708 = vmul.f32 1.0, %v1707
      %v1709 = vmul.f32 %v1701, %v1593
      %v1710 = vmul.f32 %v1695, %v1702
      %v1711 = vadd.f32 %v1709, %v1710
      %v1712 = vtanh.pop %v1711
      %v1713 = vmul.f32 %v1708, %v1712
      %s1714 = scalar_lea.vmem [#allocation3], 40
      %1715 = vst [vmem:[%s1714] sm:$0xff] %v1713
      %s1716 = scalar_lea.vmem [#allocation2], 192
      %v1717 = vld [vmem:[%s1716] sm:$0xff]
      %v1718 = vld [vmem:[%s1716 + $0x8] sm:$0xff]
      %v1719 = vld [vmem:[%s1716 + $0x10] sm:$0xff]
      %v1720 = vld [vmem:[%s1716 + $0x18] sm:$0xff]
      %v1721 = vpack.c.bf16 %v1713, %v1713
      %1722 = vmatprep.subr.bf16.mxu0 %v980
      %1723 = vmatpush1.bf16.msra.mxu0 %v979
      %1724 = vmatprep.subr.bf16.mxu0 %v976
      %1725 = vmatpush1.bf16.msra.mxu0 %v975
      %1726 = vmatprep.subr.bf16.mxu0 %v972
      %1727 = vmatpush1.bf16.msra.mxu0 %v971
      %1728 = vmatprep.subr.bf16.mxu0 %v968
      %1729 = vmatpush1.bf16.msra.mxu0 %v967
      %1730 = vmatprep.subr.bf16.mxu0 %v964
      %1731 = vmatpush1.bf16.msra.mxu0 %v963
      %1732 = vmatprep.subr.bf16.mxu0 %v960
      %1733 = vmatpush1.bf16.msra.mxu0 %v959
      %1734 = vmatprep.subr.bf16.mxu0 %v956
      %1735 = vmatpush1.bf16.msra.mxu0 %v955
      %1736 = vmatprep.subr.bf16.mxu0 %v952
      %1737 = vmatpush1.bf16.msra.mxu0 %v951
      %1738 = vmatprep.subr.bf16.mxu0 0
      %1739 = vmatpush2.bf16.msra.mxu0 0
      %1740 = vmatprep.subr.bf16.mxu0 0
      %1741 = vmatpush2.bf16.msra.mxu0 0
      %1742 = vmatprep.subr.bf16.mxu0 0
      %1743 = vmatpush2.bf16.msra.mxu0 0
      %1744 = vmatprep.subr.bf16.mxu0 0
      %1745 = vmatpush2.bf16.msra.mxu0 0
      %1746 = vmatprep.subr.bf16.mxu0 0
      %1747 = vmatpush2.bf16.msra.mxu0 0
      %1748 = vmatprep.subr.bf16.mxu0 0
      %1749 = vmatpush2.bf16.msra.mxu0 0
      %1750 = vmatprep.subr.bf16.mxu0 0
      %1751 = vmatpush2.bf16.msra.mxu0 0
      %1752 = vmatprep.subr.bf16.mxu0 0
      %1753 = vmatpush2.bf16.msra.mxu0 0
      %1754 = vmatprep.mubr.bf16.mxu0 0
      %1755 = vmatmul.mubr.bf16.gmra.mxu0 %v1721
      %v1756 = vpop.f32.mrf.mxu0
      %v1757 = vadd.f32 0.0, %v1756
      %v1758 = vpop.f32.mrf.mxu0
      %v1759 = vadd.f32 0.0, %v1758
      %v1760 = vpop.f32.mrf.mxu0
      %v1761 = vpop.f32.mrf.mxu0
      %1762 = vdwg.mxu0
      %1763 = vmatprep.subr.bf16.mxu0 %v982
      %1764 = vmatpush1.bf16.msra.mxu0 %v981
      %1765 = vmatprep.subr.bf16.mxu0 %v978
      %1766 = vmatpush1.bf16.msra.mxu0 %v977
      %1767 = vmatprep.subr.bf16.mxu0 %v974
      %1768 = vmatpush1.bf16.msra.mxu0 %v973
      %1769 = vmatprep.subr.bf16.mxu0 %v970
      %1770 = vmatpush1.bf16.msra.mxu0 %v969
      %1771 = vmatprep.subr.bf16.mxu0 %v966
      %1772 = vmatpush1.bf16.msra.mxu0 %v965
      %1773 = vmatprep.subr.bf16.mxu0 %v962
      %1774 = vmatpush1.bf16.msra.mxu0 %v961
      %1775 = vmatprep.subr.bf16.mxu0 %v958
      %1776 = vmatpush1.bf16.msra.mxu0 %v957
      %1777 = vmatprep.subr.bf16.mxu0 %v954
      %1778 = vmatpush1.bf16.msra.mxu0 %v953
      %1779 = vmatprep.subr.bf16.mxu0 0
      %1780 = vmatpush2.bf16.msra.mxu0 0
      %1781 = vmatprep.subr.bf16.mxu0 0
      %1782 = vmatpush2.bf16.msra.mxu0 0
      %1783 = vmatprep.subr.bf16.mxu0 0
      %1784 = vmatpush2.bf16.msra.mxu0 0
      %1785 = vmatprep.subr.bf16.mxu0 0
      %1786 = vmatpush2.bf16.msra.mxu0 0
      %1787 = vmatprep.subr.bf16.mxu0 0
      %1788 = vmatpush2.bf16.msra.mxu0 0
      %1789 = vmatprep.subr.bf16.mxu0 0
      %1790 = vmatpush2.bf16.msra.mxu0 0
      %1791 = vmatprep.subr.bf16.mxu0 0
      %1792 = vmatpush2.bf16.msra.mxu0 0
      %1793 = vmatprep.subr.bf16.mxu0 0
      %1794 = vmatpush2.bf16.msra.mxu0 0
      %1795 = vmatprep.mubr.bf16.mxu0 0
      %1796 = vmatmul.mubr.bf16.gmra.mxu0 %v1721
      %v1797 = vpop.f32.mrf.mxu0
      %v1798 = vadd.f32 0.0, %v1797
      %v1799 = vpop.f32.mrf.mxu0
      %v1800 = vadd.f32 0.0, %v1799
      %v1801 = vpop.f32.mrf.mxu0
      %v1802 = vpop.f32.mrf.mxu0
      %1803 = vdwg.mxu0
      %v1804 = vadd.f32 %v1717, %v1757
      %v1805 = vadd.f32 %v1718, %v1759
      %v1806 = vadd.f32 %v1719, %v1798
      %v1807 = vadd.f32 %v1720, %v1800
      %v1808 = vxor.u32 %v1804, 2147483648
      %v1809 = vmul.f32 %v1808, 1.442695
      %v1810 = vpow.pop %v1809
      %v1811 = vadd.f32 %v1810, 1.0
      %v1812 = vrcp.pop %v1811
      %v1813 = vmul.f32 1.0, %v1812
      %v1814 = vxor.u32 %v1805, 2147483648
      %v1815 = vmul.f32 %v1814, 1.442695
      %v1816 = vpow.pop %v1815
      %v1817 = vadd.f32 %v1816, 1.0
      %v1818 = vrcp.pop %v1817
      %v1819 = vmul.f32 1.0, %v1818
      %v1820 = vtanh.pop %v1806
      %v1821 = vxor.u32 %v1807, 2147483648
      %v1822 = vmul.f32 %v1821, 1.442695
      %v1823 = vpow.pop %v1822
      %v1824 = vadd.f32 %v1823, 1.0
      %v1825 = vrcp.pop %v1824
      %v1826 = vmul.f32 1.0, %v1825
      %v1827 = vmul.f32 %v1819, %v1711
      %v1828 = vmul.f32 %v1813, %v1820
      %v1829 = vadd.f32 %v1827, %v1828
      %v1830 = vtanh.pop %v1829
      %v1831 = vmul.f32 %v1826, %v1830
      %s1832 = scalar_lea.vmem [#allocation3], 48
      %1833 = vst [vmem:[%s1832] sm:$0xff] %v1831
      %s1834 = scalar_lea.vmem [#allocation2], 224
      %v1835 = vld [vmem:[%s1834] sm:$0xff]
      %v1836 = vld [vmem:[%s1834 + $0x8] sm:$0xff]
      %v1837 = vld [vmem:[%s1834 + $0x10] sm:$0xff]
      %v1838 = vld [vmem:[%s1834 + $0x18] sm:$0xff]
      %v1839 = vpack.c.bf16 %v1831, %v1831
      %1840 = vmatprep.subr.bf16.mxu0 %v980
      %1841 = vmatpush1.bf16.msra.mxu0 %v979
      %1842 = vmatprep.subr.bf16.mxu0 %v976
      %1843 = vmatpush1.bf16.msra.mxu0 %v975
      %1844 = vmatprep.subr.bf16.mxu0 %v972
      %1845 = vmatpush1.bf16.msra.mxu0 %v971
      %1846 = vmatprep.subr.bf16.mxu0 %v968
      %1847 = vmatpush1.bf16.msra.mxu0 %v967
      %1848 = vmatprep.subr.bf16.mxu0 %v964
      %1849 = vmatpush1.bf16.msra.mxu0 %v963
      %1850 = vmatprep.subr.bf16.mxu0 %v960
      %1851 = vmatpush1.bf16.msra.mxu0 %v959
      %1852 = vmatprep.subr.bf16.mxu0 %v956
      %1853 = vmatpush1.bf16.msra.mxu0 %v955
      %1854 = vmatprep.subr.bf16.mxu0 %v952
      %1855 = vmatpush1.bf16.msra.mxu0 %v951
      %1856 = vmatprep.subr.bf16.mxu0 0
      %1857 = vmatpush2.bf16.msra.mxu0 0
      %1858 = vmatprep.subr.bf16.mxu0 0
      %1859 = vmatpush2.bf16.msra.mxu0 0
      %1860 = vmatprep.subr.bf16.mxu0 0
      %1861 = vmatpush2.bf16.msra.mxu0 0
      %1862 = vmatprep.subr.bf16.mxu0 0
      %1863 = vmatpush2.bf16.msra.mxu0 0
      %1864 = vmatprep.subr.bf16.mxu0 0
      %1865 = vmatpush2.bf16.msra.mxu0 0
      %1866 = vmatprep.subr.bf16.mxu0 0
      %1867 = vmatpush2.bf16.msra.mxu0 0
      %1868 = vmatprep.subr.bf16.mxu0 0
      %1869 = vmatpush2.bf16.msra.mxu0 0
      %1870 = vmatprep.subr.bf16.mxu0 0
      %1871 = vmatpush2.bf16.msra.mxu0 0
      %1872 = vmatprep.mubr.bf16.mxu0 0
      %1873 = vmatmul.mubr.bf16.gmra.mxu0 %v1839
      %v1874 = vpop.f32.mrf.mxu0
      %v1875 = vadd.f32 0.0, %v1874
      %v1876 = vpop.f32.mrf.mxu0
      %v1877 = vadd.f32 0.0, %v1876
      %v1878 = vpop.f32.mrf.mxu0
      %v1879 = vpop.f32.mrf.mxu0
      %1880 = vdwg.mxu0
      %1881 = vmatprep.subr.bf16.mxu0 %v982
      %1882 = vmatpush1.bf16.msra.mxu0 %v981
      %1883 = vmatprep.subr.bf16.mxu0 %v978
      %1884 = vmatpush1.bf16.msra.mxu0 %v977
      %1885 = vmatprep.subr.bf16.mxu0 %v974
      %1886 = vmatpush1.bf16.msra.mxu0 %v973
      %1887 = vmatprep.subr.bf16.mxu0 %v970
      %1888 = vmatpush1.bf16.msra.mxu0 %v969
      %1889 = vmatprep.subr.bf16.mxu0 %v966
      %1890 = vmatpush1.bf16.msra.mxu0 %v965
      %1891 = vmatprep.subr.bf16.mxu0 %v962
      %1892 = vmatpush1.bf16.msra.mxu0 %v961
      %1893 = vmatprep.subr.bf16.mxu0 %v958
      %1894 = vmatpush1.bf16.msra.mxu0 %v957
      %1895 = vmatprep.subr.bf16.mxu0 %v954
      %1896 = vmatpush1.bf16.msra.mxu0 %v953
      %1897 = vmatprep.subr.bf16.mxu0 0
      %1898 = vmatpush2.bf16.msra.mxu0 0
      %1899 = vmatprep.subr.bf16.mxu0 0
      %1900 = vmatpush2.bf16.msra.mxu0 0
      %1901 = vmatprep.subr.bf16.mxu0 0
      %1902 = vmatpush2.bf16.msra.mxu0 0
      %1903 = vmatprep.subr.bf16.mxu0 0
      %1904 = vmatpush2.bf16.msra.mxu0 0
      %1905 = vmatprep.subr.bf16.mxu0 0
      %1906 = vmatpush2.bf16.msra.mxu0 0
      %1907 = vmatprep.subr.bf16.mxu0 0
      %1908 = vmatpush2.bf16.msra.mxu0 0
      %1909 = vmatprep.subr.bf16.mxu0 0
      %1910 = vmatpush2.bf16.msra.mxu0 0
      %1911 = vmatprep.subr.bf16.mxu0 0
      %1912 = vmatpush2.bf16.msra.mxu0 0
      %1913 = vmatprep.mubr.bf16.mxu0 0
      %1914 = vmatmul.mubr.bf16.gmra.mxu0 %v1839
      %v1915 = vpop.f32.mrf.mxu0
      %v1916 = vadd.f32 0.0, %v1915
      %v1917 = vpop.f32.mrf.mxu0
      %v1918 = vadd.f32 0.0, %v1917
      %v1919 = vpop.f32.mrf.mxu0
      %v1920 = vpop.f32.mrf.mxu0
      %1921 = vdwg.mxu0
      %v1922 = vadd.f32 %v1835, %v1875
      %v1923 = vadd.f32 %v1836, %v1877
      %v1924 = vadd.f32 %v1837, %v1916
      %v1925 = vadd.f32 %v1838, %v1918
      %v1926 = vxor.u32 %v1922, 2147483648
      %v1927 = vmul.f32 %v1926, 1.442695
      %v1928 = vpow.pop %v1927
      %v1929 = vadd.f32 %v1928, 1.0
      %v1930 = vrcp.pop %v1929
      %v1931 = vmul.f32 1.0, %v1930
      %v1932 = vxor.u32 %v1923, 2147483648
      %v1933 = vmul.f32 %v1932, 1.442695
      %v1934 = vpow.pop %v1933
      %v1935 = vadd.f32 %v1934, 1.0
      %v1936 = vrcp.pop %v1935
      %v1937 = vmul.f32 1.0, %v1936
      %v1938 = vtanh.pop %v1924
      %v1939 = vxor.u32 %v1925, 2147483648
      %v1940 = vmul.f32 %v1939, 1.442695
      %v1941 = vpow.pop %v1940
      %v1942 = vadd.f32 %v1941, 1.0
      %v1943 = vrcp.pop %v1942
      %v1944 = vmul.f32 1.0, %v1943
      %v1945 = vmul.f32 %v1937, %v1829
      %v1946 = vmul.f32 %v1931, %v1938
      %v1947 = vadd.f32 %v1945, %v1946
      %v1948 = vtanh.pop %v1947
      %v1949 = vmul.f32 %v1944, %v1948
      %s1950 = scalar_lea.vmem [#allocation3], 56
      %1951 = vst [vmem:[%s1950] sm:$0xff] %v1949
      %1952 = vst [vmem:[%s390] sm:$0xff] %v1949
      %1953 = vst [vmem:[%s394] sm:$0xff] %v1947
      %v1954 = vld [vmem:[#allocation3] sm:$0xff]
      %v1955 = vld [vmem:[#allocation3 + $0x8] sm:$0xff]
      %v1956 = vld [vmem:[#allocation3 + $0x10] sm:$0xff]
      %v1957 = vld [vmem:[#allocation3 + $0x18] sm:$0xff]
      %v1958 = vld [vmem:[#allocation3 + $0x20] sm:$0xff]
      %v1959 = vld [vmem:[#allocation3 + $0x28] sm:$0xff]
      %v1960 = vld [vmem:[#allocation3 + $0x30] sm:$0xff]
      %v1961 = vld [vmem:[#allocation3 + $0x38] sm:$0xff]
      %v1962 = vpack.c.bf16 %v1954, %v1954
      %v1963 = vpack.c.bf16 %v1955, %v1955
      %v1964 = vpack.c.bf16 %v1956, %v1956
      %v1965 = vpack.c.bf16 %v1957, %v1957
      %v1966 = vpack.c.bf16 %v1958, %v1958
      %v1967 = vpack.c.bf16 %v1959, %v1959
      %v1968 = vpack.c.bf16 %v1960, %v1960
      %v1969 = vpack.c.bf16 %v1961, %v1961
      %1970 = vst [vmem:[%s385] sm:$0xf] %v1962
      %1971 = vst [vmem:[%s385 + $0x4] sm:$0xf] %v1963
      %1972 = vst [vmem:[%s385 + $0x8] sm:$0xf] %v1964
      %1973 = vst [vmem:[%s385 + $0xc] sm:$0xf] %v1965
      %1974 = vst [vmem:[%s385 + $0x10] sm:$0xf] %v1966
      %1975 = vst [vmem:[%s385 + $0x14] sm:$0xf] %v1967
      %1976 = vst [vmem:[%s385 + $0x18] sm:$0xf] %v1968
      %1977 = vst [vmem:[%s385 + $0x1c] sm:$0xf] %v1969
      %s1978 = smul.u32 8, %s25
      %p1979 = scmp.lt.s32.totalorder %s1978, 15
      %s1980 = scalar_select %p1979, %s1978, 15
      %p1981 = scmp.lt.s32.totalorder %s24, 0
      %s1982 = scalar_select %p1981, %s24, 0
      %s1983 = sadd.s32 %s1982, %s1980
      %s1984 = smul.addr %s1983, 4
      %s1985 = scalar_lea.vmem %s6, %s1984
      %p1986 = scmp.lt.s32.totalorder %s24, 0
      %s1987 = scalar_select %p1986, %s24, 0
      %s1988 = smul.addr %s1987, 8
      %s1989 = scalar_lea.vmem %s7, %s1988
      %p1990 = scmp.lt.s32.totalorder %s24, 0
      %s1991 = scalar_select %p1990, %s24, 0
      %s1992 = smul.addr %s1991, 8
      %s1993 = scalar_lea.vmem %s8, %s1992
      // Predicated region
      $region49: #{lstm_model_forward.3} parent=43 // pred_check
        %p1994 = pneg %p195
      $region50: #{lstm_model_forward.3} parent=43 // pred_check_branch
        %1996 = sbr.rel (%p1994) target = $region52
      $region51: #{lstm_model_forward.3} parent=43 // pred_region
        %s1997 = smul.u32 8, %s25
      $region52: #{lstm_model_forward.3} parent=43 // pred_fallthru
        _
      // Predicated region
      $region53: #{lstm_model_forward.3} parent=43 // pred_check
        %p1998 = pneg %p221
      $region54: #{lstm_model_forward.3} parent=43 // pred_check_branch
        %2000 = sbr.rel (%p1998) target = $region56
      $region55: #{lstm_model_forward.3} parent=43 // pred_region
        _
      $region56: #{lstm_model_forward.3} parent=43 // pred_fallthru
        _
      // Predicated region
      $region57: #{lstm_model_forward.3} parent=43 // pred_check
        %p2001 = pneg %p247
      $region58: #{lstm_model_forward.3} parent=43 // pred_check_branch
        %2003 = sbr.rel (%p2001) target = $region60
      $region59: #{lstm_model_forward.3} parent=43 // pred_region
        _
      $region60: #{lstm_model_forward.3} parent=43 // pred_fallthru
        _
      // Predicated region
      $region61: #{lstm_model_forward.3} parent=43 // pred_check
        %p2004 = pneg %p221
      $region62: #{lstm_model_forward.3} parent=43 // pred_check_branch
        %2006 = sbr.rel (%p2004) target = $region64
      $region63: #{lstm_model_forward.3} parent=43 // pred_region
        %p2007 = scmp.lt.s32.totalorder %s24, 0
        %s2008 = scalar_select %p2007, %s24, 0
        %s2009 = smul.addr %s2008, 8
        %s2010 = scalar_lea.vmem %s7, %s2009
      $region64: #{lstm_model_forward.3} parent=43 // pred_fallthru
        _
      // Predicated region
      $region65: #{lstm_model_forward.3} parent=43 // pred_check
        %p2011 = pneg %p247
      $region66: #{lstm_model_forward.3} parent=43 // pred_check_branch
        %2013 = sbr.rel (%p2011) target = $region68
      $region67: #{lstm_model_forward.3} parent=43 // pred_region
        %p2014 = scmp.lt.s32.totalorder %s24, 0
        %s2015 = scalar_select %p2014, %s24, 0
        %s2016 = smul.addr %s2015, 8
        %s2017 = scalar_lea.vmem %s8, %s2016
      $region68: #{lstm_model_forward.3} parent=43 // pred_fallthru
        _
    $region44: #{lstm_model_forward.3} parent=5 // pred_fallthru
      _
    %p2018 = scmp.le.s32.totalorder 2, %s15
    // Predicated region
    $region69: #{lstm_model_forward.3} parent=5 // pred_check
      %p2019 = pneg %p2018
    $region70: #{lstm_model_forward.3} parent=5 // pred_check_branch
      %2021 = sbr.rel (%p2019) target = $region72
    $region71: #{lstm_model_forward.3} parent=5 // pred_region
      %s2022 = ssub.s32 %s15, 2
      // Predicated region
      $region73: #{lstm_model_forward.3} parent=71 // pred_check
        %p2023 = pneg %p201
      $region74: #{lstm_model_forward.3} parent=71 // pred_check_branch
        %2025 = sbr.rel (%p2023) target = $region76
      $region75: #{lstm_model_forward.3} parent=71 // pred_region
        %s2026 = smul.u32 8, %s27
        %p2027 = scmp.lt.s32.totalorder %s2026, 15
        %s2028 = scalar_select %p2027, %s2026, 15
        %p2029 = scmp.lt.s32.totalorder %s26, 0
        %s2030 = scalar_select %p2029, %s26, 0
        %s2031 = sadd.s32 %s2030, %s2028
        %s2032 = smul.addr %s2031, 4
        %s2033 = scalar_lea.vmem %s6, %s2032
      $region76: #{lstm_model_forward.3} parent=71 // pred_fallthru
        _
    $region72: #{lstm_model_forward.3} parent=5 // pred_fallthru
      _
  $region6: #{lstm_model_forward.3} parent=0 // loop_footer
    %s19 = sadd.s32 1, %s15
  $region7: #{lstm_model_forward.3} parent=0 // loop_footer_branch
    %14 = sbr.rel target = $region3
  $region8: #{lstm_model_forward.3} parent=0 // loop_exit
    _

</llo_original>
